<compile_context>
chip_gen: v7x
topology: tpu7x:2x2x1
jax: 0.10.0
libtpu: 0.0.40
codegen_flags: <defaults>
</compile_context>

<pallas_src>
import functools

import jax
import jax.numpy as jnp
from jax.experimental import pallas as pl

_EPS = 1e-5


# ----------------------------------------------------------------------------
# Pallas kernels (one grid step each; all operands VMEM-resident)
# ----------------------------------------------------------------------------
def _bn_conv1_kernel(x_ref, g_ref, bt_ref, w_ref, b_ref, o_ref, st_ref, *,
                     eps, slope):
    """Layer 1, fully fused: BatchNorm(state) -> ConvTranspose(4,1,0) on a 1x1
    spatial input (== plain GEMM over (ky,kx,co) columns) -> LeakyReLU(0.01)
    -> per-column (sum, sumsq) stats for the next (folded) BatchNorm."""
    x = x_ref[...]                                        # (B, Cin) f32
    m = x.shape[0]
    mean = jnp.sum(x, axis=0, keepdims=True) * (1.0 / m)
    xc = x - mean
    var = jnp.sum(xc * xc, axis=0, keepdims=True) * (1.0 / m)   # biased (train)
    y = xc * jax.lax.rsqrt(var + eps) * g_ref[...] + bt_ref[...]
    acc = jnp.dot(y.astype(w_ref.dtype), w_ref[...],
                  preferred_element_type=jnp.float32)     # MXU, f32 accumulate
    acc = acc + b_ref[...]
    acc = jnp.where(acc >= 0, acc, slope * acc)           # LeakyReLU(0.01)
    o_ref[...] = acc
    st_ref[0:1, :] = jnp.sum(acc, axis=0, keepdims=True)
    st_ref[1:2, :] = jnp.sum(acc * acc, axis=0, keepdims=True)


def _gemm_scale_stats_kernel(a_ref, s_ref, w_ref, b_ref, o_ref, st_ref):
    """Layer 2 (N = 4*Cout = 128 is already lane-dense): folded-BN row-scale of
    the (M, 9*Cin) patch slab, GEMM, bias, (sum, sumsq) epilogue stats.
    LeakyReLU(True) == identity, so no activation."""
    a = (a_ref[...] * s_ref[...]).astype(w_ref.dtype)     # BN scale, bf16 MXU in
    acc = jnp.dot(a, w_ref[...], preferred_element_type=jnp.float32)
    acc = acc + b_ref[...]
    o_ref[...] = acc
    st_ref[0:1, :] = jnp.sum(acc, axis=0, keepdims=True)
    st_ref[1:2, :] = jnp.sum(acc * acc, axis=0, keepdims=True)


def _gemm_t_scale_stats_kernel(a_ref, s_ref, w_ref, b_ref, o_ref, st_ref):
    """Layers 3-4, lane-dense: contract the natural (M, 9*Cin) patch slab with
    the (4*Cout, 9*Cin) weight on both last dims -> (4*Cout, M) output block
    with M on the 128-lane axis (unmasked stores).  Stats are per-row lane
    reductions (XLU)."""
    a = (a_ref[...] * s_ref[...]).astype(w_ref.dtype)
    acc = jax.lax.dot_general(w_ref[...], a,
                              dimension_numbers=(((1,), (1,)), ((), ())),
                              preferred_element_type=jnp.float32)
    acc = acc + b_ref[...]                                # (N, 1) lane broadcast
    o_ref[...] = acc
    st_ref[:, 0:1] = jnp.sum(acc, axis=1, keepdims=True)
    st_ref[:, 1:2] = jnp.sum(acc * acc, axis=1, keepdims=True)


def _gemm_t_scale_kernel(a_ref, s_ref, w_ref, b_ref, o_ref):
    """Layer 5 (final): lane-dense transposed GEMM, no activation, no stats."""
    a = (a_ref[...] * s_ref[...]).astype(w_ref.dtype)
    acc = jax.lax.dot_general(w_ref[...], a,
                              dimension_numbers=(((1,), (1,)), ((), ())),
                              preferred_element_type=jnp.float32)
    o_ref[...] = acc + b_ref[...]


# ----------------------------------------------------------------------------
# Pallas wrappers (single grid step; full-array blocks)
# ----------------------------------------------------------------------------
def _conv1_pallas(state, gamma, beta, w1, b1, *, slope=0.01, eps=_EPS):
    b, c = state.shape
    n = w1.shape[1]
    return pl.pallas_call(
        functools.partial(_bn_conv1_kernel, eps=eps, slope=slope),
        out_shape=(jax.ShapeDtypeStruct((b, n), jnp.float32),
                   jax.ShapeDtypeStruct((2, n), jnp.float32)),
        grid=(1,),
        in_specs=[
            pl.BlockSpec((b, c), lambda i: (0, 0)),
            pl.BlockSpec((1, c), lambda i: (0, 0)),
            pl.BlockSpec((1, c), lambda i: (0, 0)),
            pl.BlockSpec((c, n), lambda i: (0, 0)),
            pl.BlockSpec((1, n), lambda i: (0, 0)),
        ],
        out_specs=(pl.BlockSpec((b, n), lambda i: (0, 0)),
                   pl.BlockSpec((2, n), lambda i: (0, 0))),
    )(state, gamma.reshape(1, c), beta.reshape(1, c), w1, b1)


def _conv_gemm(a, scale9, w, bias_row):
    m, k = a.shape
    n = w.shape[1]
    return pl.pallas_call(
        _gemm_scale_stats_kernel,
        out_shape=(jax.ShapeDtypeStruct((m, n), jnp.float32),
                   jax.ShapeDtypeStruct((2, n), jnp.float32)),
        grid=(1,),
        in_specs=[
            pl.BlockSpec((m, k), lambda i: (0, 0)),
            pl.BlockSpec((1, k), lambda i: (0, 0)),
            pl.BlockSpec((k, n), lambda i: (0, 0)),
            pl.BlockSpec((1, n), lambda i: (0, 0)),
        ],
        out_specs=(pl.BlockSpec((m, n), lambda i: (0, 0)),
                   pl.BlockSpec((2, n), lambda i: (0, 0))),
    )(a, scale9, w, bias_row)


def _conv_gemm_t(a, scale9, w_t, bias_col, *, with_stats):
    m, k = a.shape
    n = w_t.shape[0]
    if with_stats:
        kernel = _gemm_t_scale_stats_kernel
        out_shape = (jax.ShapeDtypeStruct((n, m), jnp.float32),
                     jax.ShapeDtypeStruct((n, 2), jnp.float32))
        out_specs = (pl.BlockSpec((n, m), lambda i: (0, 0)),
                     pl.BlockSpec((n, 2), lambda i: (0, 0)))
    else:
        kernel = _gemm_t_scale_kernel
        out_shape = jax.ShapeDtypeStruct((n, m), jnp.float32)
        out_specs = pl.BlockSpec((n, m), lambda i: (0, 0))
    return pl.pallas_call(
        kernel,
        out_shape=out_shape,
        grid=(1,),
        in_specs=[
            pl.BlockSpec((m, k), lambda i: (0, 0)),
            pl.BlockSpec((1, k), lambda i: (0, 0)),
            pl.BlockSpec((n, k), lambda i: (0, 0)),
            pl.BlockSpec((n, 1), lambda i: (0, 0)),
        ],
        out_specs=out_specs,
    )(a, scale9, w_t, bias_col)


# ----------------------------------------------------------------------------
# JAX glue: BN fold, patch gather, depth-to-space (fuses into the pad in XLA)
# ----------------------------------------------------------------------------
def _bn_fold(ssum, ssq, count, gamma, beta, eps=_EPS):
    """(sum, sumsq) of the previous layer's output per channel -> the affine
    fold  BN(x) == scale * (x + shift).  `shift` is added to the real input
    before zero padding; `scale` is applied in-kernel as a patch-row scale.
    Assumes gamma != 0 (always true for this init / trained BN in practice)."""
    mean = ssum / count
    var = jnp.maximum(ssq / count - mean * mean, 0.0)     # biased variance
    scale = gamma * jax.lax.rsqrt(var + eps)
    shift = beta / scale - mean
    return scale, shift


def _parity_weight(w_pt):
    """ConvTranspose2d(k=4, s=2, p=1) weight (Cin, Cout, 4, 4) -> sub-pixel GEMM
    weight (9*Cin, 4*Cout): rows ordered (dy, dx, ci) over the 3x3 input patch,
    columns ordered (py, px, co) over the 2x2 output-parity classes."""
    cin, cout = w_pt.shape[0], w_pt.shape[1]
    # (parity p, patch offset r) -> original kernel tap ky (from oy = 2*iy-1+ky)
    sel = jnp.zeros((2, 3, 4), w_pt.dtype)
    sel = sel.at[0, 0, 3].set(1.0).at[0, 1, 1].set(1.0)
    sel = sel.at[1, 1, 2].set(1.0).at[1, 2, 0].set(1.0)
    w9 = jnp.einsum('pra,qcb,ioab->rcipqo', sel, sel, w_pt)
    return w9.reshape(9 * cin, 4 * cout)


def _patch_slab(x, shift):
    """Shift-fold + zero-pad + 3x3 patch gather: NHWC (B,H,W,C) -> bf16
    (B*H*W, 9*C) im2col slab (one fused XLA elementwise/pad fusion).
    The shift MUST be applied to the real input before padding: border output
    pixels see a truncated kernel support, so a bias-side fold is inexact."""
    b, h, w, c = x.shape
    xs = x + shift.reshape(1, 1, 1, c)
    xp = jnp.pad(xs, ((0, 0), (1, 1), (1, 1), (0, 0)))
    pats = [xp[:, dy:dy + h, dx:dx + w, :] for dy in range(3) for dx in range(3)]
    a = jnp.stack(pats, axis=3)                            # (b, h, w, 9, c)
    return a.reshape(b * h * w, 9 * c).astype(jnp.bfloat16)


def _depth_to_space_rows(y, b, h, w, cout):
    """(B*H*W, 4*Cout) GEMM output (columns (py,px,co)) -> NHWC (B,2H,2W,Cout)."""
    y = y.reshape(b, h, w, 2, 2, cout).transpose(0, 1, 3, 2, 4, 5)
    return y.reshape(b, 2 * h, 2 * w, cout)


def _depth_to_space_cols(y_t, b, h, w, cout):
    """(4*Cout, B*H*W) transposed GEMM output -> NHWC (B,2H,2W,Cout)."""
    y = y_t.reshape(2, 2, cout, b, h, w).transpose(3, 4, 0, 5, 1, 2)
    return y.reshape(b, 2 * h, 2 * w, cout)


def _depth_to_space_cols_nchw(y_t, b, h, w, cout):
    """(4*Cout, B*H*W) transposed GEMM output -> NCHW (B,Cout,2H,2W)."""
    y = y_t.reshape(2, 2, cout, b, h, w).transpose(3, 2, 4, 0, 5, 1)
    return y.reshape(b, cout, 2 * h, 2 * w)


# ----------------------------------------------------------------------------
# One-time parameter prep (hoisted off the per-forward critical path)
# ----------------------------------------------------------------------------
def prepare_params(params):
    bns, convs = params["bns"], params["convs"]
    prep = {"bns": [(g, bt) for (g, bt) in bns]}

    # layer 1: ConvTranspose(4,1,0) on a 1x1 input == GEMM over (ky,kx,co) cols.
    w, bias = convs[0]
    c0, c1 = w.shape[0], w.shape[1]
    prep["w1"] = (jnp.transpose(w, (0, 2, 3, 1))
                  .reshape(c0, 16 * c1).astype(jnp.bfloat16))
    prep["b1"] = jnp.tile(bias, 16).reshape(1, 16 * c1)

    # layer 2: natural orientation (K, N) since N = 4*Cout = 128 (lane-dense).
    w, bias = convs[1]
    prep["w2"] = _parity_weight(w).astype(jnp.bfloat16)
    prep["b2"] = jnp.tile(bias, 4).reshape(1, -1)

    # layers 3-5: transposed (N, K) so the output block is (4*Cout, M).
    for idx, name in ((2, "w3"), (3, "w4"), (4, "w5")):
        w, bias = convs[idx]
        prep[name] = jnp.transpose(_parity_weight(w)).astype(jnp.bfloat16)
        prep["b" + name[1]] = jnp.tile(bias, 4).reshape(-1, 1)
    return prep


# ----------------------------------------------------------------------------
# Full forward pass (matches nn.Sequential in FrameGenerator)
# ----------------------------------------------------------------------------
def frame_generator_forward(state, prep):
    """state (B, state_size) -> frames (B, 3, 64, 64)."""
    b = state.shape[0]
    bns = prep["bns"]

    # --- layer 1: BN + ConvTranspose(4,1,0) + LeakyReLU(0.01), one kernel.
    g, bt = bns[0]
    y1, st = _conv1_pallas(state, g, bt, prep["w1"], prep["b1"])
    c1 = prep["w1"].shape[1] // 16
    x = y1.reshape(b, 4, 4, c1)                            # NHWC, 4x4 spatial

    # --- layer 2: folded BN + sub-pixel ConvTranspose(4,2,1); N=128 lane-dense.
    g, bt = bns[1]
    cin, cout = c1, prep["b2"].shape[1] // 4
    scale, shift = _bn_fold(st[0].reshape(-1, cin).sum(0),
                            st[1].reshape(-1, cin).sum(0), b * 16, g, bt)
    a = _patch_slab(x, shift)
    y2, st = _conv_gemm(a, jnp.tile(scale, 9).reshape(1, -1),
                        prep["w2"], prep["b2"])
    x = _depth_to_space_rows(y2, b, 4, 4, cout)            # (B, 8, 8, 32)

    # --- layer 3 (transposed / lane-dense output).
    g, bt = bns[2]
    cin, cout = cout, prep["b3"].shape[0] // 4
    scale, shift = _bn_fold(st[0].reshape(4, cin).sum(0),
                            st[1].reshape(4, cin).sum(0), b * 64, g, bt)
    a = _patch_slab(x, shift)
    y3, st = _conv_gemm_t(a, jnp.tile(scale, 9).reshape(1, -1),
                          prep["w3"], prep["b3"], with_stats=True)
    x = _depth_to_space_cols(y3, b, 8, 8, cout)            # (B, 16, 16, 16)

    # --- layer 4 (transposed / lane-dense output).
    g, bt = bns[3]
    cin, cout = cout, prep["b4"].shape[0] // 4
    scale, shift = _bn_fold(st[:, 0].reshape(4, cin).sum(0),
                            st[:, 1].reshape(4, cin).sum(0), b * 256, g, bt)
    a = _patch_slab(x, shift)
    y4, st = _conv_gemm_t(a, jnp.tile(scale, 9).reshape(1, -1),
                          prep["w4"], prep["b4"], with_stats=True)
    x = _depth_to_space_cols(y4, b, 16, 16, cout)          # (B, 32, 32, 8)

    # --- layer 5: final folded BN + ConvTranspose(4,2,1), NCHW output.
    g, bt = bns[4]
    cin, cout = cout, prep["b5"].shape[0] // 4
    scale, shift = _bn_fold(st[:, 0].reshape(4, cin).sum(0),
                            st[:, 1].reshape(4, cin).sum(0), b * 1024, g, bt)
    a = _patch_slab(x, shift)
    y5 = _conv_gemm_t(a, jnp.tile(scale, 9).reshape(1, -1),
                      prep["w5"], prep["b5"], with_stats=False)
    return _depth_to_space_cols_nchw(y5, b, 32, 32, cout)  # (B, 3, 64, 64)


def init_params(key, state_size, ngf):
    chans = [state_size, ngf * 8, ngf * 4, ngf * 2, ngf, 3]
    params = {"bns": [], "convs": []}
    keys = jax.random.split(key, 4 * (len(chans) - 1))
    ki = 0
    # 5 BatchNorm2d layers (one before each ConvTranspose2d)
    for c in chans[:-1]:
        g = 1.0 + 0.02 * jax.random.normal(keys[ki], (c,), jnp.float32); ki += 1
        bta = 0.02 * jax.random.normal(keys[ki], (c,), jnp.float32); ki += 1
        params["bns"].append((g, bta))
    # 5 ConvTranspose2d layers: weight (Cin, Cout, 4, 4), bias (Cout,)
    for cin, cout in zip(chans[:-1], chans[1:]):
        w = 0.02 * jax.random.normal(keys[ki], (cin, cout, 4, 4), jnp.float32); ki += 1
        bias = 0.02 * jax.random.normal(keys[ki], (cout,), jnp.float32); ki += 1
        params["convs"].append((w, bias))
    return params


if __name__ == "__main__":
    B, STATE_SIZE, NGF = 2, 16, 8        # conf.state_size=16, conf.frame_gen_filters=8
    key = jax.random.PRNGKey(0)
    pkey, xkey = jax.random.split(key)
    params = init_params(pkey, STATE_SIZE, NGF)
    prep = prepare_params(params)        # one-time weight prep (off the hot path)
    state = jax.random.normal(xkey, (B, STATE_SIZE), dtype=jnp.float32)

    fwd = jax.jit(functools.partial(frame_generator_forward, prep=prep))
    out = fwd(state)
    jax.block_until_ready(out)
    assert out.shape == (B, 3, 64, 64), out.shape
    assert out.dtype == jnp.float32
    print("KERNEL_OK")
</pallas_src>

<mosaic_0001>
module attributes {stable_mosaic.version = 11 : i64} {
  func.func @_bn_conv1_kernel(%arg0: i32, %arg1: memref<2x16xf32, #tpu.memory_space<vmem>>, %arg2: memref<1x16xf32, #tpu.memory_space<vmem>>, %arg3: memref<1x16xf32, #tpu.memory_space<vmem>>, %arg4: memref<16x1024xbf16, #tpu.memory_space<vmem>>, %arg5: memref<1x1024xf32, #tpu.memory_space<vmem>>, %arg6: memref<2x1024xf32, #tpu.memory_space<vmem>>, %arg7: memref<2x1024xf32, #tpu.memory_space<vmem>>) attributes {dimension_semantics = [#tpu.dimension_semantics<arbitrary>], iteration_bounds = array<i64: 1>, scalar_prefetch = 0 : i64, scratch_operands = 0 : i64, tpu.core_type = #tpu.core_type<tc>, window_params = [{pipeline_mode = #tpu.pipeline_mode<synchronous>, transform_indices = @transform_0, window_bounds = array<i64: 2, 16>}, {pipeline_mode = #tpu.pipeline_mode<synchronous>, transform_indices = @transform_1, window_bounds = array<i64: 1, 16>}, {pipeline_mode = #tpu.pipeline_mode<synchronous>, transform_indices = @transform_2, window_bounds = array<i64: 1, 16>}, {pipeline_mode = #tpu.pipeline_mode<synchronous>, transform_indices = @transform_3, window_bounds = array<i64: 16, 1024>}, {pipeline_mode = #tpu.pipeline_mode<synchronous>, transform_indices = @transform_4, window_bounds = array<i64: 1, 1024>}, {pipeline_mode = #tpu.pipeline_mode<synchronous>, transform_indices = @transform_5, window_bounds = array<i64: 2, 1024>}, {pipeline_mode = #tpu.pipeline_mode<synchronous>, transform_indices = @transform_6, window_bounds = array<i64: 2, 1024>}]} {
    %c0 = arith.constant 0 : index
    %c0_0 = arith.constant 0 : index
    %0 = vector.load %arg1[%c0, %c0_0] : memref<2x16xf32, #tpu.memory_space<vmem>>, vector<2x16xf32>
    %cst = arith.constant dense<0.000000e+00> : vector<16xf32>
    %1 = vector.multi_reduction <add>, %0, %cst [0] : vector<2x16xf32> to vector<16xf32>
    %2 = vector.shape_cast %1 : vector<16xf32> to vector<1x16xf32>
    %cst_1 = arith.constant 5.000000e-01 : f32
    %3 = vector.broadcast %cst_1 : f32 to vector<1x16xf32>
    %4 = arith.mulf %2, %3 : vector<1x16xf32>
    %5 = vector.broadcast %4 : vector<1x16xf32> to vector<2x16xf32>
    %6 = arith.subf %0, %5 : vector<2x16xf32>
    %7 = arith.mulf %6, %6 : vector<2x16xf32>
    %cst_2 = arith.constant dense<0.000000e+00> : vector<16xf32>
    %8 = vector.multi_reduction <add>, %7, %cst_2 [0] : vector<2x16xf32> to vector<16xf32>
    %9 = vector.shape_cast %8 : vector<16xf32> to vector<1x16xf32>
    %cst_3 = arith.constant 5.000000e-01 : f32
    %10 = vector.broadcast %cst_3 : f32 to vector<1x16xf32>
    %11 = arith.mulf %9, %10 : vector<1x16xf32>
    %cst_4 = arith.constant 9.99999974E-6 : f32
    %12 = vector.broadcast %cst_4 : f32 to vector<1x16xf32>
    %13 = arith.addf %11, %12 : vector<1x16xf32>
    %14 = math.rsqrt %13 : vector<1x16xf32>
    %15 = vector.broadcast %14 : vector<1x16xf32> to vector<2x16xf32>
    %16 = arith.mulf %6, %15 : vector<2x16xf32>
    %c0_5 = arith.constant 0 : index
    %c0_6 = arith.constant 0 : index
    %17 = vector.load %arg2[%c0_5, %c0_6] : memref<1x16xf32, #tpu.memory_space<vmem>>, vector<1x16xf32>
    %18 = vector.broadcast %17 : vector<1x16xf32> to vector<2x16xf32>
    %19 = arith.mulf %16, %18 : vector<2x16xf32>
    %c0_7 = arith.constant 0 : index
    %c0_8 = arith.constant 0 : index
    %20 = vector.load %arg3[%c0_7, %c0_8] : memref<1x16xf32, #tpu.memory_space<vmem>>, vector<1x16xf32>
    %21 = vector.broadcast %20 : vector<1x16xf32> to vector<2x16xf32>
    %22 = arith.addf %19, %21 : vector<2x16xf32>
    %23 = arith.truncf %22 : vector<2x16xf32> to vector<2x16xbf16>
    %c0_9 = arith.constant 0 : index
    %c0_10 = arith.constant 0 : index
    %24 = vector.load %arg4[%c0_9, %c0_10] : memref<16x1024xbf16, #tpu.memory_space<vmem>>, vector<16x1024xbf16>
    %cst_11 = arith.constant dense<0.000000e+00> : vector<2x1024xf32>
    %25 = tpu.matmul %23, %24, %cst_11 {dimension_numbers = #tpu.dot_dimension_numbers<[1], [0], [0], [1], [0, 0, 1, 1], [], []>} : vector<2x16xbf16>, vector<16x1024xbf16>, vector<2x1024xf32> -> vector<2x1024xf32>
    %c0_12 = arith.constant 0 : index
    %c0_13 = arith.constant 0 : index
    %26 = vector.load %arg5[%c0_12, %c0_13] : memref<1x1024xf32, #tpu.memory_space<vmem>>, vector<1x1024xf32>
    %27 = vector.broadcast %26 : vector<1x1024xf32> to vector<2x1024xf32>
    %28 = arith.addf %25, %27 : vector<2x1024xf32>
    %cst_14 = arith.constant 0.000000e+00 : f32
    %29 = vector.broadcast %cst_14 : f32 to vector<2x1024xf32>
    %30 = arith.cmpf oge, %28, %29 : vector<2x1024xf32>
    %cst_15 = arith.constant 0.00999999977 : f32
    %31 = vector.broadcast %cst_15 : f32 to vector<2x1024xf32>
    %32 = arith.mulf %31, %28 : vector<2x1024xf32>
    %33 = arith.select %30, %28, %32 : vector<2x1024xi1>, vector<2x1024xf32>
    %c0_16 = arith.constant 0 : index
    %c0_17 = arith.constant 0 : index
    %34 = vector.load %arg6[%c0_16, %c0_17] : memref<2x1024xf32, #tpu.memory_space<vmem>>, vector<2x1024xf32>
    tpu.vector_store %arg6[%c0_16, %c0_17], %33 {strides = array<i32>} : memref<2x1024xf32, #tpu.memory_space<vmem>>, vector<2x1024xf32>,
    %cst_18 = arith.constant dense<0.000000e+00> : vector<1024xf32>
    %35 = vector.multi_reduction <add>, %33, %cst_18 [0] : vector<2x1024xf32> to vector<1024xf32>
    %36 = vector.shape_cast %35 : vector<1024xf32> to vector<1x1024xf32>
    %c0_19 = arith.constant 0 : index
    %c0_20 = arith.constant 0 : index
    %37 = vector.load %arg7[%c0_19, %c0_20] : memref<2x1024xf32, #tpu.memory_space<vmem>>, vector<1x1024xf32>
    tpu.vector_store %arg7[%c0_19, %c0_20], %36 {strides = array<i32>} : memref<2x1024xf32, #tpu.memory_space<vmem>>, vector<1x1024xf32>,
    %38 = arith.mulf %33, %33 : vector<2x1024xf32>
    %cst_21 = arith.constant dense<0.000000e+00> : vector<1024xf32>
    %39 = vector.multi_reduction <add>, %38, %cst_21 [0] : vector<2x1024xf32> to vector<1024xf32>
    %40 = vector.shape_cast %39 : vector<1024xf32> to vector<1x1024xf32>
    %c1 = arith.constant 1 : index
    %c0_22 = arith.constant 0 : index
    %41 = vector.load %arg7[%c1, %c0_22] : memref<2x1024xf32, #tpu.memory_space<vmem>>, vector<1x1024xf32>
    tpu.vector_store %arg7[%c1, %c0_22], %40 {strides = array<i32>} : memref<2x1024xf32, #tpu.memory_space<vmem>>, vector<1x1024xf32>,
    return
  }
  func.func @transform_0(%arg0: i32) -> (i32, i32) {
    %c0_i32 = arith.constant 0 : i32
    %c0_i32_0 = arith.constant 0 : i32
    %c0_i32_1 = arith.constant 0 : i32
    return %c0_i32, %c0_i32_0 : i32, i32
  }
  func.func @transform_1(%arg0: i32) -> (i32, i32) {
    %c0_i32 = arith.constant 0 : i32
    %c0_i32_0 = arith.constant 0 : i32
    %c0_i32_1 = arith.constant 0 : i32
    return %c0_i32, %c0_i32_0 : i32, i32
  }
  func.func @transform_2(%arg0: i32) -> (i32, i32) {
    %c0_i32 = arith.constant 0 : i32
    %c0_i32_0 = arith.constant 0 : i32
    %c0_i32_1 = arith.constant 0 : i32
    return %c0_i32, %c0_i32_0 : i32, i32
  }
  func.func @transform_3(%arg0: i32) -> (i32, i32) {
    %c0_i32 = arith.constant 0 : i32
    %c0_i32_0 = arith.constant 0 : i32
    %c0_i32_1 = arith.constant 0 : i32
    return %c0_i32, %c0_i32_0 : i32, i32
  }
  func.func @transform_4(%arg0: i32) -> (i32, i32) {
    %c0_i32 = arith.constant 0 : i32
    %c0_i32_0 = arith.constant 0 : i32
    %c0_i32_1 = arith.constant 0 : i32
    return %c0_i32, %c0_i32_0 : i32, i32
  }
  func.func @transform_5(%arg0: i32) -> (i32, i32) {
    %c0_i32 = arith.constant 0 : i32
    %c0_i32_0 = arith.constant 0 : i32
    %c0_i32_1 = arith.constant 0 : i32
    return %c0_i32, %c0_i32_0 : i32, i32
  }
  func.func @transform_6(%arg0: i32) -> (i32, i32) {
    %c0_i32 = arith.constant 0 : i32
    %c0_i32_0 = arith.constant 0 : i32
    %c0_i32_1 = arith.constant 0 : i32
    return %c0_i32, %c0_i32_0 : i32, i32
  }
}

module attributes {stable_mosaic.version = 11 : i64} {
  func.func @_gemm_scale_stats_kernel(%arg0: i32, %arg1: memref<32x576xbf16, #tpu.memory_space<vmem>>, %arg2: memref<1x576xf32, #tpu.memory_space<vmem>>, %arg3: memref<576x128xbf16, #tpu.memory_space<vmem>>, %arg4: memref<1x128xf32, #tpu.memory_space<vmem>>, %arg5: memref<32x128xf32, #tpu.memory_space<vmem>>, %arg6: memref<2x128xf32, #tpu.memory_space<vmem>>) attributes {dimension_semantics = [#tpu.dimension_semantics<arbitrary>], iteration_bounds = array<i64: 1>, scalar_prefetch = 0 : i64, scratch_operands = 0 : i64, tpu.core_type = #tpu.core_type<tc>, window_params = [{pipeline_mode = #tpu.pipeline_mode<synchronous>, transform_indices = @transform_0, window_bounds = array<i64: 32, 576>}, {pipeline_mode = #tpu.pipeline_mode<synchronous>, transform_indices = @transform_1, window_bounds = array<i64: 1, 576>}, {pipeline_mode = #tpu.pipeline_mode<synchronous>, transform_indices = @transform_2, window_bounds = array<i64: 576, 128>}, {pipeline_mode = #tpu.pipeline_mode<synchronous>, transform_indices = @transform_3, window_bounds = array<i64: 1, 128>}, {pipeline_mode = #tpu.pipeline_mode<synchronous>, transform_indices = @transform_4, window_bounds = array<i64: 32, 128>}, {pipeline_mode = #tpu.pipeline_mode<synchronous>, transform_indices = @transform_5, window_bounds = array<i64: 2, 128>}]} {
    %c0 = arith.constant 0 : index
    %c0_0 = arith.constant 0 : index
    %0 = vector.load %arg1[%c0, %c0_0] : memref<32x576xbf16, #tpu.memory_space<vmem>>, vector<32x576xbf16>
    %c0_1 = arith.constant 0 : index
    %c0_2 = arith.constant 0 : index
    %1 = vector.load %arg2[%c0_1, %c0_2] : memref<1x576xf32, #tpu.memory_space<vmem>>, vector<1x576xf32>
    %2 = arith.extf %0 : vector<32x576xbf16> to vector<32x576xf32>
    %3 = vector.broadcast %1 : vector<1x576xf32> to vector<32x576xf32>
    %4 = arith.mulf %2, %3 : vector<32x576xf32>
    %5 = arith.truncf %4 : vector<32x576xf32> to vector<32x576xbf16>
    %c0_3 = arith.constant 0 : index
    %c0_4 = arith.constant 0 : index
    %6 = vector.load %arg3[%c0_3, %c0_4] : memref<576x128xbf16, #tpu.memory_space<vmem>>, vector<576x128xbf16>
    %cst = arith.constant dense<0.000000e+00> : vector<32x128xf32>
    %7 = tpu.matmul %5, %6, %cst {dimension_numbers = #tpu.dot_dimension_numbers<[1], [0], [0], [1], [0, 0, 1, 1], [], []>} : vector<32x576xbf16>, vector<576x128xbf16>, vector<32x128xf32> -> vector<32x128xf32>
    %c0_5 = arith.constant 0 : index
    %c0_6 = arith.constant 0 : index
    %8 = vector.load %arg4[%c0_5, %c0_6] : memref<1x128xf32, #tpu.memory_space<vmem>>, vector<1x128xf32>
    %9 = vector.broadcast %8 : vector<1x128xf32> to vector<32x128xf32>
    %10 = arith.addf %7, %9 : vector<32x128xf32>
    %c0_7 = arith.constant 0 : index
    %c0_8 = arith.constant 0 : index
    %11 = vector.load %arg5[%c0_7, %c0_8] : memref<32x128xf32, #tpu.memory_space<vmem>>, vector<32x128xf32>
    tpu.vector_store %arg5[%c0_7, %c0_8], %10 {strides = array<i32>} : memref<32x128xf32, #tpu.memory_space<vmem>>, vector<32x128xf32>,
    %cst_9 = arith.constant dense<0.000000e+00> : vector<128xf32>
    %12 = vector.multi_reduction <add>, %10, %cst_9 [0] : vector<32x128xf32> to vector<128xf32>
    %13 = vector.shape_cast %12 : vector<128xf32> to vector<1x128xf32>
    %c0_10 = arith.constant 0 : index
    %c0_11 = arith.constant 0 : index
    %14 = vector.load %arg6[%c0_10, %c0_11] : memref<2x128xf32, #tpu.memory_space<vmem>>, vector<1x128xf32>
    tpu.vector_store %arg6[%c0_10, %c0_11], %13 {strides = array<i32>} : memref<2x128xf32, #tpu.memory_space<vmem>>, vector<1x128xf32>,
    %15 = arith.mulf %10, %10 : vector<32x128xf32>
    %cst_12 = arith.constant dense<0.000000e+00> : vector<128xf32>
    %16 = vector.multi_reduction <add>, %15, %cst_12 [0] : vector<32x128xf32> to vector<128xf32>
    %17 = vector.shape_cast %16 : vector<128xf32> to vector<1x128xf32>
    %c1 = arith.constant 1 : index
    %c0_13 = arith.constant 0 : index
    %18 = vector.load %arg6[%c1, %c0_13] : memref<2x128xf32, #tpu.memory_space<vmem>>, vector<1x128xf32>
    tpu.vector_store %arg6[%c1, %c0_13], %17 {strides = array<i32>} : memref<2x128xf32, #tpu.memory_space<vmem>>, vector<1x128xf32>,
    return
  }
  func.func @transform_0(%arg0: i32) -> (i32, i32) {
    %c0_i32 = arith.constant 0 : i32
    %c0_i32_0 = arith.constant 0 : i32
    %c0_i32_1 = arith.constant 0 : i32
    return %c0_i32, %c0_i32_0 : i32, i32
  }
  func.func @transform_1(%arg0: i32) -> (i32, i32) {
    %c0_i32 = arith.constant 0 : i32
    %c0_i32_0 = arith.constant 0 : i32
    %c0_i32_1 = arith.constant 0 : i32
    return %c0_i32, %c0_i32_0 : i32, i32
  }
  func.func @transform_2(%arg0: i32) -> (i32, i32) {
    %c0_i32 = arith.constant 0 : i32
    %c0_i32_0 = arith.constant 0 : i32
    %c0_i32_1 = arith.constant 0 : i32
    return %c0_i32, %c0_i32_0 : i32, i32
  }
  func.func @transform_3(%arg0: i32) -> (i32, i32) {
    %c0_i32 = arith.constant 0 : i32
    %c0_i32_0 = arith.constant 0 : i32
    %c0_i32_1 = arith.constant 0 : i32
    return %c0_i32, %c0_i32_0 : i32, i32
  }
  func.func @transform_4(%arg0: i32) -> (i32, i32) {
    %c0_i32 = arith.constant 0 : i32
    %c0_i32_0 = arith.constant 0 : i32
    %c0_i32_1 = arith.constant 0 : i32
    return %c0_i32, %c0_i32_0 : i32, i32
  }
  func.func @transform_5(%arg0: i32) -> (i32, i32) {
    %c0_i32 = arith.constant 0 : i32
    %c0_i32_0 = arith.constant 0 : i32
    %c0_i32_1 = arith.constant 0 : i32
    return %c0_i32, %c0_i32_0 : i32, i32
  }
}

module attributes {stable_mosaic.version = 11 : i64} {
  func.func @_gemm_t_scale_stats_kernel(%arg0: i32, %arg1: memref<128x288xbf16, #tpu.memory_space<vmem>>, %arg2: memref<1x288xf32, #tpu.memory_space<vmem>>, %arg3: memref<64x288xbf16, #tpu.memory_space<vmem>>, %arg4: memref<64x1xf32, #tpu.memory_space<vmem>>, %arg5: memref<64x128xf32, #tpu.memory_space<vmem>>, %arg6: memref<64x2xf32, #tpu.memory_space<vmem>>) attributes {dimension_semantics = [#tpu.dimension_semantics<arbitrary>], iteration_bounds = array<i64: 1>, scalar_prefetch = 0 : i64, scratch_operands = 0 : i64, tpu.core_type = #tpu.core_type<tc>, window_params = [{pipeline_mode = #tpu.pipeline_mode<synchronous>, transform_indices = @transform_0, window_bounds = array<i64: 128, 288>}, {pipeline_mode = #tpu.pipeline_mode<synchronous>, transform_indices = @transform_1, window_bounds = array<i64: 1, 288>}, {pipeline_mode = #tpu.pipeline_mode<synchronous>, transform_indices = @transform_2, window_bounds = array<i64: 64, 288>}, {pipeline_mode = #tpu.pipeline_mode<synchronous>, transform_indices = @transform_3, window_bounds = array<i64: 64, 1>}, {pipeline_mode = #tpu.pipeline_mode<synchronous>, transform_indices = @transform_4, window_bounds = array<i64: 64, 128>}, {pipeline_mode = #tpu.pipeline_mode<synchronous>, transform_indices = @transform_5, window_bounds = array<i64: 64, 2>}]} {
    %c0 = arith.constant 0 : index
    %c0_0 = arith.constant 0 : index
    %0 = vector.load %arg1[%c0, %c0_0] : memref<128x288xbf16, #tpu.memory_space<vmem>>, vector<128x288xbf16>
    %c0_1 = arith.constant 0 : index
    %c0_2 = arith.constant 0 : index
    %1 = vector.load %arg2[%c0_1, %c0_2] : memref<1x288xf32, #tpu.memory_space<vmem>>, vector<1x288xf32>
    %2 = arith.extf %0 : vector<128x288xbf16> to vector<128x288xf32>
    %3 = vector.broadcast %1 : vector<1x288xf32> to vector<128x288xf32>
    %4 = arith.mulf %2, %3 : vector<128x288xf32>
    %5 = arith.truncf %4 : vector<128x288xf32> to vector<128x288xbf16>
    %c0_3 = arith.constant 0 : index
    %c0_4 = arith.constant 0 : index
    %6 = vector.load %arg3[%c0_3, %c0_4] : memref<64x288xbf16, #tpu.memory_space<vmem>>, vector<64x288xbf16>
    %cst = arith.constant dense<0.000000e+00> : vector<64x128xf32>
    %7 = tpu.matmul %6, %5, %cst {dimension_numbers = #tpu.dot_dimension_numbers<[1], [1], [0], [0], [0, 0, 1, 0], [], []>} : vector<64x288xbf16>, vector<128x288xbf16>, vector<64x128xf32> -> vector<64x128xf32>
    %c0_5 = arith.constant 0 : index
    %c0_6 = arith.constant 0 : index
    %8 = vector.load %arg4[%c0_5, %c0_6] : memref<64x1xf32, #tpu.memory_space<vmem>>, vector<64x1xf32>
    %9 = vector.broadcast %8 : vector<64x1xf32> to vector<64x128xf32>
    %10 = arith.addf %7, %9 : vector<64x128xf32>
    %c0_7 = arith.constant 0 : index
    %c0_8 = arith.constant 0 : index
    %11 = vector.load %arg5[%c0_7, %c0_8] : memref<64x128xf32, #tpu.memory_space<vmem>>, vector<64x128xf32>
    tpu.vector_store %arg5[%c0_7, %c0_8], %10 {strides = array<i32>} : memref<64x128xf32, #tpu.memory_space<vmem>>, vector<64x128xf32>,
    %cst_9 = arith.constant dense<0.000000e+00> : vector<64xf32>
    %12 = vector.multi_reduction <add>, %10, %cst_9 [1] : vector<64x128xf32> to vector<64xf32>
    %13 = vector.shape_cast %12 : vector<64xf32> to vector<64x1xf32>
    %c0_10 = arith.constant 0 : index
    %c0_11 = arith.constant 0 : index
    %14 = vector.load %arg6[%c0_10, %c0_11] : memref<64x2xf32, #tpu.memory_space<vmem>>, vector<64x1xf32>
    tpu.vector_store %arg6[%c0_10, %c0_11], %13 {strides = array<i32>} : memref<64x2xf32, #tpu.memory_space<vmem>>, vector<64x1xf32>,
    %15 = arith.mulf %10, %10 : vector<64x128xf32>
    %cst_12 = arith.constant dense<0.000000e+00> : vector<64xf32>
    %16 = vector.multi_reduction <add>, %15, %cst_12 [1] : vector<64x128xf32> to vector<64xf32>
    %17 = vector.shape_cast %16 : vector<64xf32> to vector<64x1xf32>
    %c0_13 = arith.constant 0 : index
    %c1 = arith.constant 1 : index
    %18 = vector.load %arg6[%c0_13, %c1] : memref<64x2xf32, #tpu.memory_space<vmem>>, vector<64x1xf32>
    tpu.vector_store %arg6[%c0_13, %c1], %17 {strides = array<i32>} : memref<64x2xf32, #tpu.memory_space<vmem>>, vector<64x1xf32>,
    return
  }
  func.func @transform_0(%arg0: i32) -> (i32, i32) {
    %c0_i32 = arith.constant 0 : i32
    %c0_i32_0 = arith.constant 0 : i32
    %c0_i32_1 = arith.constant 0 : i32
    return %c0_i32, %c0_i32_0 : i32, i32
  }
  func.func @transform_1(%arg0: i32) -> (i32, i32) {
    %c0_i32 = arith.constant 0 : i32
    %c0_i32_0 = arith.constant 0 : i32
    %c0_i32_1 = arith.constant 0 : i32
    return %c0_i32, %c0_i32_0 : i32, i32
  }
  func.func @transform_2(%arg0: i32) -> (i32, i32) {
    %c0_i32 = arith.constant 0 : i32
    %c0_i32_0 = arith.constant 0 : i32
    %c0_i32_1 = arith.constant 0 : i32
    return %c0_i32, %c0_i32_0 : i32, i32
  }
  func.func @transform_3(%arg0: i32) -> (i32, i32) {
    %c0_i32 = arith.constant 0 : i32
    %c0_i32_0 = arith.constant 0 : i32
    %c0_i32_1 = arith.constant 0 : i32
    return %c0_i32, %c0_i32_0 : i32, i32
  }
  func.func @transform_4(%arg0: i32) -> (i32, i32) {
    %c0_i32 = arith.constant 0 : i32
    %c0_i32_0 = arith.constant 0 : i32
    %c0_i32_1 = arith.constant 0 : i32
    return %c0_i32, %c0_i32_0 : i32, i32
  }
  func.func @transform_5(%arg0: i32) -> (i32, i32) {
    %c0_i32 = arith.constant 0 : i32
    %c0_i32_0 = arith.constant 0 : i32
    %c0_i32_1 = arith.constant 0 : i32
    return %c0_i32, %c0_i32_0 : i32, i32
  }
}

module attributes {stable_mosaic.version = 11 : i64} {
  func.func @_gemm_t_scale_stats_kernel(%arg0: i32, %arg1: memref<512x144xbf16, #tpu.memory_space<vmem>>, %arg2: memref<1x144xf32, #tpu.memory_space<vmem>>, %arg3: memref<32x144xbf16, #tpu.memory_space<vmem>>, %arg4: memref<32x1xf32, #tpu.memory_space<vmem>>, %arg5: memref<32x512xf32, #tpu.memory_space<vmem>>, %arg6: memref<32x2xf32, #tpu.memory_space<vmem>>) attributes {dimension_semantics = [#tpu.dimension_semantics<arbitrary>], iteration_bounds = array<i64: 1>, scalar_prefetch = 0 : i64, scratch_operands = 0 : i64, tpu.core_type = #tpu.core_type<tc>, window_params = [{pipeline_mode = #tpu.pipeline_mode<synchronous>, transform_indices = @transform_0, window_bounds = array<i64: 512, 144>}, {pipeline_mode = #tpu.pipeline_mode<synchronous>, transform_indices = @transform_1, window_bounds = array<i64: 1, 144>}, {pipeline_mode = #tpu.pipeline_mode<synchronous>, transform_indices = @transform_2, window_bounds = array<i64: 32, 144>}, {pipeline_mode = #tpu.pipeline_mode<synchronous>, transform_indices = @transform_3, window_bounds = array<i64: 32, 1>}, {pipeline_mode = #tpu.pipeline_mode<synchronous>, transform_indices = @transform_4, window_bounds = array<i64: 32, 512>}, {pipeline_mode = #tpu.pipeline_mode<synchronous>, transform_indices = @transform_5, window_bounds = array<i64: 32, 2>}]} {
    %c0 = arith.constant 0 : index
    %c0_0 = arith.constant 0 : index
    %0 = vector.load %arg1[%c0, %c0_0] : memref<512x144xbf16, #tpu.memory_space<vmem>>, vector<512x144xbf16>
    %c0_1 = arith.constant 0 : index
    %c0_2 = arith.constant 0 : index
    %1 = vector.load %arg2[%c0_1, %c0_2] : memref<1x144xf32, #tpu.memory_space<vmem>>, vector<1x144xf32>
    %2 = arith.extf %0 : vector<512x144xbf16> to vector<512x144xf32>
    %3 = vector.broadcast %1 : vector<1x144xf32> to vector<512x144xf32>
    %4 = arith.mulf %2, %3 : vector<512x144xf32>
    %5 = arith.truncf %4 : vector<512x144xf32> to vector<512x144xbf16>
    %c0_3 = arith.constant 0 : index
    %c0_4 = arith.constant 0 : index
    %6 = vector.load %arg3[%c0_3, %c0_4] : memref<32x144xbf16, #tpu.memory_space<vmem>>, vector<32x144xbf16>
    %cst = arith.constant dense<0.000000e+00> : vector<32x512xf32>
    %7 = tpu.matmul %6, %5, %cst {dimension_numbers = #tpu.dot_dimension_numbers<[1], [1], [0], [0], [0, 0, 1, 0], [], []>} : vector<32x144xbf16>, vector<512x144xbf16>, vector<32x512xf32> -> vector<32x512xf32>
    %c0_5 = arith.constant 0 : index
    %c0_6 = arith.constant 0 : index
    %8 = vector.load %arg4[%c0_5, %c0_6] : memref<32x1xf32, #tpu.memory_space<vmem>>, vector<32x1xf32>
    %9 = vector.broadcast %8 : vector<32x1xf32> to vector<32x512xf32>
    %10 = arith.addf %7, %9 : vector<32x512xf32>
    %c0_7 = arith.constant 0 : index
    %c0_8 = arith.constant 0 : index
    %11 = vector.load %arg5[%c0_7, %c0_8] : memref<32x512xf32, #tpu.memory_space<vmem>>, vector<32x512xf32>
    tpu.vector_store %arg5[%c0_7, %c0_8], %10 {strides = array<i32>} : memref<32x512xf32, #tpu.memory_space<vmem>>, vector<32x512xf32>,
    %cst_9 = arith.constant dense<0.000000e+00> : vector<32xf32>
    %12 = vector.multi_reduction <add>, %10, %cst_9 [1] : vector<32x512xf32> to vector<32xf32>
    %13 = vector.shape_cast %12 : vector<32xf32> to vector<32x1xf32>
    %c0_10 = arith.constant 0 : index
    %c0_11 = arith.constant 0 : index
    %14 = vector.load %arg6[%c0_10, %c0_11] : memref<32x2xf32, #tpu.memory_space<vmem>>, vector<32x1xf32>
    tpu.vector_store %arg6[%c0_10, %c0_11], %13 {strides = array<i32>} : memref<32x2xf32, #tpu.memory_space<vmem>>, vector<32x1xf32>,
    %15 = arith.mulf %10, %10 : vector<32x512xf32>
    %cst_12 = arith.constant dense<0.000000e+00> : vector<32xf32>
    %16 = vector.multi_reduction <add>, %15, %cst_12 [1] : vector<32x512xf32> to vector<32xf32>
    %17 = vector.shape_cast %16 : vector<32xf32> to vector<32x1xf32>
    %c0_13 = arith.constant 0 : index
    %c1 = arith.constant 1 : index
    %18 = vector.load %arg6[%c0_13, %c1] : memref<32x2xf32, #tpu.memory_space<vmem>>, vector<32x1xf32>
    tpu.vector_store %arg6[%c0_13, %c1], %17 {strides = array<i32>} : memref<32x2xf32, #tpu.memory_space<vmem>>, vector<32x1xf32>,
    return
  }
  func.func @transform_0(%arg0: i32) -> (i32, i32) {
    %c0_i32 = arith.constant 0 : i32
    %c0_i32_0 = arith.constant 0 : i32
    %c0_i32_1 = arith.constant 0 : i32
    return %c0_i32, %c0_i32_0 : i32, i32
  }
  func.func @transform_1(%arg0: i32) -> (i32, i32) {
    %c0_i32 = arith.constant 0 : i32
    %c0_i32_0 = arith.constant 0 : i32
    %c0_i32_1 = arith.constant 0 : i32
    return %c0_i32, %c0_i32_0 : i32, i32
  }
  func.func @transform_2(%arg0: i32) -> (i32, i32) {
    %c0_i32 = arith.constant 0 : i32
    %c0_i32_0 = arith.constant 0 : i32
    %c0_i32_1 = arith.constant 0 : i32
    return %c0_i32, %c0_i32_0 : i32, i32
  }
  func.func @transform_3(%arg0: i32) -> (i32, i32) {
    %c0_i32 = arith.constant 0 : i32
    %c0_i32_0 = arith.constant 0 : i32
    %c0_i32_1 = arith.constant 0 : i32
    return %c0_i32, %c0_i32_0 : i32, i32
  }
  func.func @transform_4(%arg0: i32) -> (i32, i32) {
    %c0_i32 = arith.constant 0 : i32
    %c0_i32_0 = arith.constant 0 : i32
    %c0_i32_1 = arith.constant 0 : i32
    return %c0_i32, %c0_i32_0 : i32, i32
  }
  func.func @transform_5(%arg0: i32) -> (i32, i32) {
    %c0_i32 = arith.constant 0 : i32
    %c0_i32_0 = arith.constant 0 : i32
    %c0_i32_1 = arith.constant 0 : i32
    return %c0_i32, %c0_i32_0 : i32, i32
  }
}

module attributes {stable_mosaic.version = 11 : i64} {
  func.func @_gemm_t_scale_kernel(%arg0: i32, %arg1: memref<2048x72xbf16, #tpu.memory_space<vmem>>, %arg2: memref<1x72xf32, #tpu.memory_space<vmem>>, %arg3: memref<12x72xbf16, #tpu.memory_space<vmem>>, %arg4: memref<12x1xf32, #tpu.memory_space<vmem>>, %arg5: memref<12x2048xf32, #tpu.memory_space<vmem>>) attributes {dimension_semantics = [#tpu.dimension_semantics<arbitrary>], iteration_bounds = array<i64: 1>, scalar_prefetch = 0 : i64, scratch_operands = 0 : i64, tpu.core_type = #tpu.core_type<tc>, window_params = [{pipeline_mode = #tpu.pipeline_mode<synchronous>, transform_indices = @transform_0, window_bounds = array<i64: 2048, 72>}, {pipeline_mode = #tpu.pipeline_mode<synchronous>, transform_indices = @transform_1, window_bounds = array<i64: 1, 72>}, {pipeline_mode = #tpu.pipeline_mode<synchronous>, transform_indices = @transform_2, window_bounds = array<i64: 12, 72>}, {pipeline_mode = #tpu.pipeline_mode<synchronous>, transform_indices = @transform_3, window_bounds = array<i64: 12, 1>}, {pipeline_mode = #tpu.pipeline_mode<synchronous>, transform_indices = @transform_4, window_bounds = array<i64: 12, 2048>}]} {
    %c0 = arith.constant 0 : index
    %c0_0 = arith.constant 0 : index
    %0 = vector.load %arg1[%c0, %c0_0] : memref<2048x72xbf16, #tpu.memory_space<vmem>>, vector<2048x72xbf16>
    %c0_1 = arith.constant 0 : index
    %c0_2 = arith.constant 0 : index
    %1 = vector.load %arg2[%c0_1, %c0_2] : memref<1x72xf32, #tpu.memory_space<vmem>>, vector<1x72xf32>
    %2 = arith.extf %0 : vector<2048x72xbf16> to vector<2048x72xf32>
    %3 = vector.broadcast %1 : vector<1x72xf32> to vector<2048x72xf32>
    %4 = arith.mulf %2, %3 : vector<2048x72xf32>
    %5 = arith.truncf %4 : vector<2048x72xf32> to vector<2048x72xbf16>
    %c0_3 = arith.constant 0 : index
    %c0_4 = arith.constant 0 : index
    %6 = vector.load %arg3[%c0_3, %c0_4] : memref<12x72xbf16, #tpu.memory_space<vmem>>, vector<12x72xbf16>
    %cst = arith.constant dense<0.000000e+00> : vector<12x2048xf32>
    %7 = tpu.matmul %6, %5, %cst {dimension_numbers = #tpu.dot_dimension_numbers<[1], [1], [0], [0], [0, 0, 1, 0], [], []>} : vector<12x72xbf16>, vector<2048x72xbf16>, vector<12x2048xf32> -> vector<12x2048xf32>
    %c0_5 = arith.constant 0 : index
    %c0_6 = arith.constant 0 : index
    %8 = vector.load %arg4[%c0_5, %c0_6] : memref<12x1xf32, #tpu.memory_space<vmem>>, vector<12x1xf32>
    %9 = vector.broadcast %8 : vector<12x1xf32> to vector<12x2048xf32>
    %10 = arith.addf %7, %9 : vector<12x2048xf32>
    %c0_7 = arith.constant 0 : index
    %c0_8 = arith.constant 0 : index
    %11 = vector.load %arg5[%c0_7, %c0_8] : memref<12x2048xf32, #tpu.memory_space<vmem>>, vector<12x2048xf32>
    tpu.vector_store %arg5[%c0_7, %c0_8], %10 {strides = array<i32>} : memref<12x2048xf32, #tpu.memory_space<vmem>>, vector<12x2048xf32>,
    return
  }
  func.func @transform_0(%arg0: i32) -> (i32, i32) {
    %c0_i32 = arith.constant 0 : i32
    %c0_i32_0 = arith.constant 0 : i32
    %c0_i32_1 = arith.constant 0 : i32
    return %c0_i32, %c0_i32_0 : i32, i32
  }
  func.func @transform_1(%arg0: i32) -> (i32, i32) {
    %c0_i32 = arith.constant 0 : i32
    %c0_i32_0 = arith.constant 0 : i32
    %c0_i32_1 = arith.constant 0 : i32
    return %c0_i32, %c0_i32_0 : i32, i32
  }
  func.func @transform_2(%arg0: i32) -> (i32, i32) {
    %c0_i32 = arith.constant 0 : i32
    %c0_i32_0 = arith.constant 0 : i32
    %c0_i32_1 = arith.constant 0 : i32
    return %c0_i32, %c0_i32_0 : i32, i32
  }
  func.func @transform_3(%arg0: i32) -> (i32, i32) {
    %c0_i32 = arith.constant 0 : i32
    %c0_i32_0 = arith.constant 0 : i32
    %c0_i32_1 = arith.constant 0 : i32
    return %c0_i32, %c0_i32_0 : i32, i32
  }
  func.func @transform_4(%arg0: i32) -> (i32, i32) {
    %c0_i32 = arith.constant 0 : i32
    %c0_i32_0 = arith.constant 0 : i32
    %c0_i32_1 = arith.constant 0 : i32
    return %c0_i32, %c0_i32_0 : i32, i32
  }
}

</mosaic_0001>

<llo_original>
// kernel: squeeze.8
$region0: #{squeeze.8}
  %s0 = inlined_call_operand.vmem [shape: f32[1024], index: 0, kind: input, shape index: {}]
  %s1 = inlined_call_operand.vmem [shape: f32[16,64], index: 1, kind: output, shape index: {}]
  %v2 = vld [vmem:[%s0] sm:$0xff]
  %vm3 = vcmask 523264
  %4 = vst.msk [vmem:[%s1] ss:$2 sm:$0xff] %vm3, %v2
  %v5 = vld [vmem:[%s0] sm:$0xff]
  %6 = vrot.lane.b32.xlu0 %v5, 64
  %v7 = vpop.permute.xlu0 %6
  %vm8 = vcmask 523264
  %s9 = scalar_lea.vmem %s1, 1
  %10 = vst.msk [vmem:[%s9] ss:$2 sm:$0xff] %vm8, %v7

// kernel: tile.23
$region0: #{tile.23}
  #allocation0 [shape = 's32[1]{0}', space=sflag, size = 0x4, scoped, tag = 'scoped memory for tile.23']
  %s0 = inlined_call_operand.vmem [shape: f32[64], index: 0, kind: input, shape index: {}]
  %s1 = inlined_call_operand.vmem [shape: f32[9,64], index: 1, kind: output, shape index: {}]
  // Predicated region
  $region2: #{tile.23} parent=0 // pred_check
    _
  $region3: #{tile.23} parent=0 // pred_check_branch
    %3 = sbr.rel (0) target = $region5
  $region4: #{tile.23} parent=0 // pred_region
    _
  $region5: #{tile.23} parent=0 // pred_fallthru
    _
  %v4 = vld [vmem:[%s0] ss:$0 sm:$0xff]
  %5 = vst [vmem:[%s1] sm:$0xff] %v4
  %s6 = scalar_lea.vmem %s1, 8
  %7 = vst [vmem:[%s6] sm:$0xff] %v4

// kernel: tile.24
$region0: #{tile.24}
  %s0 = inlined_call_operand.vmem [shape: f32[9,64], index: 0, kind: input, shape index: {}]
  %s1 = inlined_call_operand.vmem [shape: f32[1,576], index: 1, kind: output, shape index: {}]
  $region1: #{tile.24} parent=0
    #allocation0 [shape = 'u8[20480]{0}', space=vmem, size = 0x5000, scoped, tag = 'scoped mem for output reshape']
    %v2 = vld [vmem:[%s0] ss:$2 sm:$0x1f]
    %vm3 = vcmask 523264
    %4 = vst.msk [vmem:[#allocation0] ss:$8 sm:$0xf] %vm3, %v2
    %s5 = scalar_lea.vmem [#allocation0], 28
    %6 = vst.msk [vmem:[%s5] sm:$0x10] %vm3, %v2
    %s7 = scalar_lea.vmem %s0, 1
    %v8 = vld [vmem:[%s7] ss:$2 sm:$0xf]
    %9 = vrot.lane.b32.xlu0 %v8, 64
    %v10 = vpop.permute.xlu0 %9
    %vm11 = vcmask 1048064
    %12 = vst.msk [vmem:[#allocation0] ss:$8 sm:$0xf] %vm11, %v10
    %s14 = sshllo.u32 0, 1
    %v16 = vld [vmem:[#allocation0] sm:%s14]
    %s17 = sshllo.u32 0, 1
    %18 = vst [vmem:[%s1] sm:%s17] %v16
    %s19 = scalar_lea.vmem [#allocation0], 8
    %v20 = vld [vmem:[%s19] sm:%s14]
    %s21 = sshllo.u32 0, 1
    %s22 = scalar_lea.vmem %s1, 1
    %23 = vst [vmem:[%s22] sm:%s21] %v20
    %s24 = scalar_lea.vmem [#allocation0], 16
    %v25 = vld [vmem:[%s24] sm:%s14]
    %s26 = sshllo.u32 0, 1
    %s27 = smul.addr 1, 2
    %s28 = scalar_lea.vmem %s1, %s27
    %29 = vst [vmem:[%s28] sm:%s26] %v25
    %s30 = scalar_lea.vmem [#allocation0], 24
    %v31 = vld [vmem:[%s30] sm:%s14]
    %s32 = sshllo.u32 0, 1
    %s33 = smul.addr 1, 3
    %s34 = scalar_lea.vmem %s1, %s33
    %35 = vst [vmem:[%s34] sm:%s32] %v31
    %s36 = scalar_lea.vmem [#allocation0], 32
    %v37 = vld [vmem:[%s36] sm:%s14]
    %s38 = sshllo.u32 0, 1
    %s39 = smul.addr 1, 4
    %s40 = scalar_lea.vmem %s1, %s39
    %41 = vst [vmem:[%s40] sm:%s38] %v37

// kernel: frame_generator_forward.5
$region0: #{frame_generator_forward.5}
  #allocation0 [shape = 'u32[]', space=smem, size = 0x4, offset = 0x4, fixed_abs, tag = 'smem constant byte address 0x4 - core index']
  #allocation1 [shape = 'u32[144,128]{1,0:T(1,128)}', space=vmem, size = 0x12000, scoped, tag = 'internal scratch']
  %s0 = inlined_call_operand.hbm [shape: f32[2,16], index: 0, kind: input, shape index: {}]
  %s1 = inlined_call_operand.hbm [shape: f32[1,16], index: 1, kind: input, shape index: {}]
  %s2 = inlined_call_operand.hbm [shape: f32[1,16], index: 2, kind: input, shape index: {}]
  %s3 = inlined_call_operand.vmem [shape: bf16[16,1024], index: 3, kind: input, shape index: {}]
  %s4 = inlined_call_operand.hbm [shape: f32[1,1024], index: 4, kind: input, shape index: {}]
  %s5 = inlined_call_operand.vmem [shape: f32[2,1024], index: 5, kind: output, shape index: {0}]
  %s6 = inlined_call_operand.vmem [shape: f32[2,1024], index: 6, kind: output, shape index: {1}]
  %7 = xla_tuple %s5, %s6
  %s8 = sld [smem:[#allocation0]]
  $region54: #{frame_generator_forward.5} parent=0
    _
  %s10 = ssub.s32 1, %s8
  %s11 = scalar_select 0, %s10, %s8
  $region1: #{frame_generator_forward.5} parent=0
    #allocation2 [shape = 'u8[1024]{0}', space=vmem, size = 0x400, scoped, tag = 'input window, operand 0, single buffered']
    #allocation3 [shape = 's32[1]{0}', space=sflag, size = 0x4, scoped, tag = 'scoped memory for frame_generator_forward.5']
    #allocation4 [shape = 'u8[512]{0}', space=vmem, size = 0x400, scoped, tag = 'input window, operand 1, single buffered']
    #allocation5 [shape = 's32[1]{0}', space=sflag, size = 0x4, scoped, tag = 'scoped memory for frame_generator_forward.5']
    #allocation6 [shape = 'u8[512]{0}', space=vmem, size = 0x400, scoped, tag = 'input window, operand 2, single buffered']
    #allocation7 [shape = 'u8[4096]{0}', space=vmem, size = 0x1000, scoped, tag = 'input window, operand 4, single buffered']
    #allocation8 [shape = 's32[1]{0}', space=sflag, size = 0x4, scoped, tag = 'scoped memory for frame_generator_forward.5']
    %12 = vsyncpa [#allocation3], 0
    %13 = vsyncpa [#allocation5], 0
    %14 = vsyncpa [#allocation8], 0
    // Predicated region
    $region2: #{frame_generator_forward.5} parent=1 // pred_check
      _
    $region3: #{frame_generator_forward.5} parent=1 // pred_check_branch
      %16 = sbr.rel (0) target = $region5
    $region4: #{frame_generator_forward.5} parent=1 // pred_region
      %s18 = ssub.s32 32, 32
      %19 = vsyncadd [#allocation3], %s18
      %s21 = sshll.u32 [#allocation2], 4
      %s22 = int_to_ptr.vmem [resolvable:$true] %s21
      %24 = dma.hbm_to_vmem [thread:$0]  %s0, 32, %s22, [#allocation3]
    $region5: #{frame_generator_forward.5} parent=1 // pred_fallthru
      _
    // Predicated region
    $region6: #{frame_generator_forward.5} parent=1 // pred_check
      _
    $region7: #{frame_generator_forward.5} parent=1 // pred_check_branch
      %26 = sbr.rel (0) target = $region9
    $region8: #{frame_generator_forward.5} parent=1 // pred_region
      %s28 = ssub.s32 16, 16
      %29 = vsyncadd [#allocation5], %s28
      %s31 = sshll.u32 [#allocation4], 4
      %s32 = int_to_ptr.vmem [resolvable:$true] %s31
      %34 = dma.hbm_to_vmem [thread:$0]  %s1, 16, %s32, [#allocation5]
    $region9: #{frame_generator_forward.5} parent=1 // pred_fallthru
      _
    // Predicated region
    $region10: #{frame_generator_forward.5} parent=1 // pred_check
      _
    $region11: #{frame_generator_forward.5} parent=1 // pred_check_branch
      %36 = sbr.rel (0) target = $region13
    $region12: #{frame_generator_forward.5} parent=1 // pred_region
      %s38 = ssub.s32 16, 16
      %39 = vsyncadd [#allocation5], %s38
      %s41 = sshll.u32 [#allocation6], 4
      %s42 = int_to_ptr.vmem [resolvable:$true] %s41
      %44 = dma.hbm_to_vmem [thread:$0]  %s2, 16, %s42, [#allocation5]
    $region13: #{frame_generator_forward.5} parent=1 // pred_fallthru
      _
    // Predicated region
    $region14: #{frame_generator_forward.5} parent=1 // pred_check
      _
    $region15: #{frame_generator_forward.5} parent=1 // pred_check_branch
      %46 = sbr.rel (0) target = $region17
    $region16: #{frame_generator_forward.5} parent=1 // pred_region
      _
    $region17: #{frame_generator_forward.5} parent=1 // pred_fallthru
      _
    // Predicated region
    $region18: #{frame_generator_forward.5} parent=1 // pred_check
      _
    $region19: #{frame_generator_forward.5} parent=1 // pred_check_branch
      %48 = sbr.rel (0) target = $region21
    $region20: #{frame_generator_forward.5} parent=1 // pred_region
      %s50 = ssub.s32 128, 128
      %51 = vsyncadd [#allocation8], %s50
      %s53 = sshll.u32 [#allocation7], 4
      %s54 = int_to_ptr.vmem [resolvable:$true] %s53
      %56 = dma.hbm_to_vmem [thread:$0]  %s4, 128, %s54, [#allocation8]
    $region21: #{frame_generator_forward.5} parent=1 // pred_fallthru
      _
    // Predicated region
    $region22: #{frame_generator_forward.5} parent=1 // pred_check
      _
    $region23: #{frame_generator_forward.5} parent=1 // pred_check_branch
      %58 = sbr.rel (0) target = $region25
    $region24: #{frame_generator_forward.5} parent=1 // pred_region
      %59 = dma.done [#allocation3], 32
    $region25: #{frame_generator_forward.5} parent=1 // pred_fallthru
      _
    // Predicated region
    $region26: #{frame_generator_forward.5} parent=1 // pred_check
      _
    $region27: #{frame_generator_forward.5} parent=1 // pred_check_branch
      %61 = sbr.rel (0) target = $region29
    $region28: #{frame_generator_forward.5} parent=1 // pred_region
      %62 = dma.done [#allocation5], 16
    $region29: #{frame_generator_forward.5} parent=1 // pred_fallthru
      _
    // Predicated region
    $region30: #{frame_generator_forward.5} parent=1 // pred_check
      _
    $region31: #{frame_generator_forward.5} parent=1 // pred_check_branch
      %64 = sbr.rel (0) target = $region33
    $region32: #{frame_generator_forward.5} parent=1 // pred_region
      %65 = dma.done [#allocation5], 16
    $region33: #{frame_generator_forward.5} parent=1 // pred_fallthru
      _
    // Predicated region
    $region34: #{frame_generator_forward.5} parent=1 // pred_check
      _
    $region35: #{frame_generator_forward.5} parent=1 // pred_check_branch
      %67 = sbr.rel (0) target = $region37
    $region36: #{frame_generator_forward.5} parent=1 // pred_region
      %68 = dma.done [#allocation8], 128
    $region37: #{frame_generator_forward.5} parent=1 // pred_fallthru
      _
    %v70 = vld [vmem:[#allocation2] sm:$0x3]
    %vm71 = vcmask 123904
    %v72 = vsel %vm71, %v70, 0.0
    %v73 = vrot.slane %v72, 4
    %v74 = vadd.f32 %v72, %v73
    %v75 = vrot.slane %v74, 2
    %v76 = vadd.f32 %v74, %v75
    %v77 = vrot.slane %v76, 1
    %v78 = vadd.f32 %v76, %v77
    %v79 = vmul.f32 %v78, 0.5
    %v80 = vsub.f32 %v70, %v79
    %v81 = vmul.f32 %v80, %v80
    %v82 = vsel %vm71, %v81, 0.0
    %v83 = vrot.slane %v82, 4
    %v84 = vadd.f32 %v82, %v83
    %v85 = vrot.slane %v84, 2
    %v86 = vadd.f32 %v84, %v85
    %v87 = vrot.slane %v86, 1
    %v88 = vadd.f32 %v86, %v87
    %v89 = vmul.f32 %v88, 0.5
    %v90 = vadd.f32 %v89, 1e-05
    %v91 = vrsqrt.pop %v90
    %v92 = vmul.f32 %v80, %v91
    %v93 = vld [vmem:[#allocation4] sm:$0x1]
    %v95 = vlaneseq
    %v96 = vshrl.u32 %v95, 7
    %v97 = vsub.s32 0, %v96
    %v98 = vrot.slane %v93, %v97
    %v100 = vmul.f32 %v92, %v98
    %v101 = vld [vmem:[#allocation6] sm:$0x1]
    %v103 = vlaneseq
    %v104 = vshrl.u32 %v103, 7
    %v105 = vsub.s32 0, %v104
    %v106 = vrot.slane %v101, %v105
    %v108 = vadd.f32 %v100, %v106
    %v109 = vpack.c.bf16 %v108, %v108
    %v110 = vld [vmem:[%s3] sm:$0xff]
    %v111 = vld [vmem:[%s3 + $0x8] sm:$0xff]
    %v112 = vld [vmem:[%s3 + $0x10] sm:$0xff]
    %v113 = vld [vmem:[%s3 + $0x18] sm:$0xff]
    %v114 = vld [vmem:[%s3 + $0x20] sm:$0xff]
    %v115 = vld [vmem:[%s3 + $0x28] sm:$0xff]
    %v116 = vld [vmem:[%s3 + $0x30] sm:$0xff]
    %v117 = vld [vmem:[%s3 + $0x38] sm:$0xff]
    %v118 = vld [vmem:[#allocation7] sm:$0xff]
    %v120 = vlaneseq
    %v121 = vshrl.u32 %v120, 7
    %v122 = vsub.s32 0, %v121
    %v123 = vrot.slane %v118, %v122
    %v124 = vlaneseq
    %v125 = vshrl.u32 %v124, 7
    %v126 = vsub.s32 1, %v125
    %v127 = vrot.slane %v118, %v126
    %v128 = vlaneseq
    %v129 = vshrl.u32 %v128, 7
    %v130 = vsub.s32 2, %v129
    %v131 = vrot.slane %v118, %v130
    %v132 = vlaneseq
    %v133 = vshrl.u32 %v132, 7
    %v134 = vsub.s32 3, %v133
    %v135 = vrot.slane %v118, %v134
    %v136 = vlaneseq
    %v137 = vshrl.u32 %v136, 7
    %v138 = vsub.s32 4, %v137
    %v139 = vrot.slane %v118, %v138
    %v140 = vlaneseq
    %v141 = vshrl.u32 %v140, 7
    %v142 = vsub.s32 5, %v141
    %v143 = vrot.slane %v118, %v142
    %v144 = vlaneseq
    %v145 = vshrl.u32 %v144, 7
    %v146 = vsub.s32 6, %v145
    %v147 = vrot.slane %v118, %v146
    %v148 = vlaneseq
    %v149 = vshrl.u32 %v148, 7
    %v150 = vsub.s32 7, %v149
    %v151 = vrot.slane %v118, %v150
    %v168 = vunpack.c.l.b16 %v110
    %v169 = vunpack.c.h.b16 %v110
    %v170 = vunpack.c.l.b16 %v111
    %v171 = vunpack.c.h.b16 %v111
    %v172 = vunpack.c.l.b16 %v112
    %v173 = vunpack.c.h.b16 %v112
    %v174 = vunpack.c.l.b16 %v113
    %v175 = vunpack.c.h.b16 %v113
    %v176 = vunpack.c.l.b16 %v114
    %v177 = vunpack.c.h.b16 %v114
    %v178 = vunpack.c.l.b16 %v115
    %v179 = vunpack.c.h.b16 %v115
    %v180 = vunpack.c.l.b16 %v116
    %v181 = vunpack.c.h.b16 %v116
    %v182 = vunpack.c.l.b16 %v117
    %v183 = vunpack.c.h.b16 %v117
    %v184 = vpack.c.b16 %v176, %v168
    %v185 = vpack.c.b16 %v177, %v169
    %v186 = vpack.c.b16 %v178, %v170
    %v187 = vpack.c.b16 %v179, %v171
    %v188 = vpack.c.b16 %v180, %v172
    %v189 = vpack.c.b16 %v181, %v173
    %v190 = vpack.c.b16 %v182, %v174
    %v191 = vpack.c.b16 %v183, %v175
    %vm200 = vcmask 130048
    %v202 = vsel %vm200, %v109, 0
    %204 = vmatprep.subr.bf16.mxu0 %v185
    %205 = vmatpush1.bf16.msra.mxu0 %v184
    %206 = vmatprep.subr.bf16.mxu0 0
    %207 = vmatpush1.bf16.msra.mxu0 0
    %208 = vmatprep.subr.bf16.mxu0 0
    %209 = vmatpush1.bf16.msra.mxu0 0
    %210 = vmatprep.subr.bf16.mxu0 0
    %211 = vmatpush1.bf16.msra.mxu0 0
    %212 = vmatprep.subr.bf16.mxu0 0
    %213 = vmatpush1.bf16.msra.mxu0 0
    %214 = vmatprep.subr.bf16.mxu0 0
    %215 = vmatpush1.bf16.msra.mxu0 0
    %216 = vmatprep.subr.bf16.mxu0 0
    %217 = vmatpush1.bf16.msra.mxu0 0
    %218 = vmatprep.subr.bf16.mxu0 0
    %219 = vmatpush1.bf16.msra.mxu0 0
    %220 = vmatprep.subr.bf16.mxu0 0
    %221 = vmatpush1.bf16.msra.mxu0 0
    %222 = vmatprep.subr.bf16.mxu0 0
    %223 = vmatpush1.bf16.msra.mxu0 0
    %224 = vmatprep.subr.bf16.mxu0 0
    %225 = vmatpush1.bf16.msra.mxu0 0
    %226 = vmatprep.subr.bf16.mxu0 0
    %227 = vmatpush1.bf16.msra.mxu0 0
    %228 = vmatprep.subr.bf16.mxu0 0
    %229 = vmatpush1.bf16.msra.mxu0 0
    %230 = vmatprep.subr.bf16.mxu0 0
    %231 = vmatpush1.bf16.msra.mxu0 0
    %232 = vmatprep.subr.bf16.mxu0 0
    %233 = vmatpush1.bf16.msra.mxu0 0
    %234 = vmatprep.subr.bf16.mxu0 0
    %235 = vmatpush1.bf16.msra.mxu0 0
    %236 = vmatprep.mubr.bf16.mxu0 0
    %237 = vmatmul.mubr.bf16.gmra.mrb[0].mxu0 %v202
    %v238 = vpop.f32.mrb[0].mxu0
    %v239 = vadd.f32 %v123, %v238
    %v240 = vpop.f32.mrb[0].mxu0
    %v241 = vadd.f32 %v127, %v240
    %v242 = vpop.f32.mrb[0].mxu0
    %v243 = vpop.f32.mrb[0].mxu0
    %244 = vdwg.mxu0
    %245 = vmatprep.subr.bf16.mxu0 %v187
    %246 = vmatpush1.bf16.msra.mxu0 %v186
    %247 = vmatprep.subr.bf16.mxu0 0
    %248 = vmatpush1.bf16.msra.mxu0 0
    %249 = vmatprep.subr.bf16.mxu0 0
    %250 = vmatpush1.bf16.msra.mxu0 0
    %251 = vmatprep.subr.bf16.mxu0 0
    %252 = vmatpush1.bf16.msra.mxu0 0
    %253 = vmatprep.subr.bf16.mxu0 0
    %254 = vmatpush1.bf16.msra.mxu0 0
    %255 = vmatprep.subr.bf16.mxu0 0
    %256 = vmatpush1.bf16.msra.mxu0 0
    %257 = vmatprep.subr.bf16.mxu0 0
    %258 = vmatpush1.bf16.msra.mxu0 0
    %259 = vmatprep.subr.bf16.mxu0 0
    %260 = vmatpush1.bf16.msra.mxu0 0
    %261 = vmatprep.subr.bf16.mxu0 0
    %262 = vmatpush1.bf16.msra.mxu0 0
    %263 = vmatprep.subr.bf16.mxu0 0
    %264 = vmatpush1.bf16.msra.mxu0 0
    %265 = vmatprep.subr.bf16.mxu0 0
    %266 = vmatpush1.bf16.msra.mxu0 0
    %267 = vmatprep.subr.bf16.mxu0 0
    %268 = vmatpush1.bf16.msra.mxu0 0
    %269 = vmatprep.subr.bf16.mxu0 0
    %270 = vmatpush1.bf16.msra.mxu0 0
    %271 = vmatprep.subr.bf16.mxu0 0
    %272 = vmatpush1.bf16.msra.mxu0 0
    %273 = vmatprep.subr.bf16.mxu0 0
    %274 = vmatpush1.bf16.msra.mxu0 0
    %275 = vmatprep.subr.bf16.mxu0 0
    %276 = vmatpush1.bf16.msra.mxu0 0
    %277 = vmatprep.mubr.bf16.mxu0 0
    %278 = vmatmul.mubr.bf16.gmra.mrb[0].mxu0 %v202
    %v279 = vpop.f32.mrb[0].mxu0
    %v280 = vadd.f32 %v131, %v279
    %v281 = vpop.f32.mrb[0].mxu0
    %v282 = vadd.f32 %v135, %v281
    %v283 = vpop.f32.mrb[0].mxu0
    %v284 = vpop.f32.mrb[0].mxu0
    %285 = vdwg.mxu0
    %286 = vmatprep.subr.bf16.mxu0 %v189
    %287 = vmatpush1.bf16.msra.mxu0 %v188
    %288 = vmatprep.subr.bf16.mxu0 0
    %289 = vmatpush1.bf16.msra.mxu0 0
    %290 = vmatprep.subr.bf16.mxu0 0
    %291 = vmatpush1.bf16.msra.mxu0 0
    %292 = vmatprep.subr.bf16.mxu0 0
    %293 = vmatpush1.bf16.msra.mxu0 0
    %294 = vmatprep.subr.bf16.mxu0 0
    %295 = vmatpush1.bf16.msra.mxu0 0
    %296 = vmatprep.subr.bf16.mxu0 0
    %297 = vmatpush1.bf16.msra.mxu0 0
    %298 = vmatprep.subr.bf16.mxu0 0
    %299 = vmatpush1.bf16.msra.mxu0 0
    %300 = vmatprep.subr.bf16.mxu0 0
    %301 = vmatpush1.bf16.msra.mxu0 0
    %302 = vmatprep.subr.bf16.mxu0 0
    %303 = vmatpush1.bf16.msra.mxu0 0
    %304 = vmatprep.subr.bf16.mxu0 0
    %305 = vmatpush1.bf16.msra.mxu0 0
    %306 = vmatprep.subr.bf16.mxu0 0
    %307 = vmatpush1.bf16.msra.mxu0 0
    %308 = vmatprep.subr.bf16.mxu0 0
    %309 = vmatpush1.bf16.msra.mxu0 0
    %310 = vmatprep.subr.bf16.mxu0 0
    %311 = vmatpush1.bf16.msra.mxu0 0
    %312 = vmatprep.subr.bf16.mxu0 0
    %313 = vmatpush1.bf16.msra.mxu0 0
    %314 = vmatprep.subr.bf16.mxu0 0
    %315 = vmatpush1.bf16.msra.mxu0 0
    %316 = vmatprep.subr.bf16.mxu0 0
    %317 = vmatpush1.bf16.msra.mxu0 0
    %318 = vmatprep.mubr.bf16.mxu0 0
    %319 = vmatmul.mubr.bf16.gmra.mrb[0].mxu0 %v202
    %v320 = vpop.f32.mrb[0].mxu0
    %v321 = vadd.f32 %v139, %v320
    %v322 = vpop.f32.mrb[0].mxu0
    %v323 = vadd.f32 %v143, %v322
    %v324 = vpop.f32.mrb[0].mxu0
    %v325 = vpop.f32.mrb[0].mxu0
    %326 = vdwg.mxu0
    %327 = vmatprep.subr.bf16.mxu0 %v191
    %328 = vmatpush1.bf16.msra.mxu0 %v190
    %329 = vmatprep.subr.bf16.mxu0 0
    %330 = vmatpush1.bf16.msra.mxu0 0
    %331 = vmatprep.subr.bf16.mxu0 0
    %332 = vmatpush1.bf16.msra.mxu0 0
    %333 = vmatprep.subr.bf16.mxu0 0
    %334 = vmatpush1.bf16.msra.mxu0 0
    %335 = vmatprep.subr.bf16.mxu0 0
    %336 = vmatpush1.bf16.msra.mxu0 0
    %337 = vmatprep.subr.bf16.mxu0 0
    %338 = vmatpush1.bf16.msra.mxu0 0
    %339 = vmatprep.subr.bf16.mxu0 0
    %340 = vmatpush1.bf16.msra.mxu0 0
    %341 = vmatprep.subr.bf16.mxu0 0
    %342 = vmatpush1.bf16.msra.mxu0 0
    %343 = vmatprep.subr.bf16.mxu0 0
    %344 = vmatpush1.bf16.msra.mxu0 0
    %345 = vmatprep.subr.bf16.mxu0 0
    %346 = vmatpush1.bf16.msra.mxu0 0
    %347 = vmatprep.subr.bf16.mxu0 0
    %348 = vmatpush1.bf16.msra.mxu0 0
    %349 = vmatprep.subr.bf16.mxu0 0
    %350 = vmatpush1.bf16.msra.mxu0 0
    %351 = vmatprep.subr.bf16.mxu0 0
    %352 = vmatpush1.bf16.msra.mxu0 0
    %353 = vmatprep.subr.bf16.mxu0 0
    %354 = vmatpush1.bf16.msra.mxu0 0
    %355 = vmatprep.subr.bf16.mxu0 0
    %356 = vmatpush1.bf16.msra.mxu0 0
    %357 = vmatprep.subr.bf16.mxu0 0
    %358 = vmatpush1.bf16.msra.mxu0 0
    %359 = vmatprep.mubr.bf16.mxu0 0
    %360 = vmatmul.mubr.bf16.gmra.mrb[0].mxu0 %v202
    %v361 = vpop.f32.mrb[0].mxu0
    %v362 = vadd.f32 %v147, %v361
    %v363 = vpop.f32.mrb[0].mxu0
    %v364 = vadd.f32 %v151, %v363
    %v365 = vpop.f32.mrb[0].mxu0
    %v366 = vpop.f32.mrb[0].mxu0
    %367 = vdwg.mxu0
    %vm368 = vcmp.ge.f32.partialorder %v239, 0.0
    %vm369 = vcmp.ge.f32.partialorder %v241, 0.0
    %vm370 = vcmp.ge.f32.partialorder %v280, 0.0
    %vm371 = vcmp.ge.f32.partialorder %v282, 0.0
    %vm372 = vcmp.ge.f32.partialorder %v321, 0.0
    %vm373 = vcmp.ge.f32.partialorder %v323, 0.0
    %vm374 = vcmp.ge.f32.partialorder %v362, 0.0
    %vm375 = vcmp.ge.f32.partialorder %v364, 0.0
    %v376 = vmul.f32 %v239, 0.01
    %v377 = vmul.f32 %v241, 0.01
    %v378 = vmul.f32 %v280, 0.01
    %v379 = vmul.f32 %v282, 0.01
    %v380 = vmul.f32 %v321, 0.01
    %v381 = vmul.f32 %v323, 0.01
    %v382 = vmul.f32 %v362, 0.01
    %v383 = vmul.f32 %v364, 0.01
    %v384 = vsel %vm368, %v239, %v376
    %v385 = vsel %vm369, %v241, %v377
    %v386 = vsel %vm370, %v280, %v378
    %v387 = vsel %vm371, %v282, %v379
    %v388 = vsel %vm372, %v321, %v380
    %v389 = vsel %vm373, %v323, %v381
    %v390 = vsel %vm374, %v362, %v382
    %v391 = vsel %vm375, %v364, %v383
    %v400 = vcombine.low %v384, %v385
    %v401 = vcombine.low %v386, %v387
    %v403 = vunpack.c.l.s4 1983009808
    %v404 = vunpack.c.0.s8 %v403
    %v405 = vlaneseq
    %v406 = vshrl.u32 %v405, 7
    %v407 = vsub.s32 %v404, %v406
    %v408 = vrot.slane %v400, %v407
    %v410 = vunpack.c.l.s4 1983009808
    %v411 = vunpack.c.0.s8 %v410
    %v412 = vlaneseq
    %v413 = vshrl.u32 %v412, 7
    %v414 = vsub.s32 %v411, %v413
    %v415 = vrot.slane %v401, %v414
    %v416 = vcombine.low %v408, %v415
    %v417 = vcombine.low %v388, %v389
    %v418 = vcombine.low %v390, %v391
    %v420 = vunpack.c.l.s4 1983009808
    %v421 = vunpack.c.0.s8 %v420
    %v422 = vlaneseq
    %v423 = vshrl.u32 %v422, 7
    %v424 = vsub.s32 %v421, %v423
    %v425 = vrot.slane %v417, %v424
    %v427 = vunpack.c.l.s4 1983009808
    %v428 = vunpack.c.0.s8 %v427
    %v429 = vlaneseq
    %v430 = vshrl.u32 %v429, 7
    %v431 = vsub.s32 %v428, %v430
    %v432 = vrot.slane %v418, %v431
    %v433 = vcombine.low %v425, %v432
    %436 = vst [vmem:[%s5] sm:$0xff] %v416
    %437 = vst [vmem:[%s5 + $0x8] sm:$0xff] %v433
    %vm438 = vcmask 1041408
    %v439 = vsel %vm438, %v384, 0.0
    %v440 = vrot.slane %v439, 4
    %v441 = vadd.f32 %v439, %v440
    %v442 = vrot.slane %v441, 2
    %v443 = vadd.f32 %v441, %v442
    %v444 = vrot.slane %v443, 1
    %v445 = vadd.f32 %v443, %v444
    %v446 = vsel %vm438, %v385, 0.0
    %v447 = vrot.slane %v446, 4
    %v448 = vadd.f32 %v446, %v447
    %v449 = vrot.slane %v448, 2
    %v450 = vadd.f32 %v448, %v449
    %v451 = vrot.slane %v450, 1
    %v452 = vadd.f32 %v450, %v451
    %v453 = vsel %vm438, %v386, 0.0
    %v454 = vrot.slane %v453, 4
    %v455 = vadd.f32 %v453, %v454
    %v456 = vrot.slane %v455, 2
    %v457 = vadd.f32 %v455, %v456
    %v458 = vrot.slane %v457, 1
    %v459 = vadd.f32 %v457, %v458
    %v460 = vsel %vm438, %v387, 0.0
    %v461 = vrot.slane %v460, 4
    %v462 = vadd.f32 %v460, %v461
    %v463 = vrot.slane %v462, 2
    %v464 = vadd.f32 %v462, %v463
    %v465 = vrot.slane %v464, 1
    %v466 = vadd.f32 %v464, %v465
    %v467 = vsel %vm438, %v388, 0.0
    %v468 = vrot.slane %v467, 4
    %v469 = vadd.f32 %v467, %v468
    %v470 = vrot.slane %v469, 2
    %v471 = vadd.f32 %v469, %v470
    %v472 = vrot.slane %v471, 1
    %v473 = vadd.f32 %v471, %v472
    %v474 = vsel %vm438, %v389, 0.0
    %v475 = vrot.slane %v474, 4
    %v476 = vadd.f32 %v474, %v475
    %v477 = vrot.slane %v476, 2
    %v478 = vadd.f32 %v476, %v477
    %v479 = vrot.slane %v478, 1
    %v480 = vadd.f32 %v478, %v479
    %v481 = vsel %vm438, %v390, 0.0
    %v482 = vrot.slane %v481, 4
    %v483 = vadd.f32 %v481, %v482
    %v484 = vrot.slane %v483, 2
    %v485 = vadd.f32 %v483, %v484
    %v486 = vrot.slane %v485, 1
    %v487 = vadd.f32 %v485, %v486
    %v488 = vsel %vm438, %v391, 0.0
    %v489 = vrot.slane %v488, 4
    %v490 = vadd.f32 %v488, %v489
    %v491 = vrot.slane %v490, 2
    %v492 = vadd.f32 %v490, %v491
    %v493 = vrot.slane %v492, 1
    %v494 = vadd.f32 %v492, %v493
    %v503 = vcombine.low %v445, %v452
    %v504 = vcombine.low %v459, %v466
    %v505 = vcombine.low %v473, %v480
    %v506 = vcombine.low %v487, %v494
    %v508 = vunpack.c.l.s4 1966171168
    %v509 = vunpack.c.0.s8 %v508
    %v510 = vlaneseq
    %v511 = vshrl.u32 %v510, 7
    %v512 = vsub.s32 %v509, %v511
    %v513 = vrot.slane %v503, %v512
    %v515 = vunpack.c.l.s4 1966171168
    %v516 = vunpack.c.0.s8 %v515
    %v517 = vlaneseq
    %v518 = vshrl.u32 %v517, 7
    %v519 = vsub.s32 %v516, %v518
    %v520 = vrot.slane %v504, %v519
    %v522 = vunpack.c.l.s4 1966171168
    %v523 = vunpack.c.0.s8 %v522
    %v524 = vlaneseq
    %v525 = vshrl.u32 %v524, 7
    %v526 = vsub.s32 %v523, %v525
    %v527 = vrot.slane %v505, %v526
    %v529 = vunpack.c.l.s4 1966171168
    %v530 = vunpack.c.0.s8 %v529
    %v531 = vlaneseq
    %v532 = vshrl.u32 %v531, 7
    %v533 = vsub.s32 %v530, %v532
    %v534 = vrot.slane %v506, %v533
    %v535 = vcombine.low %v513, %v520
    %v536 = vcombine.low %v527, %v534
    %v538 = vunpack.c.l.s4 1966171168
    %v539 = vunpack.c.0.s8 %v538
    %v540 = vlaneseq
    %v541 = vshrl.u32 %v540, 7
    %v542 = vsub.s32 %v539, %v541
    %v543 = vrot.slane %v535, %v542
    %v545 = vunpack.c.l.s4 1966171168
    %v546 = vunpack.c.0.s8 %v545
    %v547 = vlaneseq
    %v548 = vshrl.u32 %v547, 7
    %v549 = vsub.s32 %v546, %v548
    %v550 = vrot.slane %v536, %v549
    %v551 = vcombine.low %v543, %v550
    %553 = vst [vmem:[%s6] ss:$2 sm:$0xff] %v551
    %v554 = vmul.f32 %v384, %v384
    %v555 = vmul.f32 %v385, %v385
    %v556 = vmul.f32 %v386, %v386
    %v557 = vmul.f32 %v387, %v387
    %v558 = vmul.f32 %v388, %v388
    %v559 = vmul.f32 %v389, %v389
    %v560 = vmul.f32 %v390, %v390
    %v561 = vmul.f32 %v391, %v391
    %v562 = vsel %vm438, %v554, 0.0
    %v563 = vrot.slane %v562, 4
    %v564 = vadd.f32 %v562, %v563
    %v565 = vrot.slane %v564, 2
    %v566 = vadd.f32 %v564, %v565
    %v567 = vrot.slane %v566, 1
    %v568 = vadd.f32 %v566, %v567
    %v569 = vsel %vm438, %v555, 0.0
    %v570 = vrot.slane %v569, 4
    %v571 = vadd.f32 %v569, %v570
    %v572 = vrot.slane %v571, 2
    %v573 = vadd.f32 %v571, %v572
    %v574 = vrot.slane %v573, 1
    %v575 = vadd.f32 %v573, %v574
    %v576 = vsel %vm438, %v556, 0.0
    %v577 = vrot.slane %v576, 4
    %v578 = vadd.f32 %v576, %v577
    %v579 = vrot.slane %v578, 2
    %v580 = vadd.f32 %v578, %v579
    %v581 = vrot.slane %v580, 1
    %v582 = vadd.f32 %v580, %v581
    %v583 = vsel %vm438, %v557, 0.0
    %v584 = vrot.slane %v583, 4
    %v585 = vadd.f32 %v583, %v584
    %v586 = vrot.slane %v585, 2
    %v587 = vadd.f32 %v585, %v586
    %v588 = vrot.slane %v587, 1
    %v589 = vadd.f32 %v587, %v588
    %v590 = vsel %vm438, %v558, 0.0
    %v591 = vrot.slane %v590, 4
    %v592 = vadd.f32 %v590, %v591
    %v593 = vrot.slane %v592, 2
    %v594 = vadd.f32 %v592, %v593
    %v595 = vrot.slane %v594, 1
    %v596 = vadd.f32 %v594, %v595
    %v597 = vsel %vm438, %v559, 0.0
    %v598 = vrot.slane %v597, 4
    %v599 = vadd.f32 %v597, %v598
    %v600 = vrot.slane %v599, 2
    %v601 = vadd.f32 %v599, %v600
    %v602 = vrot.slane %v601, 1
    %v603 = vadd.f32 %v601, %v602
    %v604 = vsel %vm438, %v560, 0.0
    %v605 = vrot.slane %v604, 4
    %v606 = vadd.f32 %v604, %v605
    %v607 = vrot.slane %v606, 2
    %v608 = vadd.f32 %v606, %v607
    %v609 = vrot.slane %v608, 1
    %v610 = vadd.f32 %v608, %v609
    %v611 = vsel %vm438, %v561, 0.0
    %v612 = vrot.slane %v611, 4
    %v613 = vadd.f32 %v611, %v612
    %v614 = vrot.slane %v613, 2
    %v615 = vadd.f32 %v613, %v614
    %v616 = vrot.slane %v615, 1
    %v617 = vadd.f32 %v615, %v616
    %v626 = vcombine.low %v568, %v575
    %v627 = vcombine.low %v582, %v589
    %v628 = vcombine.low %v596, %v603
    %v629 = vcombine.low %v610, %v617
    %v631 = vunpack.c.l.s4 1966171168
    %v632 = vunpack.c.0.s8 %v631
    %v633 = vlaneseq
    %v634 = vshrl.u32 %v633, 7
    %v635 = vsub.s32 %v632, %v634
    %v636 = vrot.slane %v626, %v635
    %v638 = vunpack.c.l.s4 1966171168
    %v639 = vunpack.c.0.s8 %v638
    %v640 = vlaneseq
    %v641 = vshrl.u32 %v640, 7
    %v642 = vsub.s32 %v639, %v641
    %v643 = vrot.slane %v627, %v642
    %v645 = vunpack.c.l.s4 1966171168
    %v646 = vunpack.c.0.s8 %v645
    %v647 = vlaneseq
    %v648 = vshrl.u32 %v647, 7
    %v649 = vsub.s32 %v646, %v648
    %v650 = vrot.slane %v628, %v649
    %v652 = vunpack.c.l.s4 1966171168
    %v653 = vunpack.c.0.s8 %v652
    %v654 = vlaneseq
    %v655 = vshrl.u32 %v654, 7
    %v656 = vsub.s32 %v653, %v655
    %v657 = vrot.slane %v629, %v656
    %v658 = vcombine.low %v636, %v643
    %v659 = vcombine.low %v650, %v657
    %v661 = vunpack.c.l.s4 1966171168
    %v662 = vunpack.c.0.s8 %v661
    %v663 = vlaneseq
    %v664 = vshrl.u32 %v663, 7
    %v665 = vsub.s32 %v662, %v664
    %v666 = vrot.slane %v658, %v665
    %v668 = vunpack.c.l.s4 1966171168
    %v669 = vunpack.c.0.s8 %v668
    %v670 = vlaneseq
    %v671 = vshrl.u32 %v670, 7
    %v672 = vsub.s32 %v669, %v671
    %v673 = vrot.slane %v659, %v672
    %v674 = vcombine.low %v666, %v673
    %s676 = scalar_lea.vmem %s6, 1
    %677 = vst [vmem:[%s676] ss:$2 sm:$0xff] %v674
    // Predicated region
    $region38: #{frame_generator_forward.5} parent=1 // pred_check
      _
    $region39: #{frame_generator_forward.5} parent=1 // pred_check_branch
      %679 = sbr.rel (0) target = $region41
    $region40: #{frame_generator_forward.5} parent=1 // pred_region
      _
    $region41: #{frame_generator_forward.5} parent=1 // pred_fallthru
      _
    // Predicated region
    $region42: #{frame_generator_forward.5} parent=1 // pred_check
      _
    $region43: #{frame_generator_forward.5} parent=1 // pred_check_branch
      %681 = sbr.rel (0) target = $region45
    $region44: #{frame_generator_forward.5} parent=1 // pred_region
      _
    $region45: #{frame_generator_forward.5} parent=1 // pred_fallthru
      _
    // Predicated region
    $region46: #{frame_generator_forward.5} parent=1 // pred_check
      _
    $region47: #{frame_generator_forward.5} parent=1 // pred_check_branch
      %683 = sbr.rel (0) target = $region49
    $region48: #{frame_generator_forward.5} parent=1 // pred_region
      _
    $region49: #{frame_generator_forward.5} parent=1 // pred_fallthru
      _
    // Predicated region
    $region50: #{frame_generator_forward.5} parent=1 // pred_check
      _
    $region51: #{frame_generator_forward.5} parent=1 // pred_check_branch
      %685 = sbr.rel (0) target = $region53
    $region52: #{frame_generator_forward.5} parent=1 // pred_region
      _
    $region53: #{frame_generator_forward.5} parent=1 // pred_fallthru
      _
    %686 = vsyncpa [#allocation3], 1
    %687 = vsyncpa [#allocation5], 1
    %688 = vsyncpa [#allocation8], 1

// kernel: squeeze.10
$region0: #{squeeze.10}
  %s0 = inlined_call_operand.vmem [shape: f32[128], index: 0, kind: input, shape index: {}]
  %s1 = inlined_call_operand.vmem [shape: f32[4,32], index: 1, kind: output, shape index: {}]
  $region1: #{squeeze.10} parent=0
    #allocation0 [shape = 'u8[4096]{0}', space=vmem, size = 0x1000, scoped, tag = 'scoped mem for output reshape']
    #allocation1 [shape = 'u8[4096]{0}', space=vmem, size = 0x1000, scoped, tag = 'scoped mem for input reshape']
    %s3 = sshllo.u32 0, 1
    %v4 = vld [vmem:[%s0] sm:%s3]
    %5 = vst [vmem:[#allocation1] sm:%s3] %v4
    %v6 = vld [vmem:[#allocation1] sm:$0x1]
    %vm7 = vcmask 261120
    %8 = vst.msk [vmem:[#allocation0] sm:$0x1] %vm7, %v6
    %v9 = vld [vmem:[#allocation1] sm:$0x1]
    %10 = vrot.lane.b32.xlu0 %v9, 96
    %v11 = vpop.permute.xlu0 %10
    %vm12 = vcmask 261120
    %s13 = scalar_lea.vmem [#allocation0], 1
    %14 = vst.msk [vmem:[%s13] sm:$0x1] %vm12, %v11
    %v15 = vld [vmem:[#allocation1] sm:$0x1]
    %16 = vrot.lane.b32.xlu0 %v15, 64
    %v17 = vpop.permute.xlu0 %16
    %vm18 = vcmask 261120
    %s19 = scalar_lea.vmem [#allocation0], 2
    %20 = vst.msk [vmem:[%s19] sm:$0x1] %vm18, %v17
    %v21 = vld [vmem:[#allocation1] sm:$0x1]
    %22 = vrot.lane.b32.xlu0 %v21, 32
    %v23 = vpop.permute.xlu0 %22
    %vm24 = vcmask 261120
    %s25 = scalar_lea.vmem [#allocation0], 3
    %26 = vst.msk [vmem:[%s25] sm:$0x1] %vm24, %v23
    %s28 = sshllo.u32 0, 4
    %v30 = vld [vmem:[#allocation0] sm:%s28]
    %s31 = sshllo.u32 0, 4
    %32 = vst [vmem:[%s1] sm:%s31] %v30

// kernel: tile.28
$region0: #{tile.28}
  #allocation0 [shape = 's32[1]{0}', space=sflag, size = 0x4, scoped, tag = 'scoped memory for tile.28']
  %s0 = inlined_call_operand.vmem [shape: f32[32], index: 0, kind: input, shape index: {}]
  %s1 = inlined_call_operand.vmem [shape: f32[9,32], index: 1, kind: output, shape index: {}]
  // Predicated region
  $region2: #{tile.28} parent=0 // pred_check
    _
  $region3: #{tile.28} parent=0 // pred_check_branch
    %3 = sbr.rel (0) target = $region5
  $region4: #{tile.28} parent=0 // pred_region
    _
  $region5: #{tile.28} parent=0 // pred_fallthru
    _
  %v4 = vld [vmem:[%s0] ss:$0 sm:$0xff]
  %5 = vst [vmem:[%s1] sm:$0xff] %v4
  %s6 = scalar_lea.vmem %s1, 8
  %7 = vst [vmem:[%s6] sm:$0xff] %v4

// kernel: tile.29
$region0: #{tile.29}
  %s0 = inlined_call_operand.vmem [shape: f32[9,32], index: 0, kind: input, shape index: {}]
  %s1 = inlined_call_operand.vmem [shape: f32[1,288], index: 1, kind: output, shape index: {}]
  $region1: #{tile.29} parent=0
    #allocation0 [shape = 'u8[12288]{0}', space=vmem, size = 0x3000, scoped, tag = 'scoped mem for output reshape']
    %v2 = vld [vmem:[%s0] ss:$4 sm:$0x7]
    %vm3 = vcmask 261120
    %4 = vst.msk [vmem:[#allocation0] ss:$8 sm:$0x7] %vm3, %v2
    %s5 = scalar_lea.vmem %s0, 3
    %s6 = smov 3
    %v7 = vld [vmem:[%s5] ss:$4 sm:%s6]
    %8 = vrot.lane.b32.xlu0 %v7, 96
    %v9 = vpop.permute.xlu0 %8
    %vm10 = vcmask 1048320
    %11 = vst.msk [vmem:[#allocation0] ss:$8 sm:$0x3] %vm10, %v9
    %s12 = scalar_lea.vmem %s0, 2
    %s13 = smov 3
    %v14 = vld [vmem:[%s12] ss:$4 sm:%s13]
    %15 = vrot.lane.b32.xlu0 %v14, 64
    %v16 = vpop.permute.xlu0 %15
    %vm17 = vcmask 785920
    %18 = vst.msk [vmem:[#allocation0] ss:$8 sm:$0x3] %vm17, %v16
    %s19 = scalar_lea.vmem %s0, 1
    %s20 = smov 3
    %v21 = vld [vmem:[%s19] ss:$4 sm:%s20]
    %22 = vrot.lane.b32.xlu0 %v21, 32
    %v23 = vpop.permute.xlu0 %22
    %vm24 = vcmask 523520
    %25 = vst.msk [vmem:[#allocation0] ss:$8 sm:$0x3] %vm24, %v23
    %s27 = sshllo.u32 0, 1
    %v29 = vld [vmem:[#allocation0] sm:%s27]
    %s30 = sshllo.u32 0, 1
    %31 = vst [vmem:[%s1] sm:%s30] %v29
    %s32 = scalar_lea.vmem [#allocation0], 8
    %v33 = vld [vmem:[%s32] sm:%s27]
    %s34 = sshllo.u32 0, 1
    %s35 = scalar_lea.vmem %s1, 1
    %36 = vst [vmem:[%s35] sm:%s34] %v33
    %s37 = scalar_lea.vmem [#allocation0], 16
    %v38 = vld [vmem:[%s37] sm:%s27]
    %s39 = sshllo.u32 0, 1
    %s40 = smul.addr 1, 2
    %s41 = scalar_lea.vmem %s1, %s40
    %42 = vst [vmem:[%s41] sm:%s39] %v38

// kernel: frame_generator_forward.6
$region0: #{frame_generator_forward.6}
  #allocation0 [shape = 'u32[]', space=smem, size = 0x4, offset = 0x4, fixed_abs, tag = 'smem constant byte address 0x4 - core index']
  #allocation1 [shape = 'u32[144,128]{1,0:T(1,128)}', space=vmem, size = 0x12000, scoped, tag = 'internal scratch']
  %s0 = inlined_call_operand.vmem [shape: bf16[32,576], index: 0, kind: input, shape index: {}]
  %s1 = inlined_call_operand.vmem [shape: f32[1,576], index: 1, kind: input, shape index: {}]
  %s2 = inlined_call_operand.hbm [shape: bf16[576,128], index: 2, kind: input, shape index: {}]
  %s3 = inlined_call_operand.hbm [shape: f32[1,128], index: 3, kind: input, shape index: {}]
  %s4 = inlined_call_operand.vmem [shape: f32[32,128], index: 4, kind: output, shape index: {0}]
  %s5 = inlined_call_operand.vmem [shape: f32[2,128], index: 5, kind: output, shape index: {1}]
  %6 = xla_tuple %s4, %s5
  %s7 = sld [smem:[#allocation0]]
  $region42: #{frame_generator_forward.6} parent=0
    _
  %s9 = ssub.s32 1, %s7
  %s10 = scalar_select 0, %s9, %s7
  $region1: #{frame_generator_forward.6} parent=0
    #allocation2 [shape = 'u8[147456]{0}', space=vmem, size = 0x24000, scoped, tag = 'input window, operand 2, single buffered']
    #allocation3 [shape = 's32[1]{0}', space=sflag, size = 0x4, scoped, tag = 'scoped memory for frame_generator_forward.6']
    #allocation4 [shape = 'u8[512]{0}', space=vmem, size = 0x400, scoped, tag = 'input window, operand 3, single buffered']
    #allocation5 [shape = 's32[1]{0}', space=sflag, size = 0x4, scoped, tag = 'scoped memory for frame_generator_forward.6']
    %11 = vsyncpa [#allocation3], 0
    %12 = vsyncpa [#allocation5], 0
    // Predicated region
    $region2: #{frame_generator_forward.6} parent=1 // pred_check
      _
    $region3: #{frame_generator_forward.6} parent=1 // pred_check_branch
      %14 = sbr.rel (0) target = $region5
    $region4: #{frame_generator_forward.6} parent=1 // pred_region
      _
    $region5: #{frame_generator_forward.6} parent=1 // pred_fallthru
      _
    // Predicated region
    $region6: #{frame_generator_forward.6} parent=1 // pred_check
      _
    $region7: #{frame_generator_forward.6} parent=1 // pred_check_branch
      %16 = sbr.rel (0) target = $region9
    $region8: #{frame_generator_forward.6} parent=1 // pred_region
      _
    $region9: #{frame_generator_forward.6} parent=1 // pred_fallthru
      _
    // Predicated region
    $region10: #{frame_generator_forward.6} parent=1 // pred_check
      _
    $region11: #{frame_generator_forward.6} parent=1 // pred_check_branch
      %18 = sbr.rel (0) target = $region13
    $region12: #{frame_generator_forward.6} parent=1 // pred_region
      %s20 = ssub.s32 4608, 4608
      %21 = vsyncadd [#allocation3], %s20
      %s22 = sshll.u32 [#allocation2], 4
      %s23 = int_to_ptr.vmem [resolvable:$true] %s22
      %28 = dma.hbm_to_vmem [thread:$0]  %s2, 4608, %s23, [#allocation3], 64, 64, 4
    $region13: #{frame_generator_forward.6} parent=1 // pred_fallthru
      _
    // Predicated region
    $region14: #{frame_generator_forward.6} parent=1 // pred_check
      _
    $region15: #{frame_generator_forward.6} parent=1 // pred_check_branch
      %30 = sbr.rel (0) target = $region17
    $region16: #{frame_generator_forward.6} parent=1 // pred_region
      %s32 = ssub.s32 16, 16
      %33 = vsyncadd [#allocation5], %s32
      %s35 = sshll.u32 [#allocation4], 4
      %s36 = int_to_ptr.vmem [resolvable:$true] %s35
      %38 = dma.hbm_to_vmem [thread:$0]  %s3, 16, %s36, [#allocation5]
    $region17: #{frame_generator_forward.6} parent=1 // pred_fallthru
      _
    // Predicated region
    $region18: #{frame_generator_forward.6} parent=1 // pred_check
      _
    $region19: #{frame_generator_forward.6} parent=1 // pred_check_branch
      %40 = sbr.rel (0) target = $region21
    $region20: #{frame_generator_forward.6} parent=1 // pred_region
      %41 = dma.done [#allocation3], 4608
    $region21: #{frame_generator_forward.6} parent=1 // pred_fallthru
      _
    // Predicated region
    $region22: #{frame_generator_forward.6} parent=1 // pred_check
      _
    $region23: #{frame_generator_forward.6} parent=1 // pred_check_branch
      %43 = sbr.rel (0) target = $region25
    $region24: #{frame_generator_forward.6} parent=1 // pred_region
      %44 = dma.done [#allocation5], 16
    $region25: #{frame_generator_forward.6} parent=1 // pred_fallthru
      _
    %v46 = vld [vmem:[%s0] sm:$0xff]
    %v47 = vld [vmem:[%s0 + $0x8] sm:$0xff]
    %v48 = vld [vmem:[%s0 + $0x10] sm:$0xf]
    %v49 = vld [vmem:[%s0 + $0x14] sm:$0xff]
    %v50 = vld [vmem:[%s0 + $0x1c] sm:$0xff]
    %v51 = vld [vmem:[%s0 + $0x24] sm:$0xf]
    %v52 = vld [vmem:[%s0 + $0x28] sm:$0xff]
    %v53 = vld [vmem:[%s0 + $0x30] sm:$0xff]
    %v54 = vld [vmem:[%s0 + $0x38] sm:$0xf]
    %v55 = vld [vmem:[%s0 + $0x3c] sm:$0xff]
    %v56 = vld [vmem:[%s0 + $0x44] sm:$0xff]
    %v57 = vld [vmem:[%s0 + $0x4c] sm:$0xf]
    %v58 = vld [vmem:[%s1] sm:$0x1f]
    %v59 = vunpack.c.l.bf16 %v46
    %v60 = vunpack.c.h.bf16 %v46
    %v61 = vunpack.c.l.bf16 %v47
    %v62 = vunpack.c.h.bf16 %v47
    %v63 = vunpack.c.l.bf16 %v48
    %v64 = vunpack.c.l.bf16 %v49
    %v65 = vunpack.c.h.bf16 %v49
    %v66 = vunpack.c.l.bf16 %v50
    %v67 = vunpack.c.h.bf16 %v50
    %v68 = vunpack.c.l.bf16 %v51
    %v69 = vunpack.c.l.bf16 %v52
    %v70 = vunpack.c.h.bf16 %v52
    %v71 = vunpack.c.l.bf16 %v53
    %v72 = vunpack.c.h.bf16 %v53
    %v73 = vunpack.c.l.bf16 %v54
    %v74 = vunpack.c.l.bf16 %v55
    %v75 = vunpack.c.h.bf16 %v55
    %v76 = vunpack.c.l.bf16 %v56
    %v77 = vunpack.c.h.bf16 %v56
    %v78 = vunpack.c.l.bf16 %v57
    %v80 = vlaneseq
    %v81 = vshrl.u32 %v80, 7
    %v82 = vsub.s32 0, %v81
    %v83 = vrot.slane %v58, %v82
    %v84 = vlaneseq
    %v85 = vshrl.u32 %v84, 7
    %v86 = vsub.s32 1, %v85
    %v87 = vrot.slane %v58, %v86
    %v88 = vlaneseq
    %v89 = vshrl.u32 %v88, 7
    %v90 = vsub.s32 2, %v89
    %v91 = vrot.slane %v58, %v90
    %v92 = vlaneseq
    %v93 = vshrl.u32 %v92, 7
    %v94 = vsub.s32 3, %v93
    %v95 = vrot.slane %v58, %v94
    %v96 = vlaneseq
    %v97 = vshrl.u32 %v96, 7
    %v98 = vsub.s32 4, %v97
    %v99 = vrot.slane %v58, %v98
    %v105 = vmul.f32 %v59, %v83
    %v106 = vmul.f32 %v60, %v87
    %v107 = vmul.f32 %v61, %v91
    %v108 = vmul.f32 %v62, %v95
    %v109 = vmul.f32 %v63, %v99
    %v110 = vmul.f32 %v64, %v83
    %v111 = vmul.f32 %v65, %v87
    %v112 = vmul.f32 %v66, %v91
    %v113 = vmul.f32 %v67, %v95
    %v114 = vmul.f32 %v68, %v99
    %v115 = vmul.f32 %v69, %v83
    %v116 = vmul.f32 %v70, %v87
    %v117 = vmul.f32 %v71, %v91
    %v118 = vmul.f32 %v72, %v95
    %v119 = vmul.f32 %v73, %v99
    %v120 = vmul.f32 %v74, %v83
    %v121 = vmul.f32 %v75, %v87
    %v122 = vmul.f32 %v76, %v91
    %v123 = vmul.f32 %v77, %v95
    %v124 = vmul.f32 %v78, %v99
    %v125 = vpack.c.bf16 %v110, %v105
    %v126 = vpack.c.bf16 %v111, %v106
    %v127 = vpack.c.bf16 %v112, %v107
    %v128 = vpack.c.bf16 %v113, %v108
    %v129 = vpack.c.bf16 %v114, %v109
    %v130 = vpack.c.bf16 %v120, %v115
    %v131 = vpack.c.bf16 %v121, %v116
    %v132 = vpack.c.bf16 %v122, %v117
    %v133 = vpack.c.bf16 %v123, %v118
    %v134 = vpack.c.bf16 %v124, %v119
    %v135 = vld [vmem:[#allocation2] sm:$0xf]
    %v136 = vld [vmem:[#allocation2 + $0x4] sm:$0xf]
    %v137 = vld [vmem:[#allocation2 + $0x8] sm:$0xf]
    %v138 = vld [vmem:[#allocation2 + $0xc] sm:$0xf]
    %v139 = vld [vmem:[#allocation2 + $0x10] sm:$0xf]
    %v140 = vld [vmem:[#allocation2 + $0x14] sm:$0xf]
    %v141 = vld [vmem:[#allocation2 + $0x18] sm:$0xf]
    %v142 = vld [vmem:[#allocation2 + $0x1c] sm:$0xf]
    %v143 = vld [vmem:[#allocation2 + $0x20] sm:$0xf]
    %v144 = vld [vmem:[#allocation2 + $0x24] sm:$0xf]
    %v145 = vld [vmem:[#allocation2 + $0x28] sm:$0xf]
    %v146 = vld [vmem:[#allocation2 + $0x2c] sm:$0xf]
    %v147 = vld [vmem:[#allocation2 + $0x30] sm:$0xf]
    %v148 = vld [vmem:[#allocation2 + $0x34] sm:$0xf]
    %v149 = vld [vmem:[#allocation2 + $0x38] sm:$0xf]
    %v150 = vld [vmem:[#allocation2 + $0x3c] sm:$0xf]
    %v151 = vld [vmem:[#allocation2 + $0x40] sm:$0xf]
    %v152 = vld [vmem:[#allocation2 + $0x44] sm:$0xf]
    %v153 = vld [vmem:[#allocation2 + $0x48] sm:$0xf]
    %v154 = vld [vmem:[#allocation2 + $0x4c] sm:$0xf]
    %v155 = vld [vmem:[#allocation2 + $0x50] sm:$0xf]
    %v156 = vld [vmem:[#allocation2 + $0x54] sm:$0xf]
    %v157 = vld [vmem:[#allocation2 + $0x58] sm:$0xf]
    %v158 = vld [vmem:[#allocation2 + $0x5c] sm:$0xf]
    %v159 = vld [vmem:[#allocation2 + $0x60] sm:$0xf]
    %v160 = vld [vmem:[#allocation2 + $0x64] sm:$0xf]
    %v161 = vld [vmem:[#allocation2 + $0x68] sm:$0xf]
    %v162 = vld [vmem:[#allocation2 + $0x6c] sm:$0xf]
    %v163 = vld [vmem:[#allocation2 + $0x70] sm:$0xf]
    %v164 = vld [vmem:[#allocation2 + $0x74] sm:$0xf]
    %v165 = vld [vmem:[#allocation2 + $0x78] sm:$0xf]
    %v166 = vld [vmem:[#allocation2 + $0x7c] sm:$0xf]
    %v167 = vld [vmem:[#allocation2 + $0x80] sm:$0xf]
    %v168 = vld [vmem:[#allocation2 + $0x84] sm:$0xf]
    %v169 = vld [vmem:[#allocation2 + $0x88] sm:$0xf]
    %v170 = vld [vmem:[#allocation2 + $0x8c] sm:$0xf]
    %v171 = vld [vmem:[#allocation2 + $0x90] sm:$0xf]
    %v172 = vld [vmem:[#allocation2 + $0x94] sm:$0xf]
    %v173 = vld [vmem:[#allocation2 + $0x98] sm:$0xf]
    %v174 = vld [vmem:[#allocation2 + $0x9c] sm:$0xf]
    %v175 = vld [vmem:[#allocation2 + $0xa0] sm:$0xf]
    %v176 = vld [vmem:[#allocation2 + $0xa4] sm:$0xf]
    %v177 = vld [vmem:[#allocation2 + $0xa8] sm:$0xf]
    %v178 = vld [vmem:[#allocation2 + $0xac] sm:$0xf]
    %v179 = vld [vmem:[#allocation2 + $0xb0] sm:$0xf]
    %v180 = vld [vmem:[#allocation2 + $0xb4] sm:$0xf]
    %v181 = vld [vmem:[#allocation2 + $0xb8] sm:$0xf]
    %v182 = vld [vmem:[#allocation2 + $0xbc] sm:$0xf]
    %v183 = vld [vmem:[#allocation2 + $0xc0] sm:$0xf]
    %v184 = vld [vmem:[#allocation2 + $0xc4] sm:$0xf]
    %v185 = vld [vmem:[#allocation2 + $0xc8] sm:$0xf]
    %v186 = vld [vmem:[#allocation2 + $0xcc] sm:$0xf]
    %v187 = vld [vmem:[#allocation2 + $0xd0] sm:$0xf]
    %v188 = vld [vmem:[#allocation2 + $0xd4] sm:$0xf]
    %v189 = vld [vmem:[#allocation2 + $0xd8] sm:$0xf]
    %v190 = vld [vmem:[#allocation2 + $0xdc] sm:$0xf]
    %v191 = vld [vmem:[#allocation2 + $0xe0] sm:$0xf]
    %v192 = vld [vmem:[#allocation2 + $0xe4] sm:$0xf]
    %v193 = vld [vmem:[#allocation2 + $0xe8] sm:$0xf]
    %v194 = vld [vmem:[#allocation2 + $0xec] sm:$0xf]
    %v195 = vld [vmem:[#allocation2 + $0xf0] sm:$0xf]
    %v196 = vld [vmem:[#allocation2 + $0xf4] sm:$0xf]
    %v197 = vld [vmem:[#allocation2 + $0xf8] sm:$0xf]
    %v198 = vld [vmem:[#allocation2 + $0xfc] sm:$0xf]
    %v199 = vld [vmem:[#allocation2 + $0x100] sm:$0xf]
    %v200 = vld [vmem:[#allocation2 + $0x104] sm:$0xf]
    %v201 = vld [vmem:[#allocation2 + $0x108] sm:$0xf]
    %v202 = vld [vmem:[#allocation2 + $0x10c] sm:$0xf]
    %v203 = vld [vmem:[#allocation2 + $0x110] sm:$0xf]
    %v204 = vld [vmem:[#allocation2 + $0x114] sm:$0xf]
    %v205 = vld [vmem:[#allocation2 + $0x118] sm:$0xf]
    %v206 = vld [vmem:[#allocation2 + $0x11c] sm:$0xf]
    %v207 = vld [vmem:[#allocation4] sm:$0x1]
    %v209 = vlaneseq
    %v210 = vshrl.u32 %v209, 7
    %v211 = vsub.s32 0, %v210
    %v212 = vrot.slane %v207, %v211
    %v286 = vunpack.c.l.b16 %v135
    %v287 = vunpack.c.l.b16 %v136
    %v288 = vunpack.c.l.b16 %v137
    %v289 = vunpack.c.l.b16 %v138
    %v290 = vunpack.c.l.b16 %v139
    %v291 = vunpack.c.l.b16 %v140
    %v292 = vunpack.c.l.b16 %v141
    %v293 = vunpack.c.l.b16 %v142
    %v294 = vunpack.c.l.b16 %v143
    %v295 = vunpack.c.l.b16 %v144
    %v296 = vunpack.c.l.b16 %v145
    %v297 = vunpack.c.l.b16 %v146
    %v298 = vunpack.c.l.b16 %v147
    %v299 = vunpack.c.l.b16 %v148
    %v300 = vunpack.c.l.b16 %v149
    %v301 = vunpack.c.l.b16 %v150
    %v302 = vunpack.c.l.b16 %v151
    %v303 = vunpack.c.l.b16 %v152
    %v304 = vunpack.c.l.b16 %v153
    %v305 = vunpack.c.l.b16 %v154
    %v306 = vunpack.c.l.b16 %v155
    %v307 = vunpack.c.l.b16 %v156
    %v308 = vunpack.c.l.b16 %v157
    %v309 = vunpack.c.l.b16 %v158
    %v310 = vunpack.c.l.b16 %v159
    %v311 = vunpack.c.l.b16 %v160
    %v312 = vunpack.c.l.b16 %v161
    %v313 = vunpack.c.l.b16 %v162
    %v314 = vunpack.c.l.b16 %v163
    %v315 = vunpack.c.l.b16 %v164
    %v316 = vunpack.c.l.b16 %v165
    %v317 = vunpack.c.l.b16 %v166
    %v318 = vunpack.c.l.b16 %v167
    %v319 = vunpack.c.l.b16 %v168
    %v320 = vunpack.c.l.b16 %v169
    %v321 = vunpack.c.l.b16 %v170
    %v322 = vunpack.c.l.b16 %v171
    %v323 = vunpack.c.l.b16 %v172
    %v324 = vunpack.c.l.b16 %v173
    %v325 = vunpack.c.l.b16 %v174
    %v326 = vunpack.c.l.b16 %v175
    %v327 = vunpack.c.l.b16 %v176
    %v328 = vunpack.c.l.b16 %v177
    %v329 = vunpack.c.l.b16 %v178
    %v330 = vunpack.c.l.b16 %v179
    %v331 = vunpack.c.l.b16 %v180
    %v332 = vunpack.c.l.b16 %v181
    %v333 = vunpack.c.l.b16 %v182
    %v334 = vunpack.c.l.b16 %v183
    %v335 = vunpack.c.l.b16 %v184
    %v336 = vunpack.c.l.b16 %v185
    %v337 = vunpack.c.l.b16 %v186
    %v338 = vunpack.c.l.b16 %v187
    %v339 = vunpack.c.l.b16 %v188
    %v340 = vunpack.c.l.b16 %v189
    %v341 = vunpack.c.l.b16 %v190
    %v342 = vunpack.c.l.b16 %v191
    %v343 = vunpack.c.l.b16 %v192
    %v344 = vunpack.c.l.b16 %v193
    %v345 = vunpack.c.l.b16 %v194
    %v346 = vunpack.c.l.b16 %v195
    %v347 = vunpack.c.l.b16 %v196
    %v348 = vunpack.c.l.b16 %v197
    %v349 = vunpack.c.l.b16 %v198
    %v350 = vunpack.c.l.b16 %v199
    %v351 = vunpack.c.l.b16 %v200
    %v352 = vunpack.c.l.b16 %v201
    %v353 = vunpack.c.l.b16 %v202
    %v354 = vunpack.c.l.b16 %v203
    %v355 = vunpack.c.l.b16 %v204
    %v356 = vunpack.c.l.b16 %v205
    %v357 = vunpack.c.l.b16 %v206
    %v358 = vpack.c.b16 %v287, %v286
    %v359 = vpack.c.b16 %v289, %v288
    %v360 = vpack.c.b16 %v291, %v290
    %v361 = vpack.c.b16 %v293, %v292
    %v362 = vpack.c.b16 %v295, %v294
    %v363 = vpack.c.b16 %v297, %v296
    %v364 = vpack.c.b16 %v299, %v298
    %v365 = vpack.c.b16 %v301, %v300
    %v366 = vpack.c.b16 %v303, %v302
    %v367 = vpack.c.b16 %v305, %v304
    %v368 = vpack.c.b16 %v307, %v306
    %v369 = vpack.c.b16 %v309, %v308
    %v370 = vpack.c.b16 %v311, %v310
    %v371 = vpack.c.b16 %v313, %v312
    %v372 = vpack.c.b16 %v315, %v314
    %v373 = vpack.c.b16 %v317, %v316
    %v374 = vpack.c.b16 %v319, %v318
    %v375 = vpack.c.b16 %v321, %v320
    %v376 = vpack.c.b16 %v323, %v322
    %v377 = vpack.c.b16 %v325, %v324
    %v378 = vpack.c.b16 %v327, %v326
    %v379 = vpack.c.b16 %v329, %v328
    %v380 = vpack.c.b16 %v331, %v330
    %v381 = vpack.c.b16 %v333, %v332
    %v382 = vpack.c.b16 %v335, %v334
    %v383 = vpack.c.b16 %v337, %v336
    %v384 = vpack.c.b16 %v339, %v338
    %v385 = vpack.c.b16 %v341, %v340
    %v386 = vpack.c.b16 %v343, %v342
    %v387 = vpack.c.b16 %v345, %v344
    %v388 = vpack.c.b16 %v347, %v346
    %v389 = vpack.c.b16 %v349, %v348
    %v390 = vpack.c.b16 %v351, %v350
    %v391 = vpack.c.b16 %v353, %v352
    %v392 = vpack.c.b16 %v355, %v354
    %v393 = vpack.c.b16 %v357, %v356
    %vm430 = vcmask 523264
    %v432 = vsel %vm430, %v129, 0
    %v435 = vsel %vm430, %v134, 0
    %437 = vmatprep.subr.bf16.mxu0 0
    %438 = vmatpush1.bf16.msra.mxu0 %v358
    %439 = vmatprep.subr.bf16.mxu0 0
    %440 = vmatpush1.bf16.msra.mxu0 %v359
    %441 = vmatprep.subr.bf16.mxu0 0
    %442 = vmatpush1.bf16.msra.mxu0 %v360
    %443 = vmatprep.subr.bf16.mxu0 0
    %444 = vmatpush1.bf16.msra.mxu0 %v361
    %445 = vmatprep.subr.bf16.mxu0 0
    %446 = vmatpush1.bf16.msra.mxu0 %v362
    %447 = vmatprep.subr.bf16.mxu0 0
    %448 = vmatpush1.bf16.msra.mxu0 %v363
    %449 = vmatprep.subr.bf16.mxu0 0
    %450 = vmatpush1.bf16.msra.mxu0 %v364
    %451 = vmatprep.subr.bf16.mxu0 0
    %452 = vmatpush1.bf16.msra.mxu0 %v365
    %453 = vmatprep.subr.bf16.mxu0 0
    %454 = vmatpush1.bf16.msra.mxu0 %v366
    %455 = vmatprep.subr.bf16.mxu0 0
    %456 = vmatpush1.bf16.msra.mxu0 %v367
    %457 = vmatprep.subr.bf16.mxu0 0
    %458 = vmatpush1.bf16.msra.mxu0 %v368
    %459 = vmatprep.subr.bf16.mxu0 0
    %460 = vmatpush1.bf16.msra.mxu0 %v369
    %461 = vmatprep.subr.bf16.mxu0 0
    %462 = vmatpush1.bf16.msra.mxu0 %v370
    %463 = vmatprep.subr.bf16.mxu0 0
    %464 = vmatpush1.bf16.msra.mxu0 %v371
    %465 = vmatprep.subr.bf16.mxu0 0
    %466 = vmatpush1.bf16.msra.mxu0 %v372
    %467 = vmatprep.subr.bf16.mxu0 0
    %468 = vmatpush1.bf16.msra.mxu0 %v373
    %469 = vmatprep.mubr.bf16.mxu0 %v126
    %470 = vmatmul.mubr.bf16.gmra.mrb[0].mxu0 %v125
    %v471 = vpop.f32.mrb[0].mxu0
    %v472 = vadd.f32 %v212, %v471
    %v473 = vpop.f32.mrb[0].mxu0
    %v474 = vpop.f32.mrb[0].mxu0
    %v475 = vadd.f32 %v212, %v474
    %v476 = vpop.f32.mrb[0].mxu0
    %477 = vmatprep.mubr.bf16.mxu0 %v131
    %478 = vmatmul.mubr.bf16.gmra.mrb[0].mxu0 %v130
    %v479 = vpop.f32.mrb[0].mxu0
    %v480 = vadd.f32 %v212, %v479
    %v481 = vpop.f32.mrb[0].mxu0
    %v482 = vpop.f32.mrb[0].mxu0
    %v483 = vadd.f32 %v212, %v482
    %v484 = vpop.f32.mrb[0].mxu0
    %485 = vdwg.mxu0
    %486 = vmatprep.subr.bf16.mxu0 0
    %487 = vmatpush1.bf16.msra.mxu0 %v374
    %488 = vmatprep.subr.bf16.mxu0 0
    %489 = vmatpush1.bf16.msra.mxu0 %v375
    %490 = vmatprep.subr.bf16.mxu0 0
    %491 = vmatpush1.bf16.msra.mxu0 %v376
    %492 = vmatprep.subr.bf16.mxu0 0
    %493 = vmatpush1.bf16.msra.mxu0 %v377
    %494 = vmatprep.subr.bf16.mxu0 0
    %495 = vmatpush1.bf16.msra.mxu0 %v378
    %496 = vmatprep.subr.bf16.mxu0 0
    %497 = vmatpush1.bf16.msra.mxu0 %v379
    %498 = vmatprep.subr.bf16.mxu0 0
    %499 = vmatpush1.bf16.msra.mxu0 %v380
    %500 = vmatprep.subr.bf16.mxu0 0
    %501 = vmatpush1.bf16.msra.mxu0 %v381
    %502 = vmatprep.subr.bf16.mxu0 0
    %503 = vmatpush1.bf16.msra.mxu0 %v382
    %504 = vmatprep.subr.bf16.mxu0 0
    %505 = vmatpush1.bf16.msra.mxu0 %v383
    %506 = vmatprep.subr.bf16.mxu0 0
    %507 = vmatpush1.bf16.msra.mxu0 %v384
    %508 = vmatprep.subr.bf16.mxu0 0
    %509 = vmatpush1.bf16.msra.mxu0 %v385
    %510 = vmatprep.subr.bf16.mxu0 0
    %511 = vmatpush1.bf16.msra.mxu0 %v386
    %512 = vmatprep.subr.bf16.mxu0 0
    %513 = vmatpush1.bf16.msra.mxu0 %v387
    %514 = vmatprep.subr.bf16.mxu0 0
    %515 = vmatpush1.bf16.msra.mxu0 %v388
    %516 = vmatprep.subr.bf16.mxu0 0
    %517 = vmatpush1.bf16.msra.mxu0 %v389
    %518 = vmatprep.mubr.bf16.mxu0 %v128
    %519 = vmatmul.mubr.bf16.gmra.mrb[0].mxu0 %v127
    %v520 = vpop.f32.mrb[0].mxu0
    %v521 = vadd.f32 %v472, %v520
    %v522 = vpop.f32.mrb[0].mxu0
    %v523 = vpop.f32.mrb[0].mxu0
    %v524 = vadd.f32 %v475, %v523
    %v525 = vpop.f32.mrb[0].mxu0
    %526 = vmatprep.mubr.bf16.mxu0 %v133
    %527 = vmatmul.mubr.bf16.gmra.mrb[0].mxu0 %v132
    %v528 = vpop.f32.mrb[0].mxu0
    %v529 = vadd.f32 %v480, %v528
    %v530 = vpop.f32.mrb[0].mxu0
    %v531 = vpop.f32.mrb[0].mxu0
    %v532 = vadd.f32 %v483, %v531
    %v533 = vpop.f32.mrb[0].mxu0
    %534 = vdwg.mxu0
    %535 = vmatprep.subr.bf16.mxu0 0
    %536 = vmatpush1.bf16.msra.mxu0 %v390
    %537 = vmatprep.subr.bf16.mxu0 0
    %538 = vmatpush1.bf16.msra.mxu0 %v391
    %539 = vmatprep.subr.bf16.mxu0 0
    %540 = vmatpush1.bf16.msra.mxu0 %v392
    %541 = vmatprep.subr.bf16.mxu0 0
    %542 = vmatpush1.bf16.msra.mxu0 %v393
    %543 = vmatprep.subr.bf16.mxu0 0
    %544 = vmatpush1.bf16.msra.mxu0 0
    %545 = vmatprep.subr.bf16.mxu0 0
    %546 = vmatpush1.bf16.msra.mxu0 0
    %547 = vmatprep.subr.bf16.mxu0 0
    %548 = vmatpush1.bf16.msra.mxu0 0
    %549 = vmatprep.subr.bf16.mxu0 0
    %550 = vmatpush1.bf16.msra.mxu0 0
    %551 = vmatprep.subr.bf16.mxu0 0
    %552 = vmatpush1.bf16.msra.mxu0 0
    %553 = vmatprep.subr.bf16.mxu0 0
    %554 = vmatpush1.bf16.msra.mxu0 0
    %555 = vmatprep.subr.bf16.mxu0 0
    %556 = vmatpush1.bf16.msra.mxu0 0
    %557 = vmatprep.subr.bf16.mxu0 0
    %558 = vmatpush1.bf16.msra.mxu0 0
    %559 = vmatprep.subr.bf16.mxu0 0
    %560 = vmatpush1.bf16.msra.mxu0 0
    %561 = vmatprep.subr.bf16.mxu0 0
    %562 = vmatpush1.bf16.msra.mxu0 0
    %563 = vmatprep.subr.bf16.mxu0 0
    %564 = vmatpush1.bf16.msra.mxu0 0
    %565 = vmatprep.subr.bf16.mxu0 0
    %566 = vmatpush1.bf16.msra.mxu0 0
    %567 = vmatprep.mubr.bf16.mxu0 0
    %568 = vmatmul.mubr.bf16.gmra.mrb[0].mxu0 %v432
    %v569 = vpop.f32.mrb[0].mxu0
    %v570 = vadd.f32 %v521, %v569
    %v571 = vpop.f32.mrb[0].mxu0
    %v572 = vpop.f32.mrb[0].mxu0
    %v573 = vadd.f32 %v524, %v572
    %v574 = vpop.f32.mrb[0].mxu0
    %575 = vmatprep.mubr.bf16.mxu0 0
    %576 = vmatmul.mubr.bf16.gmra.mrb[0].mxu0 %v435
    %v577 = vpop.f32.mrb[0].mxu0
    %v578 = vadd.f32 %v529, %v577
    %v579 = vpop.f32.mrb[0].mxu0
    %v580 = vpop.f32.mrb[0].mxu0
    %v581 = vadd.f32 %v532, %v580
    %v582 = vpop.f32.mrb[0].mxu0
    %583 = vdwg.mxu0
    %584 = vst [vmem:[%s4] sm:$0xff] %v570
    %585 = vst [vmem:[%s4 + $0x8] sm:$0xff] %v573
    %586 = vst [vmem:[%s4 + $0x10] sm:$0xff] %v578
    %587 = vst [vmem:[%s4 + $0x18] sm:$0xff] %v581
    %v588 = vadd.f32 %v570, %v573
    %v589 = vadd.f32 %v588, %v578
    %v590 = vadd.f32 %v589, %v581
    %v591 = vrot.slane %v590, 4
    %v592 = vadd.f32 %v590, %v591
    %v593 = vrot.slane %v592, 2
    %v594 = vadd.f32 %v592, %v593
    %v595 = vrot.slane %v594, 1
    %v596 = vadd.f32 %v594, %v595
    %597 = vst [vmem:[%s5] sm:$0x1] %v596
    %v598 = vmul.f32 %v570, %v570
    %v599 = vmul.f32 %v573, %v573
    %v600 = vmul.f32 %v578, %v578
    %v601 = vmul.f32 %v581, %v581
    %v602 = vadd.f32 %v598, %v599
    %v603 = vadd.f32 %v602, %v600
    %v604 = vadd.f32 %v603, %v601
    %v605 = vrot.slane %v604, 4
    %v606 = vadd.f32 %v604, %v605
    %v607 = vrot.slane %v606, 2
    %v608 = vadd.f32 %v606, %v607
    %v609 = vrot.slane %v608, 1
    %v610 = vadd.f32 %v608, %v609
    %611 = vst [vmem:[%s5 + $0x1] sm:$0x1] %v610
    // Predicated region
    $region26: #{frame_generator_forward.6} parent=1 // pred_check
      _
    $region27: #{frame_generator_forward.6} parent=1 // pred_check_branch
      %613 = sbr.rel (0) target = $region29
    $region28: #{frame_generator_forward.6} parent=1 // pred_region
      _
    $region29: #{frame_generator_forward.6} parent=1 // pred_fallthru
      _
    // Predicated region
    $region30: #{frame_generator_forward.6} parent=1 // pred_check
      _
    $region31: #{frame_generator_forward.6} parent=1 // pred_check_branch
      %615 = sbr.rel (0) target = $region33
    $region32: #{frame_generator_forward.6} parent=1 // pred_region
      _
    $region33: #{frame_generator_forward.6} parent=1 // pred_fallthru
      _
    // Predicated region
    $region34: #{frame_generator_forward.6} parent=1 // pred_check
      _
    $region35: #{frame_generator_forward.6} parent=1 // pred_check_branch
      %617 = sbr.rel (0) target = $region37
    $region36: #{frame_generator_forward.6} parent=1 // pred_region
      _
    $region37: #{frame_generator_forward.6} parent=1 // pred_fallthru
      _
    // Predicated region
    $region38: #{frame_generator_forward.6} parent=1 // pred_check
      _
    $region39: #{frame_generator_forward.6} parent=1 // pred_check_branch
      %619 = sbr.rel (0) target = $region41
    $region40: #{frame_generator_forward.6} parent=1 // pred_region
      _
    $region41: #{frame_generator_forward.6} parent=1 // pred_fallthru
      _
    %620 = vsyncpa [#allocation3], 1
    %621 = vsyncpa [#allocation5], 1

// kernel: squeeze.12
$region0: #{squeeze.12}
  %s0 = inlined_call_operand.vmem [shape: f32[64], index: 0, kind: input, shape index: {}]
  %s1 = inlined_call_operand.vmem [shape: f32[4,16], index: 1, kind: output, shape index: {}]
  $region1: #{squeeze.12} parent=0
    #allocation0 [shape = 'u8[4096]{0}', space=vmem, size = 0x1000, scoped, tag = 'scoped mem for output reshape']
    #allocation1 [shape = 'u8[4096]{0}', space=vmem, size = 0x1000, scoped, tag = 'scoped mem for input reshape']
    %s3 = sshllo.u32 0, 1
    %v4 = vld [vmem:[%s0] sm:%s3]
    %5 = vst [vmem:[#allocation1] sm:%s3] %v4
    %v6 = vld [vmem:[#allocation1] sm:$0x1]
    %vm7 = vcmask 130048
    %8 = vst.msk [vmem:[#allocation0] sm:$0x1] %vm7, %v6
    %v9 = vld [vmem:[#allocation1] sm:$0x1]
    %10 = vrot.lane.b32.xlu0 %v9, 112
    %v11 = vpop.permute.xlu0 %10
    %vm12 = vcmask 130048
    %s13 = scalar_lea.vmem [#allocation0], 1
    %14 = vst.msk [vmem:[%s13] sm:$0x1] %vm12, %v11
    %v15 = vld [vmem:[#allocation1] sm:$0x1]
    %16 = vrot.lane.b32.xlu0 %v15, 96
    %v17 = vpop.permute.xlu0 %16
    %vm18 = vcmask 130048
    %s19 = scalar_lea.vmem [#allocation0], 2
    %20 = vst.msk [vmem:[%s19] sm:$0x1] %vm18, %v17
    %v21 = vld [vmem:[#allocation1] sm:$0x1]
    %22 = vrot.lane.b32.xlu0 %v21, 80
    %v23 = vpop.permute.xlu0 %22
    %vm24 = vcmask 130048
    %s25 = scalar_lea.vmem [#allocation0], 3
    %26 = vst.msk [vmem:[%s25] sm:$0x1] %vm24, %v23
    %s28 = sshllo.u32 0, 4
    %v30 = vld [vmem:[#allocation0] sm:%s28]
    %s31 = sshllo.u32 0, 4
    %32 = vst [vmem:[%s1] sm:%s31] %v30

// kernel: tile.33
$region0: #{tile.33}
  #allocation0 [shape = 's32[1]{0}', space=sflag, size = 0x4, scoped, tag = 'scoped memory for tile.33']
  %s0 = inlined_call_operand.vmem [shape: f32[16], index: 0, kind: input, shape index: {}]
  %s1 = inlined_call_operand.vmem [shape: f32[9,16], index: 1, kind: output, shape index: {}]
  // Predicated region
  $region2: #{tile.33} parent=0 // pred_check
    _
  $region3: #{tile.33} parent=0 // pred_check_branch
    %3 = sbr.rel (0) target = $region5
  $region4: #{tile.33} parent=0 // pred_region
    _
  $region5: #{tile.33} parent=0 // pred_fallthru
    _
  %v4 = vld [vmem:[%s0] ss:$0 sm:$0xff]
  %5 = vst [vmem:[%s1] sm:$0xff] %v4
  %s6 = scalar_lea.vmem %s1, 8
  %7 = vst [vmem:[%s6] sm:$0xff] %v4

// kernel: tile.34
$region0: #{tile.34}
  %s0 = inlined_call_operand.vmem [shape: f32[9,16], index: 0, kind: input, shape index: {}]
  %s1 = inlined_call_operand.vmem [shape: f32[1,144], index: 1, kind: output, shape index: {}]
  $region1: #{tile.34} parent=0
    #allocation0 [shape = 'u8[8192]{0}', space=vmem, size = 0x2000, scoped, tag = 'scoped mem for output reshape']
    %s2 = smov 3
    %v3 = vld [vmem:[%s0] ss:$8 sm:%s2]
    %vm4 = vcmask 130048
    %5 = vst.msk [vmem:[#allocation0] ss:$8 sm:$0x3] %vm4, %v3
    %s6 = scalar_lea.vmem %s0, 7
    %v7 = vld [vmem:[%s6] sm:$0x1]
    %8 = vrot.lane.b32.xlu0 %v7, 112
    %v9 = vpop.permute.xlu0 %8
    %vm10 = vcmask 1048448
    %11 = vst.msk [vmem:[#allocation0] sm:$0x1] %vm10, %v9
    %s12 = scalar_lea.vmem %s0, 6
    %v13 = vld [vmem:[%s12] sm:$0x1]
    %14 = vrot.lane.b32.xlu0 %v13, 96
    %v15 = vpop.permute.xlu0 %14
    %vm16 = vcmask 917248
    %17 = vst.msk [vmem:[#allocation0] sm:$0x1] %vm16, %v15
    %s18 = scalar_lea.vmem %s0, 5
    %v19 = vld [vmem:[%s18] sm:$0x1]
    %20 = vrot.lane.b32.xlu0 %v19, 80
    %v21 = vpop.permute.xlu0 %20
    %vm22 = vcmask 786048
    %23 = vst.msk [vmem:[#allocation0] sm:$0x1] %vm22, %v21
    %s24 = scalar_lea.vmem %s0, 4
    %v25 = vld [vmem:[%s24] sm:$0x1]
    %26 = vrot.lane.b32.xlu0 %v25, 64
    %v27 = vpop.permute.xlu0 %26
    %vm28 = vcmask 654848
    %29 = vst.msk [vmem:[#allocation0] sm:$0x1] %vm28, %v27
    %s30 = scalar_lea.vmem %s0, 3
    %v31 = vld [vmem:[%s30] sm:$0x1]
    %32 = vrot.lane.b32.xlu0 %v31, 48
    %v33 = vpop.permute.xlu0 %32
    %vm34 = vcmask 523648
    %35 = vst.msk [vmem:[#allocation0] sm:$0x1] %vm34, %v33
    %s36 = scalar_lea.vmem %s0, 2
    %v37 = vld [vmem:[%s36] sm:$0x1]
    %38 = vrot.lane.b32.xlu0 %v37, 32
    %v39 = vpop.permute.xlu0 %38
    %vm40 = vcmask 392448
    %41 = vst.msk [vmem:[#allocation0] sm:$0x1] %vm40, %v39
    %s42 = scalar_lea.vmem %s0, 1
    %v43 = vld [vmem:[%s42] sm:$0x1]
    %44 = vrot.lane.b32.xlu0 %v43, 16
    %v45 = vpop.permute.xlu0 %44
    %vm46 = vcmask 261248
    %47 = vst.msk [vmem:[#allocation0] sm:$0x1] %vm46, %v45
    %s49 = sshllo.u32 0, 1
    %v51 = vld [vmem:[#allocation0] sm:%s49]
    %s52 = sshllo.u32 0, 1
    %53 = vst [vmem:[%s1] sm:%s52] %v51
    %s54 = scalar_lea.vmem [#allocation0], 8
    %v55 = vld [vmem:[%s54] sm:%s49]
    %s56 = sshllo.u32 0, 1
    %s57 = scalar_lea.vmem %s1, 1
    %58 = vst [vmem:[%s57] sm:%s56] %v55

// kernel: frame_generator_forward.7
$region0: #{frame_generator_forward.7}
  #allocation0 [shape = 'u32[]', space=smem, size = 0x4, offset = 0x4, fixed_abs, tag = 'smem constant byte address 0x4 - core index']
  #allocation1 [shape = 'u32[144,128]{1,0:T(1,128)}', space=vmem, size = 0x12000, scoped, tag = 'internal scratch']
  %s0 = inlined_call_operand.vmem [shape: bf16[128,288], index: 0, kind: input, shape index: {}]
  %s1 = inlined_call_operand.vmem [shape: f32[1,288], index: 1, kind: input, shape index: {}]
  %s2 = inlined_call_operand.vmem [shape: bf16[64,288], index: 2, kind: input, shape index: {}]
  %s3 = inlined_call_operand.vmem [shape: f32[64,1], index: 3, kind: input, shape index: {}]
  %s4 = inlined_call_operand.vmem [shape: f32[64,128], index: 4, kind: output, shape index: {0}]
  %s5 = inlined_call_operand.vmem [shape: f32[64,2], index: 5, kind: output, shape index: {1}]
  %6 = xla_tuple %s4, %s5
  %s7 = sld [smem:[#allocation0]]
  $region34: #{frame_generator_forward.7} parent=0
    _
  %s9 = ssub.s32 1, %s7
  %s10 = scalar_select 0, %s9, %s7
  // Predicated region
  $region2: #{frame_generator_forward.7} parent=0 // pred_check
    _
  $region3: #{frame_generator_forward.7} parent=0 // pred_check_branch
    %12 = sbr.rel (0) target = $region5
  $region4: #{frame_generator_forward.7} parent=0 // pred_region
    _
  $region5: #{frame_generator_forward.7} parent=0 // pred_fallthru
    _
  // Predicated region
  $region6: #{frame_generator_forward.7} parent=0 // pred_check
    _
  $region7: #{frame_generator_forward.7} parent=0 // pred_check_branch
    %14 = sbr.rel (0) target = $region9
  $region8: #{frame_generator_forward.7} parent=0 // pred_region
    _
  $region9: #{frame_generator_forward.7} parent=0 // pred_fallthru
    _
  // Predicated region
  $region10: #{frame_generator_forward.7} parent=0 // pred_check
    _
  $region11: #{frame_generator_forward.7} parent=0 // pred_check_branch
    %16 = sbr.rel (0) target = $region13
  $region12: #{frame_generator_forward.7} parent=0 // pred_region
    _
  $region13: #{frame_generator_forward.7} parent=0 // pred_fallthru
    _
  // Predicated region
  $region14: #{frame_generator_forward.7} parent=0 // pred_check
    _
  $region15: #{frame_generator_forward.7} parent=0 // pred_check_branch
    %18 = sbr.rel (0) target = $region17
  $region16: #{frame_generator_forward.7} parent=0 // pred_region
    _
  $region17: #{frame_generator_forward.7} parent=0 // pred_fallthru
    _
  %v20 = vld [vmem:[%s0] sm:$0xff]
  %v21 = vld [vmem:[%s0 + $0x8] sm:$0xf]
  %v22 = vld [vmem:[%s0 + $0xc] sm:$0xff]
  %v23 = vld [vmem:[%s0 + $0x14] sm:$0xf]
  %v24 = vld [vmem:[%s0 + $0x18] sm:$0xff]
  %v25 = vld [vmem:[%s0 + $0x20] sm:$0xf]
  %v26 = vld [vmem:[%s0 + $0x24] sm:$0xff]
  %v27 = vld [vmem:[%s0 + $0x2c] sm:$0xf]
  %v28 = vld [vmem:[%s0 + $0x30] sm:$0xff]
  %v29 = vld [vmem:[%s0 + $0x38] sm:$0xf]
  %v30 = vld [vmem:[%s0 + $0x3c] sm:$0xff]
  %v31 = vld [vmem:[%s0 + $0x44] sm:$0xf]
  %v32 = vld [vmem:[%s0 + $0x48] sm:$0xff]
  %v33 = vld [vmem:[%s0 + $0x50] sm:$0xf]
  %v34 = vld [vmem:[%s0 + $0x54] sm:$0xff]
  %v35 = vld [vmem:[%s0 + $0x5c] sm:$0xf]
  %v36 = vld [vmem:[%s0 + $0x60] sm:$0xff]
  %v37 = vld [vmem:[%s0 + $0x68] sm:$0xf]
  %v38 = vld [vmem:[%s0 + $0x6c] sm:$0xff]
  %v39 = vld [vmem:[%s0 + $0x74] sm:$0xf]
  %v40 = vld [vmem:[%s0 + $0x78] sm:$0xff]
  %v41 = vld [vmem:[%s0 + $0x80] sm:$0xf]
  %v42 = vld [vmem:[%s0 + $0x84] sm:$0xff]
  %v43 = vld [vmem:[%s0 + $0x8c] sm:$0xf]
  %v44 = vld [vmem:[%s0 + $0x90] sm:$0xff]
  %v45 = vld [vmem:[%s0 + $0x98] sm:$0xf]
  %v46 = vld [vmem:[%s0 + $0x9c] sm:$0xff]
  %v47 = vld [vmem:[%s0 + $0xa4] sm:$0xf]
  %v48 = vld [vmem:[%s0 + $0xa8] sm:$0xff]
  %v49 = vld [vmem:[%s0 + $0xb0] sm:$0xf]
  %v50 = vld [vmem:[%s0 + $0xb4] sm:$0xff]
  %v51 = vld [vmem:[%s0 + $0xbc] sm:$0xf]
  %v52 = vld [vmem:[%s1] sm:$0x7]
  %v53 = vunpack.c.l.bf16 %v20
  %v54 = vunpack.c.h.bf16 %v20
  %v55 = vunpack.c.l.bf16 %v21
  %v56 = vunpack.c.l.bf16 %v22
  %v57 = vunpack.c.h.bf16 %v22
  %v58 = vunpack.c.l.bf16 %v23
  %v59 = vunpack.c.l.bf16 %v24
  %v60 = vunpack.c.h.bf16 %v24
  %v61 = vunpack.c.l.bf16 %v25
  %v62 = vunpack.c.l.bf16 %v26
  %v63 = vunpack.c.h.bf16 %v26
  %v64 = vunpack.c.l.bf16 %v27
  %v65 = vunpack.c.l.bf16 %v28
  %v66 = vunpack.c.h.bf16 %v28
  %v67 = vunpack.c.l.bf16 %v29
  %v68 = vunpack.c.l.bf16 %v30
  %v69 = vunpack.c.h.bf16 %v30
  %v70 = vunpack.c.l.bf16 %v31
  %v71 = vunpack.c.l.bf16 %v32
  %v72 = vunpack.c.h.bf16 %v32
  %v73 = vunpack.c.l.bf16 %v33
  %v74 = vunpack.c.l.bf16 %v34
  %v75 = vunpack.c.h.bf16 %v34
  %v76 = vunpack.c.l.bf16 %v35
  %v77 = vunpack.c.l.bf16 %v36
  %v78 = vunpack.c.h.bf16 %v36
  %v79 = vunpack.c.l.bf16 %v37
  %v80 = vunpack.c.l.bf16 %v38
  %v81 = vunpack.c.h.bf16 %v38
  %v82 = vunpack.c.l.bf16 %v39
  %v83 = vunpack.c.l.bf16 %v40
  %v84 = vunpack.c.h.bf16 %v40
  %v85 = vunpack.c.l.bf16 %v41
  %v86 = vunpack.c.l.bf16 %v42
  %v87 = vunpack.c.h.bf16 %v42
  %v88 = vunpack.c.l.bf16 %v43
  %v89 = vunpack.c.l.bf16 %v44
  %v90 = vunpack.c.h.bf16 %v44
  %v91 = vunpack.c.l.bf16 %v45
  %v92 = vunpack.c.l.bf16 %v46
  %v93 = vunpack.c.h.bf16 %v46
  %v94 = vunpack.c.l.bf16 %v47
  %v95 = vunpack.c.l.bf16 %v48
  %v96 = vunpack.c.h.bf16 %v48
  %v97 = vunpack.c.l.bf16 %v49
  %v98 = vunpack.c.l.bf16 %v50
  %v99 = vunpack.c.h.bf16 %v50
  %v100 = vunpack.c.l.bf16 %v51
  %v102 = vlaneseq
  %v103 = vshrl.u32 %v102, 7
  %v104 = vsub.s32 0, %v103
  %v105 = vrot.slane %v52, %v104
  %v106 = vlaneseq
  %v107 = vshrl.u32 %v106, 7
  %v108 = vsub.s32 1, %v107
  %v109 = vrot.slane %v52, %v108
  %v110 = vlaneseq
  %v111 = vshrl.u32 %v110, 7
  %v112 = vsub.s32 2, %v111
  %v113 = vrot.slane %v52, %v112
  %v117 = vmul.f32 %v53, %v105
  %v118 = vmul.f32 %v54, %v109
  %v119 = vmul.f32 %v55, %v113
  %v120 = vmul.f32 %v56, %v105
  %v121 = vmul.f32 %v57, %v109
  %v122 = vmul.f32 %v58, %v113
  %v123 = vmul.f32 %v59, %v105
  %v124 = vmul.f32 %v60, %v109
  %v125 = vmul.f32 %v61, %v113
  %v126 = vmul.f32 %v62, %v105
  %v127 = vmul.f32 %v63, %v109
  %v128 = vmul.f32 %v64, %v113
  %v129 = vmul.f32 %v65, %v105
  %v130 = vmul.f32 %v66, %v109
  %v131 = vmul.f32 %v67, %v113
  %v132 = vmul.f32 %v68, %v105
  %v133 = vmul.f32 %v69, %v109
  %v134 = vmul.f32 %v70, %v113
  %v135 = vmul.f32 %v71, %v105
  %v136 = vmul.f32 %v72, %v109
  %v137 = vmul.f32 %v73, %v113
  %v138 = vmul.f32 %v74, %v105
  %v139 = vmul.f32 %v75, %v109
  %v140 = vmul.f32 %v76, %v113
  %v141 = vmul.f32 %v77, %v105
  %v142 = vmul.f32 %v78, %v109
  %v143 = vmul.f32 %v79, %v113
  %v144 = vmul.f32 %v80, %v105
  %v145 = vmul.f32 %v81, %v109
  %v146 = vmul.f32 %v82, %v113
  %v147 = vmul.f32 %v83, %v105
  %v148 = vmul.f32 %v84, %v109
  %v149 = vmul.f32 %v85, %v113
  %v150 = vmul.f32 %v86, %v105
  %v151 = vmul.f32 %v87, %v109
  %v152 = vmul.f32 %v88, %v113
  %v153 = vmul.f32 %v89, %v105
  %v154 = vmul.f32 %v90, %v109
  %v155 = vmul.f32 %v91, %v113
  %v156 = vmul.f32 %v92, %v105
  %v157 = vmul.f32 %v93, %v109
  %v158 = vmul.f32 %v94, %v113
  %v159 = vmul.f32 %v95, %v105
  %v160 = vmul.f32 %v96, %v109
  %v161 = vmul.f32 %v97, %v113
  %v162 = vmul.f32 %v98, %v105
  %v163 = vmul.f32 %v99, %v109
  %v164 = vmul.f32 %v100, %v113
  %v165 = vpack.c.bf16 %v120, %v117
  %v166 = vpack.c.bf16 %v121, %v118
  %v167 = vpack.c.bf16 %v122, %v119
  %v168 = vpack.c.bf16 %v126, %v123
  %v169 = vpack.c.bf16 %v127, %v124
  %v170 = vpack.c.bf16 %v128, %v125
  %v171 = vpack.c.bf16 %v132, %v129
  %v172 = vpack.c.bf16 %v133, %v130
  %v173 = vpack.c.bf16 %v134, %v131
  %v174 = vpack.c.bf16 %v138, %v135
  %v175 = vpack.c.bf16 %v139, %v136
  %v176 = vpack.c.bf16 %v140, %v137
  %v177 = vpack.c.bf16 %v144, %v141
  %v178 = vpack.c.bf16 %v145, %v142
  %v179 = vpack.c.bf16 %v146, %v143
  %v180 = vpack.c.bf16 %v150, %v147
  %v181 = vpack.c.bf16 %v151, %v148
  %v182 = vpack.c.bf16 %v152, %v149
  %v183 = vpack.c.bf16 %v156, %v153
  %v184 = vpack.c.bf16 %v157, %v154
  %v185 = vpack.c.bf16 %v158, %v155
  %v186 = vpack.c.bf16 %v162, %v159
  %v187 = vpack.c.bf16 %v163, %v160
  %v188 = vpack.c.bf16 %v164, %v161
  %v189 = vld [vmem:[%s2] sm:$0xff]
  %v190 = vld [vmem:[%s2 + $0x8] sm:$0xf]
  %v191 = vld [vmem:[%s2 + $0xc] sm:$0xff]
  %v192 = vld [vmem:[%s2 + $0x14] sm:$0xf]
  %v193 = vld [vmem:[%s2 + $0x18] sm:$0xff]
  %v194 = vld [vmem:[%s2 + $0x20] sm:$0xf]
  %v195 = vld [vmem:[%s2 + $0x24] sm:$0xff]
  %v196 = vld [vmem:[%s2 + $0x2c] sm:$0xf]
  %v197 = vld [vmem:[%s2 + $0x30] sm:$0xff]
  %v198 = vld [vmem:[%s2 + $0x38] sm:$0xf]
  %v199 = vld [vmem:[%s2 + $0x3c] sm:$0xff]
  %v200 = vld [vmem:[%s2 + $0x44] sm:$0xf]
  %v201 = vld [vmem:[%s2 + $0x48] sm:$0xff]
  %v202 = vld [vmem:[%s2 + $0x50] sm:$0xf]
  %v203 = vld [vmem:[%s2 + $0x54] sm:$0xff]
  %v204 = vld [vmem:[%s2 + $0x5c] sm:$0xf]
  %v205 = vld [vmem:[%s3] sm:$0xff]
  %v206 = vld [vmem:[%s3 + $0x8] sm:$0xff]
  %v207 = vld [vmem:[%s3 + $0x10] sm:$0xff]
  %v208 = vld [vmem:[%s3 + $0x18] sm:$0xff]
  %v209 = vld [vmem:[%s3 + $0x20] sm:$0xff]
  %v210 = vld [vmem:[%s3 + $0x28] sm:$0xff]
  %v211 = vld [vmem:[%s3 + $0x30] sm:$0xff]
  %v212 = vld [vmem:[%s3 + $0x38] sm:$0xff]
  %214 = vset.pattern.permute.xlu0 0
  %215 = vperm.xlu0 %214, %v205
  %v216 = vpop.permute.xlu0 %215
  %219 = vset.pattern.permute.xlu0 0
  %220 = vperm.xlu0 %219, %v206
  %v221 = vpop.permute.xlu0 %220
  %224 = vset.pattern.permute.xlu0 0
  %225 = vperm.xlu0 %224, %v207
  %v226 = vpop.permute.xlu0 %225
  %229 = vset.pattern.permute.xlu0 0
  %230 = vperm.xlu0 %229, %v208
  %v231 = vpop.permute.xlu0 %230
  %234 = vset.pattern.permute.xlu0 0
  %235 = vperm.xlu0 %234, %v209
  %v236 = vpop.permute.xlu0 %235
  %239 = vset.pattern.permute.xlu0 0
  %240 = vperm.xlu0 %239, %v210
  %v241 = vpop.permute.xlu0 %240
  %244 = vset.pattern.permute.xlu0 0
  %245 = vperm.xlu0 %244, %v211
  %v246 = vpop.permute.xlu0 %245
  %249 = vset.pattern.permute.xlu0 0
  %250 = vperm.xlu0 %249, %v212
  %v251 = vpop.permute.xlu0 %250
  %v269 = vunpack.c.l.b16 %v189
  %v270 = vunpack.c.h.b16 %v189
  %v271 = vunpack.c.l.b16 %v190
  %v272 = vunpack.c.l.b16 %v191
  %v273 = vunpack.c.h.b16 %v191
  %v274 = vunpack.c.l.b16 %v192
  %v275 = vunpack.c.l.b16 %v193
  %v276 = vunpack.c.h.b16 %v193
  %v277 = vunpack.c.l.b16 %v194
  %v278 = vunpack.c.l.b16 %v195
  %v279 = vunpack.c.h.b16 %v195
  %v280 = vunpack.c.l.b16 %v196
  %v281 = vunpack.c.l.b16 %v197
  %v282 = vunpack.c.h.b16 %v197
  %v283 = vunpack.c.l.b16 %v198
  %v284 = vunpack.c.l.b16 %v199
  %v285 = vunpack.c.h.b16 %v199
  %v286 = vunpack.c.l.b16 %v200
  %v287 = vunpack.c.l.b16 %v201
  %v288 = vunpack.c.h.b16 %v201
  %v289 = vunpack.c.l.b16 %v202
  %v290 = vunpack.c.l.b16 %v203
  %v291 = vunpack.c.h.b16 %v203
  %v292 = vunpack.c.l.b16 %v204
  %v293 = vpack.c.b16 %v272, %v269
  %v294 = vpack.c.b16 %v273, %v270
  %v295 = vpack.c.b16 %v274, %v271
  %v296 = vpack.c.b16 %v278, %v275
  %v297 = vpack.c.b16 %v279, %v276
  %v298 = vpack.c.b16 %v280, %v277
  %v299 = vpack.c.b16 %v284, %v281
  %v300 = vpack.c.b16 %v285, %v282
  %v301 = vpack.c.b16 %v286, %v283
  %v302 = vpack.c.b16 %v290, %v287
  %v303 = vpack.c.b16 %v291, %v288
  %v304 = vpack.c.b16 %v292, %v289
  %vm313 = vcmask 261120
  %v315 = vsel %vm313, %v295, 0
  %v318 = vsel %vm313, %v298, 0
  %v321 = vsel %vm313, %v301, 0
  %v324 = vsel %vm313, %v304, 0
  %v327 = vsel %vm313, %v167, 0
  %v330 = vsel %vm313, %v170, 0
  %v333 = vsel %vm313, %v173, 0
  %v336 = vsel %vm313, %v176, 0
  %v339 = vsel %vm313, %v179, 0
  %v342 = vsel %vm313, %v182, 0
  %v345 = vsel %vm313, %v185, 0
  %v348 = vsel %vm313, %v188, 0
  %350 = vmatprep.subr.bf16.mxu0 %v166
  %351 = vmatpush1.bf16.xpose.msra.mxu0 %v165
  %352 = vmatprep.subr.bf16.mxu0 %v169
  %353 = vmatpush1.bf16.xpose.msra.mxu0 %v168
  %354 = vmatprep.subr.bf16.mxu0 %v172
  %355 = vmatpush1.bf16.xpose.msra.mxu0 %v171
  %356 = vmatprep.subr.bf16.mxu0 %v175
  %357 = vmatpush1.bf16.xpose.msra.mxu0 %v174
  %358 = vmatprep.subr.bf16.mxu0 %v178
  %359 = vmatpush1.bf16.xpose.msra.mxu0 %v177
  %360 = vmatprep.subr.bf16.mxu0 %v181
  %361 = vmatpush1.bf16.xpose.msra.mxu0 %v180
  %362 = vmatprep.subr.bf16.mxu0 %v184
  %363 = vmatpush1.bf16.xpose.msra.mxu0 %v183
  %364 = vmatprep.subr.bf16.mxu0 %v187
  %365 = vmatpush1.bf16.xpose.msra.mxu0 %v186
  %366 = vmatprep.subr.bf16.mxu0 0
  %367 = vmatpush1.bf16.xpose.msra.mxu0 0
  %368 = vmatprep.subr.bf16.mxu0 0
  %369 = vmatpush1.bf16.xpose.msra.mxu0 0
  %370 = vmatprep.subr.bf16.mxu0 0
  %371 = vmatpush1.bf16.xpose.msra.mxu0 0
  %372 = vmatprep.subr.bf16.mxu0 0
  %373 = vmatpush1.bf16.xpose.msra.mxu0 0
  %374 = vmatprep.subr.bf16.mxu0 0
  %375 = vmatpush1.bf16.xpose.msra.mxu0 0
  %376 = vmatprep.subr.bf16.mxu0 0
  %377 = vmatpush1.bf16.xpose.msra.mxu0 0
  %378 = vmatprep.subr.bf16.mxu0 0
  %379 = vmatpush1.bf16.xpose.msra.mxu0 0
  %380 = vmatprep.subr.bf16.mxu0 0
  %381 = vmatpush1.bf16.xpose.msra.mxu0 0
  %382 = vmatprep.mubr.bf16.mxu0 %v294
  %383 = vmatmul.mubr.bf16.gmra.mrb[0].mxu0 %v293
  %v384 = vpop.f32.mrb[0].mxu0
  %v385 = vadd.f32 %v216, %v384
  %v386 = vpop.f32.mrb[0].mxu0
  %v387 = vpop.f32.mrb[0].mxu0
  %v388 = vadd.f32 %v221, %v387
  %v389 = vpop.f32.mrb[0].mxu0
  %390 = vmatprep.mubr.bf16.mxu0 %v297
  %391 = vmatmul.mubr.bf16.gmra.mrb[0].mxu0 %v296
  %v392 = vpop.f32.mrb[0].mxu0
  %v393 = vadd.f32 %v226, %v392
  %v394 = vpop.f32.mrb[0].mxu0
  %v395 = vpop.f32.mrb[0].mxu0
  %v396 = vadd.f32 %v231, %v395
  %v397 = vpop.f32.mrb[0].mxu0
  %398 = vmatprep.mubr.bf16.mxu0 %v300
  %399 = vmatmul.mubr.bf16.gmra.mrb[0].mxu0 %v299
  %v400 = vpop.f32.mrb[0].mxu0
  %v401 = vadd.f32 %v236, %v400
  %v402 = vpop.f32.mrb[0].mxu0
  %v403 = vpop.f32.mrb[0].mxu0
  %v404 = vadd.f32 %v241, %v403
  %v405 = vpop.f32.mrb[0].mxu0
  %406 = vmatprep.mubr.bf16.mxu0 %v303
  %407 = vmatmul.mubr.bf16.gmra.mrb[0].mxu0 %v302
  %v408 = vpop.f32.mrb[0].mxu0
  %v409 = vadd.f32 %v246, %v408
  %v410 = vpop.f32.mrb[0].mxu0
  %v411 = vpop.f32.mrb[0].mxu0
  %v412 = vadd.f32 %v251, %v411
  %v413 = vpop.f32.mrb[0].mxu0
  %414 = vdwg.mxu0
  %415 = vmatprep.subr.bf16.mxu0 0
  %416 = vmatpush1.bf16.xpose.msra.mxu0 %v327
  %417 = vmatprep.subr.bf16.mxu0 0
  %418 = vmatpush1.bf16.xpose.msra.mxu0 %v330
  %419 = vmatprep.subr.bf16.mxu0 0
  %420 = vmatpush1.bf16.xpose.msra.mxu0 %v333
  %421 = vmatprep.subr.bf16.mxu0 0
  %422 = vmatpush1.bf16.xpose.msra.mxu0 %v336
  %423 = vmatprep.subr.bf16.mxu0 0
  %424 = vmatpush1.bf16.xpose.msra.mxu0 %v339
  %425 = vmatprep.subr.bf16.mxu0 0
  %426 = vmatpush1.bf16.xpose.msra.mxu0 %v342
  %427 = vmatprep.subr.bf16.mxu0 0
  %428 = vmatpush1.bf16.xpose.msra.mxu0 %v345
  %429 = vmatprep.subr.bf16.mxu0 0
  %430 = vmatpush1.bf16.xpose.msra.mxu0 %v348
  %431 = vmatprep.subr.bf16.mxu0 0
  %432 = vmatpush1.bf16.xpose.msra.mxu0 0
  %433 = vmatprep.subr.bf16.mxu0 0
  %434 = vmatpush1.bf16.xpose.msra.mxu0 0
  %435 = vmatprep.subr.bf16.mxu0 0
  %436 = vmatpush1.bf16.xpose.msra.mxu0 0
  %437 = vmatprep.subr.bf16.mxu0 0
  %438 = vmatpush1.bf16.xpose.msra.mxu0 0
  %439 = vmatprep.subr.bf16.mxu0 0
  %440 = vmatpush1.bf16.xpose.msra.mxu0 0
  %441 = vmatprep.subr.bf16.mxu0 0
  %442 = vmatpush1.bf16.xpose.msra.mxu0 0
  %443 = vmatprep.subr.bf16.mxu0 0
  %444 = vmatpush1.bf16.xpose.msra.mxu0 0
  %445 = vmatprep.subr.bf16.mxu0 0
  %446 = vmatpush1.bf16.xpose.msra.mxu0 0
  %447 = vmatprep.mubr.bf16.mxu0 0
  %448 = vmatmul.mubr.bf16.gmra.mrb[0].mxu0 %v315
  %v449 = vpop.f32.mrb[0].mxu0
  %v450 = vadd.f32 %v385, %v449
  %v451 = vpop.f32.mrb[0].mxu0
  %v452 = vpop.f32.mrb[0].mxu0
  %v453 = vadd.f32 %v388, %v452
  %v454 = vpop.f32.mrb[0].mxu0
  %455 = vmatprep.mubr.bf16.mxu0 0
  %456 = vmatmul.mubr.bf16.gmra.mrb[0].mxu0 %v318
  %v457 = vpop.f32.mrb[0].mxu0
  %v458 = vadd.f32 %v393, %v457
  %v459 = vpop.f32.mrb[0].mxu0
  %v460 = vpop.f32.mrb[0].mxu0
  %v461 = vadd.f32 %v396, %v460
  %v462 = vpop.f32.mrb[0].mxu0
  %463 = vmatprep.mubr.bf16.mxu0 0
  %464 = vmatmul.mubr.bf16.gmra.mrb[0].mxu0 %v321
  %v465 = vpop.f32.mrb[0].mxu0
  %v466 = vadd.f32 %v401, %v465
  %v467 = vpop.f32.mrb[0].mxu0
  %v468 = vpop.f32.mrb[0].mxu0
  %v469 = vadd.f32 %v404, %v468
  %v470 = vpop.f32.mrb[0].mxu0
  %471 = vmatprep.mubr.bf16.mxu0 0
  %472 = vmatmul.mubr.bf16.gmra.mrb[0].mxu0 %v324
  %v473 = vpop.f32.mrb[0].mxu0
  %v474 = vadd.f32 %v409, %v473
  %v475 = vpop.f32.mrb[0].mxu0
  %v476 = vpop.f32.mrb[0].mxu0
  %v477 = vadd.f32 %v412, %v476
  %v478 = vpop.f32.mrb[0].mxu0
  %479 = vdwg.mxu0
  %480 = vst [vmem:[%s4] sm:$0xff] %v450
  %481 = vst [vmem:[%s4 + $0x8] sm:$0xff] %v453
  %482 = vst [vmem:[%s4 + $0x10] sm:$0xff] %v458
  %483 = vst [vmem:[%s4 + $0x18] sm:$0xff] %v461
  %484 = vst [vmem:[%s4 + $0x20] sm:$0xff] %v466
  %485 = vst [vmem:[%s4 + $0x28] sm:$0xff] %v469
  %486 = vst [vmem:[%s4 + $0x30] sm:$0xff] %v474
  %487 = vst [vmem:[%s4 + $0x38] sm:$0xff] %v477
  %488 = vadd.xlane.f32.xlu0 %v450
  %v489 = vpop.xlane.xlu0 %488
  %490 = vadd.xlane.f32.xlu0 %v453
  %v491 = vpop.xlane.xlu0 %490
  %492 = vadd.xlane.f32.xlu0 %v458
  %v493 = vpop.xlane.xlu0 %492
  %494 = vadd.xlane.f32.xlu0 %v461
  %v495 = vpop.xlane.xlu0 %494
  %496 = vadd.xlane.f32.xlu0 %v466
  %v497 = vpop.xlane.xlu0 %496
  %498 = vadd.xlane.f32.xlu0 %v469
  %v499 = vpop.xlane.xlu0 %498
  %500 = vadd.xlane.f32.xlu0 %v474
  %v501 = vpop.xlane.xlu0 %500
  %502 = vadd.xlane.f32.xlu0 %v477
  %v503 = vpop.xlane.xlu0 %502
  %vm504 = vcmask 7168
  %505 = vst.msk [vmem:[%s5] sm:$0xff] %vm504, %v489
  %506 = vst.msk [vmem:[%s5 + $0x8] sm:$0xff] %vm504, %v491
  %507 = vst.msk [vmem:[%s5 + $0x10] sm:$0xff] %vm504, %v493
  %508 = vst.msk [vmem:[%s5 + $0x18] sm:$0xff] %vm504, %v495
  %509 = vst.msk [vmem:[%s5 + $0x20] sm:$0xff] %vm504, %v497
  %510 = vst.msk [vmem:[%s5 + $0x28] sm:$0xff] %vm504, %v499
  %511 = vst.msk [vmem:[%s5 + $0x30] sm:$0xff] %vm504, %v501
  %512 = vst.msk [vmem:[%s5 + $0x38] sm:$0xff] %vm504, %v503
  %v513 = vmul.f32 %v450, %v450
  %v514 = vmul.f32 %v453, %v453
  %v515 = vmul.f32 %v458, %v458
  %v516 = vmul.f32 %v461, %v461
  %v517 = vmul.f32 %v466, %v466
  %v518 = vmul.f32 %v469, %v469
  %v519 = vmul.f32 %v474, %v474
  %v520 = vmul.f32 %v477, %v477
  %521 = vadd.xlane.f32.xlu0 %v513
  %v522 = vpop.xlane.xlu0 %521
  %523 = vadd.xlane.f32.xlu0 %v514
  %v524 = vpop.xlane.xlu0 %523
  %525 = vadd.xlane.f32.xlu0 %v515
  %v526 = vpop.xlane.xlu0 %525
  %527 = vadd.xlane.f32.xlu0 %v516
  %v528 = vpop.xlane.xlu0 %527
  %529 = vadd.xlane.f32.xlu0 %v517
  %v530 = vpop.xlane.xlu0 %529
  %531 = vadd.xlane.f32.xlu0 %v518
  %v532 = vpop.xlane.xlu0 %531
  %533 = vadd.xlane.f32.xlu0 %v519
  %v534 = vpop.xlane.xlu0 %533
  %535 = vadd.xlane.f32.xlu0 %v520
  %v536 = vpop.xlane.xlu0 %535
  %vm537 = vcmask 15368
  %538 = vst.msk [vmem:[%s5] sm:$0xff] %vm537, %v522
  %539 = vst.msk [vmem:[%s5 + $0x8] sm:$0xff] %vm537, %v524
  %540 = vst.msk [vmem:[%s5 + $0x10] sm:$0xff] %vm537, %v526
  %541 = vst.msk [vmem:[%s5 + $0x18] sm:$0xff] %vm537, %v528
  %542 = vst.msk [vmem:[%s5 + $0x20] sm:$0xff] %vm537, %v530
  %543 = vst.msk [vmem:[%s5 + $0x28] sm:$0xff] %vm537, %v532
  %544 = vst.msk [vmem:[%s5 + $0x30] sm:$0xff] %vm537, %v534
  %545 = vst.msk [vmem:[%s5 + $0x38] sm:$0xff] %vm537, %v536
  // Predicated region
  $region18: #{frame_generator_forward.7} parent=0 // pred_check
    _
  $region19: #{frame_generator_forward.7} parent=0 // pred_check_branch
    %547 = sbr.rel (0) target = $region21
  $region20: #{frame_generator_forward.7} parent=0 // pred_region
    _
  $region21: #{frame_generator_forward.7} parent=0 // pred_fallthru
    _
  // Predicated region
  $region22: #{frame_generator_forward.7} parent=0 // pred_check
    _
  $region23: #{frame_generator_forward.7} parent=0 // pred_check_branch
    %549 = sbr.rel (0) target = $region25
  $region24: #{frame_generator_forward.7} parent=0 // pred_region
    _
  $region25: #{frame_generator_forward.7} parent=0 // pred_fallthru
    _
  // Predicated region
  $region26: #{frame_generator_forward.7} parent=0 // pred_check
    _
  $region27: #{frame_generator_forward.7} parent=0 // pred_check_branch
    %551 = sbr.rel (0) target = $region29
  $region28: #{frame_generator_forward.7} parent=0 // pred_region
    _
  $region29: #{frame_generator_forward.7} parent=0 // pred_fallthru
    _
  // Predicated region
  $region30: #{frame_generator_forward.7} parent=0 // pred_check
    _
  $region31: #{frame_generator_forward.7} parent=0 // pred_check_branch
    %553 = sbr.rel (0) target = $region33
  $region32: #{frame_generator_forward.7} parent=0 // pred_region
    _
  $region33: #{frame_generator_forward.7} parent=0 // pred_fallthru
    _

// kernel: squeeze.14
$region0: #{squeeze.14}
  %s0 = inlined_call_operand.vmem [shape: f32[32], index: 0, kind: input, shape index: {}]
  %s1 = inlined_call_operand.vmem [shape: f32[4,8], index: 1, kind: output, shape index: {}]
  $region1: #{squeeze.14} parent=0
    #allocation0 [shape = 'u8[4096]{0}', space=vmem, size = 0x1000, scoped, tag = 'scoped mem for output reshape']
    #allocation1 [shape = 'u8[4096]{0}', space=vmem, size = 0x1000, scoped, tag = 'scoped mem for input reshape']
    %s3 = sshllo.u32 0, 1
    %v4 = vld [vmem:[%s0] sm:%s3]
    %5 = vst [vmem:[#allocation1] sm:%s3] %v4
    %v6 = vld [vmem:[#allocation1] sm:$0x1]
    %vm7 = vcmask 64512
    %8 = vst.msk [vmem:[#allocation0] sm:$0x1] %vm7, %v6
    %v9 = vld [vmem:[#allocation1] sm:$0x1]
    %10 = vrot.lane.b32.xlu0 %v9, 120
    %v11 = vpop.permute.xlu0 %10
    %vm12 = vcmask 64512
    %s13 = scalar_lea.vmem [#allocation0], 1
    %14 = vst.msk [vmem:[%s13] sm:$0x1] %vm12, %v11
    %v15 = vld [vmem:[#allocation1] sm:$0x1]
    %16 = vrot.lane.b32.xlu0 %v15, 112
    %v17 = vpop.permute.xlu0 %16
    %vm18 = vcmask 64512
    %s19 = scalar_lea.vmem [#allocation0], 2
    %20 = vst.msk [vmem:[%s19] sm:$0x1] %vm18, %v17
    %v21 = vld [vmem:[#allocation1] sm:$0x1]
    %22 = vrot.lane.b32.xlu0 %v21, 104
    %v23 = vpop.permute.xlu0 %22
    %vm24 = vcmask 64512
    %s25 = scalar_lea.vmem [#allocation0], 3
    %26 = vst.msk [vmem:[%s25] sm:$0x1] %vm24, %v23
    %s28 = sshllo.u32 0, 4
    %v30 = vld [vmem:[#allocation0] sm:%s28]
    %s31 = sshllo.u32 0, 4
    %32 = vst [vmem:[%s1] sm:%s31] %v30

// kernel: tile.38
$region0: #{tile.38}
  #allocation0 [shape = 's32[1]{0}', space=sflag, size = 0x4, scoped, tag = 'scoped memory for tile.38']
  %s0 = inlined_call_operand.vmem [shape: f32[8], index: 0, kind: input, shape index: {}]
  %s1 = inlined_call_operand.vmem [shape: f32[9,8], index: 1, kind: output, shape index: {}]
  // Predicated region
  $region2: #{tile.38} parent=0 // pred_check
    _
  $region3: #{tile.38} parent=0 // pred_check_branch
    %3 = sbr.rel (0) target = $region5
  $region4: #{tile.38} parent=0 // pred_region
    _
  $region5: #{tile.38} parent=0 // pred_fallthru
    _
  %v4 = vld [vmem:[%s0] ss:$0 sm:$0xff]
  %5 = vst [vmem:[%s1] sm:$0xff] %v4
  %s6 = scalar_lea.vmem %s1, 8
  %7 = vst [vmem:[%s6] sm:$0xff] %v4

// kernel: tile.39
$region0: #{tile.39}
  %s0 = inlined_call_operand.vmem [shape: f32[9,8], index: 0, kind: input, shape index: {}]
  %s1 = inlined_call_operand.vmem [shape: f32[1,72], index: 1, kind: output, shape index: {}]
  $region1: #{tile.39} parent=0
    #allocation0 [shape = 'u8[4096]{0}', space=vmem, size = 0x1000, scoped, tag = 'scoped mem for output reshape']
    %v2 = vld [vmem:[%s0] sm:$0x1]
    %vm3 = vcmask 64512
    %4 = vst.msk [vmem:[#allocation0] sm:$0x1] %vm3, %v2
    %s5 = scalar_lea.vmem %s0, 8
    %v6 = vld [vmem:[%s5] sm:$0x1]
    %7 = vrot.lane.b32.xlu0 %v6, 64
    %v8 = vpop.permute.xlu0 %7
    %vm9 = vcmask 589312
    %10 = vst.msk [vmem:[#allocation0] sm:$0x1] %vm9, %v8
    %s11 = scalar_lea.vmem %s0, 7
    %v12 = vld [vmem:[%s11] sm:$0x1]
    %13 = vrot.lane.b32.xlu0 %v12, 56
    %v14 = vpop.permute.xlu0 %13
    %vm15 = vcmask 523712
    %16 = vst.msk [vmem:[#allocation0] sm:$0x1] %vm15, %v14
    %s17 = scalar_lea.vmem %s0, 6
    %v18 = vld [vmem:[%s17] sm:$0x1]
    %19 = vrot.lane.b32.xlu0 %v18, 48
    %v20 = vpop.permute.xlu0 %19
    %vm21 = vcmask 458112
    %22 = vst.msk [vmem:[#allocation0] sm:$0x1] %vm21, %v20
    %s23 = scalar_lea.vmem %s0, 5
    %v24 = vld [vmem:[%s23] sm:$0x1]
    %25 = vrot.lane.b32.xlu0 %v24, 40
    %v26 = vpop.permute.xlu0 %25
    %vm27 = vcmask 392512
    %28 = vst.msk [vmem:[#allocation0] sm:$0x1] %vm27, %v26
    %s29 = scalar_lea.vmem %s0, 4
    %v30 = vld [vmem:[%s29] sm:$0x1]
    %31 = vrot.lane.b32.xlu0 %v30, 32
    %v32 = vpop.permute.xlu0 %31
    %vm33 = vcmask 326912
    %34 = vst.msk [vmem:[#allocation0] sm:$0x1] %vm33, %v32
    %s35 = scalar_lea.vmem %s0, 3
    %v36 = vld [vmem:[%s35] sm:$0x1]
    %37 = vrot.lane.b32.xlu0 %v36, 24
    %v38 = vpop.permute.xlu0 %37
    %vm39 = vcmask 261312
    %40 = vst.msk [vmem:[#allocation0] sm:$0x1] %vm39, %v38
    %s41 = scalar_lea.vmem %s0, 2
    %v42 = vld [vmem:[%s41] sm:$0x1]
    %43 = vrot.lane.b32.xlu0 %v42, 16
    %v44 = vpop.permute.xlu0 %43
    %vm45 = vcmask 195712
    %46 = vst.msk [vmem:[#allocation0] sm:$0x1] %vm45, %v44
    %s47 = scalar_lea.vmem %s0, 1
    %v48 = vld [vmem:[%s47] sm:$0x1]
    %49 = vrot.lane.b32.xlu0 %v48, 8
    %v50 = vpop.permute.xlu0 %49
    %vm51 = vcmask 130112
    %52 = vst.msk [vmem:[#allocation0] sm:$0x1] %vm51, %v50
    %s54 = sshllo.u32 0, 1
    %v56 = vld [vmem:[#allocation0] sm:%s54]
    %s57 = sshllo.u32 0, 1
    %58 = vst [vmem:[%s1] sm:%s57] %v56

// kernel: frame_generator_forward.8
$region0: #{frame_generator_forward.8}
  #allocation0 [shape = 'u32[]', space=smem, size = 0x4, offset = 0x4, fixed_abs, tag = 'smem constant byte address 0x4 - core index']
  #allocation1 [shape = 'u32[144,128]{1,0:T(1,128)}', space=vmem, size = 0x12000, scoped, tag = 'internal scratch']
  %s0 = inlined_call_operand.vmem [shape: bf16[512,144], index: 0, kind: input, shape index: {}]
  %s1 = inlined_call_operand.vmem [shape: f32[1,144], index: 1, kind: input, shape index: {}]
  %s2 = inlined_call_operand.vmem [shape: bf16[32,144], index: 2, kind: input, shape index: {}]
  %s3 = inlined_call_operand.vmem [shape: f32[32,1], index: 3, kind: input, shape index: {}]
  %s4 = inlined_call_operand.vmem [shape: f32[32,512], index: 4, kind: output, shape index: {0}]
  %s5 = inlined_call_operand.vmem [shape: f32[32,2], index: 5, kind: output, shape index: {1}]
  %6 = xla_tuple %s4, %s5
  %s7 = sld [smem:[#allocation0]]
  $region34: #{frame_generator_forward.8} parent=0
    _
  %s9 = ssub.s32 1, %s7
  %s10 = scalar_select 0, %s9, %s7
  // Predicated region
  $region2: #{frame_generator_forward.8} parent=0 // pred_check
    _
  $region3: #{frame_generator_forward.8} parent=0 // pred_check_branch
    %12 = sbr.rel (0) target = $region5
  $region4: #{frame_generator_forward.8} parent=0 // pred_region
    _
  $region5: #{frame_generator_forward.8} parent=0 // pred_fallthru
    _
  // Predicated region
  $region6: #{frame_generator_forward.8} parent=0 // pred_check
    _
  $region7: #{frame_generator_forward.8} parent=0 // pred_check_branch
    %14 = sbr.rel (0) target = $region9
  $region8: #{frame_generator_forward.8} parent=0 // pred_region
    _
  $region9: #{frame_generator_forward.8} parent=0 // pred_fallthru
    _
  // Predicated region
  $region10: #{frame_generator_forward.8} parent=0 // pred_check
    _
  $region11: #{frame_generator_forward.8} parent=0 // pred_check_branch
    %16 = sbr.rel (0) target = $region13
  $region12: #{frame_generator_forward.8} parent=0 // pred_region
    _
  $region13: #{frame_generator_forward.8} parent=0 // pred_fallthru
    _
  // Predicated region
  $region14: #{frame_generator_forward.8} parent=0 // pred_check
    _
  $region15: #{frame_generator_forward.8} parent=0 // pred_check_branch
    %18 = sbr.rel (0) target = $region17
  $region16: #{frame_generator_forward.8} parent=0 // pred_region
    _
  $region17: #{frame_generator_forward.8} parent=0 // pred_fallthru
    _
  %v19 = vld [vmem:[%s0] sm:$0xff]
  %v20 = vld [vmem:[%s0 + $0x8] sm:$0xff]
  %v21 = vld [vmem:[%s0 + $0x10] sm:$0xff]
  %v22 = vld [vmem:[%s0 + $0x18] sm:$0xff]
  %v23 = vld [vmem:[%s0 + $0x20] sm:$0xff]
  %v24 = vld [vmem:[%s0 + $0x28] sm:$0xff]
  %v25 = vld [vmem:[%s0 + $0x30] sm:$0xff]
  %v26 = vld [vmem:[%s0 + $0x38] sm:$0xff]
  %v27 = vld [vmem:[%s0 + $0x40] sm:$0xff]
  %v28 = vld [vmem:[%s0 + $0x48] sm:$0xff]
  %v29 = vld [vmem:[%s0 + $0x50] sm:$0xff]
  %v30 = vld [vmem:[%s0 + $0x58] sm:$0xff]
  %v31 = vld [vmem:[%s0 + $0x60] sm:$0xff]
  %v32 = vld [vmem:[%s0 + $0x68] sm:$0xff]
  %v33 = vld [vmem:[%s0 + $0x70] sm:$0xff]
  %v34 = vld [vmem:[%s0 + $0x78] sm:$0xff]
  %v35 = vld [vmem:[%s0 + $0x80] sm:$0xff]
  %v36 = vld [vmem:[%s0 + $0x88] sm:$0xff]
  %v37 = vld [vmem:[%s0 + $0x90] sm:$0xff]
  %v38 = vld [vmem:[%s0 + $0x98] sm:$0xff]
  %v39 = vld [vmem:[%s0 + $0xa0] sm:$0xff]
  %v40 = vld [vmem:[%s0 + $0xa8] sm:$0xff]
  %v41 = vld [vmem:[%s0 + $0xb0] sm:$0xff]
  %v42 = vld [vmem:[%s0 + $0xb8] sm:$0xff]
  %v43 = vld [vmem:[%s0 + $0xc0] sm:$0xff]
  %v44 = vld [vmem:[%s0 + $0xc8] sm:$0xff]
  %v45 = vld [vmem:[%s0 + $0xd0] sm:$0xff]
  %v46 = vld [vmem:[%s0 + $0xd8] sm:$0xff]
  %v47 = vld [vmem:[%s0 + $0xe0] sm:$0xff]
  %v48 = vld [vmem:[%s0 + $0xe8] sm:$0xff]
  %v49 = vld [vmem:[%s0 + $0xf0] sm:$0xff]
  %v50 = vld [vmem:[%s0 + $0xf8] sm:$0xff]
  %v51 = vld [vmem:[%s0 + $0x100] sm:$0xff]
  %v52 = vld [vmem:[%s0 + $0x108] sm:$0xff]
  %v53 = vld [vmem:[%s0 + $0x110] sm:$0xff]
  %v54 = vld [vmem:[%s0 + $0x118] sm:$0xff]
  %v55 = vld [vmem:[%s0 + $0x120] sm:$0xff]
  %v56 = vld [vmem:[%s0 + $0x128] sm:$0xff]
  %v57 = vld [vmem:[%s0 + $0x130] sm:$0xff]
  %v58 = vld [vmem:[%s0 + $0x138] sm:$0xff]
  %v59 = vld [vmem:[%s0 + $0x140] sm:$0xff]
  %v60 = vld [vmem:[%s0 + $0x148] sm:$0xff]
  %v61 = vld [vmem:[%s0 + $0x150] sm:$0xff]
  %v62 = vld [vmem:[%s0 + $0x158] sm:$0xff]
  %v63 = vld [vmem:[%s0 + $0x160] sm:$0xff]
  %v64 = vld [vmem:[%s0 + $0x168] sm:$0xff]
  %v65 = vld [vmem:[%s0 + $0x170] sm:$0xff]
  %v66 = vld [vmem:[%s0 + $0x178] sm:$0xff]
  %v67 = vld [vmem:[%s0 + $0x180] sm:$0xff]
  %v68 = vld [vmem:[%s0 + $0x188] sm:$0xff]
  %v69 = vld [vmem:[%s0 + $0x190] sm:$0xff]
  %v70 = vld [vmem:[%s0 + $0x198] sm:$0xff]
  %v71 = vld [vmem:[%s0 + $0x1a0] sm:$0xff]
  %v72 = vld [vmem:[%s0 + $0x1a8] sm:$0xff]
  %v73 = vld [vmem:[%s0 + $0x1b0] sm:$0xff]
  %v74 = vld [vmem:[%s0 + $0x1b8] sm:$0xff]
  %v75 = vld [vmem:[%s0 + $0x1c0] sm:$0xff]
  %v76 = vld [vmem:[%s0 + $0x1c8] sm:$0xff]
  %v77 = vld [vmem:[%s0 + $0x1d0] sm:$0xff]
  %v78 = vld [vmem:[%s0 + $0x1d8] sm:$0xff]
  %v79 = vld [vmem:[%s0 + $0x1e0] sm:$0xff]
  %v80 = vld [vmem:[%s0 + $0x1e8] sm:$0xff]
  %v81 = vld [vmem:[%s0 + $0x1f0] sm:$0xff]
  %v82 = vld [vmem:[%s0 + $0x1f8] sm:$0xff]
  %v83 = vld [vmem:[%s1] sm:$0x3]
  %v84 = vunpack.c.l.bf16 %v19
  %v85 = vunpack.c.h.bf16 %v19
  %v86 = vunpack.c.l.bf16 %v20
  %v87 = vunpack.c.h.bf16 %v20
  %v88 = vunpack.c.l.bf16 %v21
  %v89 = vunpack.c.h.bf16 %v21
  %v90 = vunpack.c.l.bf16 %v22
  %v91 = vunpack.c.h.bf16 %v22
  %v92 = vunpack.c.l.bf16 %v23
  %v93 = vunpack.c.h.bf16 %v23
  %v94 = vunpack.c.l.bf16 %v24
  %v95 = vunpack.c.h.bf16 %v24
  %v96 = vunpack.c.l.bf16 %v25
  %v97 = vunpack.c.h.bf16 %v25
  %v98 = vunpack.c.l.bf16 %v26
  %v99 = vunpack.c.h.bf16 %v26
  %v100 = vunpack.c.l.bf16 %v27
  %v101 = vunpack.c.h.bf16 %v27
  %v102 = vunpack.c.l.bf16 %v28
  %v103 = vunpack.c.h.bf16 %v28
  %v104 = vunpack.c.l.bf16 %v29
  %v105 = vunpack.c.h.bf16 %v29
  %v106 = vunpack.c.l.bf16 %v30
  %v107 = vunpack.c.h.bf16 %v30
  %v108 = vunpack.c.l.bf16 %v31
  %v109 = vunpack.c.h.bf16 %v31
  %v110 = vunpack.c.l.bf16 %v32
  %v111 = vunpack.c.h.bf16 %v32
  %v112 = vunpack.c.l.bf16 %v33
  %v113 = vunpack.c.h.bf16 %v33
  %v114 = vunpack.c.l.bf16 %v34
  %v115 = vunpack.c.h.bf16 %v34
  %v116 = vunpack.c.l.bf16 %v35
  %v117 = vunpack.c.h.bf16 %v35
  %v118 = vunpack.c.l.bf16 %v36
  %v119 = vunpack.c.h.bf16 %v36
  %v120 = vunpack.c.l.bf16 %v37
  %v121 = vunpack.c.h.bf16 %v37
  %v122 = vunpack.c.l.bf16 %v38
  %v123 = vunpack.c.h.bf16 %v38
  %v124 = vunpack.c.l.bf16 %v39
  %v125 = vunpack.c.h.bf16 %v39
  %v126 = vunpack.c.l.bf16 %v40
  %v127 = vunpack.c.h.bf16 %v40
  %v128 = vunpack.c.l.bf16 %v41
  %v129 = vunpack.c.h.bf16 %v41
  %v130 = vunpack.c.l.bf16 %v42
  %v131 = vunpack.c.h.bf16 %v42
  %v132 = vunpack.c.l.bf16 %v43
  %v133 = vunpack.c.h.bf16 %v43
  %v134 = vunpack.c.l.bf16 %v44
  %v135 = vunpack.c.h.bf16 %v44
  %v136 = vunpack.c.l.bf16 %v45
  %v137 = vunpack.c.h.bf16 %v45
  %v138 = vunpack.c.l.bf16 %v46
  %v139 = vunpack.c.h.bf16 %v46
  %v140 = vunpack.c.l.bf16 %v47
  %v141 = vunpack.c.h.bf16 %v47
  %v142 = vunpack.c.l.bf16 %v48
  %v143 = vunpack.c.h.bf16 %v48
  %v144 = vunpack.c.l.bf16 %v49
  %v145 = vunpack.c.h.bf16 %v49
  %v146 = vunpack.c.l.bf16 %v50
  %v147 = vunpack.c.h.bf16 %v50
  %v148 = vunpack.c.l.bf16 %v51
  %v149 = vunpack.c.h.bf16 %v51
  %v150 = vunpack.c.l.bf16 %v52
  %v151 = vunpack.c.h.bf16 %v52
  %v152 = vunpack.c.l.bf16 %v53
  %v153 = vunpack.c.h.bf16 %v53
  %v154 = vunpack.c.l.bf16 %v54
  %v155 = vunpack.c.h.bf16 %v54
  %v156 = vunpack.c.l.bf16 %v55
  %v157 = vunpack.c.h.bf16 %v55
  %v158 = vunpack.c.l.bf16 %v56
  %v159 = vunpack.c.h.bf16 %v56
  %v160 = vunpack.c.l.bf16 %v57
  %v161 = vunpack.c.h.bf16 %v57
  %v162 = vunpack.c.l.bf16 %v58
  %v163 = vunpack.c.h.bf16 %v58
  %v164 = vunpack.c.l.bf16 %v59
  %v165 = vunpack.c.h.bf16 %v59
  %v166 = vunpack.c.l.bf16 %v60
  %v167 = vunpack.c.h.bf16 %v60
  %v168 = vunpack.c.l.bf16 %v61
  %v169 = vunpack.c.h.bf16 %v61
  %v170 = vunpack.c.l.bf16 %v62
  %v171 = vunpack.c.h.bf16 %v62
  %v172 = vunpack.c.l.bf16 %v63
  %v173 = vunpack.c.h.bf16 %v63
  %v174 = vunpack.c.l.bf16 %v64
  %v175 = vunpack.c.h.bf16 %v64
  %v176 = vunpack.c.l.bf16 %v65
  %v177 = vunpack.c.h.bf16 %v65
  %v178 = vunpack.c.l.bf16 %v66
  %v179 = vunpack.c.h.bf16 %v66
  %v180 = vunpack.c.l.bf16 %v67
  %v181 = vunpack.c.h.bf16 %v67
  %v182 = vunpack.c.l.bf16 %v68
  %v183 = vunpack.c.h.bf16 %v68
  %v184 = vunpack.c.l.bf16 %v69
  %v185 = vunpack.c.h.bf16 %v69
  %v186 = vunpack.c.l.bf16 %v70
  %v187 = vunpack.c.h.bf16 %v70
  %v188 = vunpack.c.l.bf16 %v71
  %v189 = vunpack.c.h.bf16 %v71
  %v190 = vunpack.c.l.bf16 %v72
  %v191 = vunpack.c.h.bf16 %v72
  %v192 = vunpack.c.l.bf16 %v73
  %v193 = vunpack.c.h.bf16 %v73
  %v194 = vunpack.c.l.bf16 %v74
  %v195 = vunpack.c.h.bf16 %v74
  %v196 = vunpack.c.l.bf16 %v75
  %v197 = vunpack.c.h.bf16 %v75
  %v198 = vunpack.c.l.bf16 %v76
  %v199 = vunpack.c.h.bf16 %v76
  %v200 = vunpack.c.l.bf16 %v77
  %v201 = vunpack.c.h.bf16 %v77
  %v202 = vunpack.c.l.bf16 %v78
  %v203 = vunpack.c.h.bf16 %v78
  %v204 = vunpack.c.l.bf16 %v79
  %v205 = vunpack.c.h.bf16 %v79
  %v206 = vunpack.c.l.bf16 %v80
  %v207 = vunpack.c.h.bf16 %v80
  %v208 = vunpack.c.l.bf16 %v81
  %v209 = vunpack.c.h.bf16 %v81
  %v210 = vunpack.c.l.bf16 %v82
  %v211 = vunpack.c.h.bf16 %v82
  %v213 = vlaneseq
  %v214 = vshrl.u32 %v213, 7
  %v215 = vsub.s32 0, %v214
  %v216 = vrot.slane %v83, %v215
  %v217 = vlaneseq
  %v218 = vshrl.u32 %v217, 7
  %v219 = vsub.s32 1, %v218
  %v220 = vrot.slane %v83, %v219
  %v223 = vmul.f32 %v84, %v216
  %v224 = vmul.f32 %v85, %v220
  %v225 = vmul.f32 %v86, %v216
  %v226 = vmul.f32 %v87, %v220
  %v227 = vmul.f32 %v88, %v216
  %v228 = vmul.f32 %v89, %v220
  %v229 = vmul.f32 %v90, %v216
  %v230 = vmul.f32 %v91, %v220
  %v231 = vmul.f32 %v92, %v216
  %v232 = vmul.f32 %v93, %v220
  %v233 = vmul.f32 %v94, %v216
  %v234 = vmul.f32 %v95, %v220
  %v235 = vmul.f32 %v96, %v216
  %v236 = vmul.f32 %v97, %v220
  %v237 = vmul.f32 %v98, %v216
  %v238 = vmul.f32 %v99, %v220
  %v239 = vmul.f32 %v100, %v216
  %v240 = vmul.f32 %v101, %v220
  %v241 = vmul.f32 %v102, %v216
  %v242 = vmul.f32 %v103, %v220
  %v243 = vmul.f32 %v104, %v216
  %v244 = vmul.f32 %v105, %v220
  %v245 = vmul.f32 %v106, %v216
  %v246 = vmul.f32 %v107, %v220
  %v247 = vmul.f32 %v108, %v216
  %v248 = vmul.f32 %v109, %v220
  %v249 = vmul.f32 %v110, %v216
  %v250 = vmul.f32 %v111, %v220
  %v251 = vmul.f32 %v112, %v216
  %v252 = vmul.f32 %v113, %v220
  %v253 = vmul.f32 %v114, %v216
  %v254 = vmul.f32 %v115, %v220
  %v255 = vmul.f32 %v116, %v216
  %v256 = vmul.f32 %v117, %v220
  %v257 = vmul.f32 %v118, %v216
  %v258 = vmul.f32 %v119, %v220
  %v259 = vmul.f32 %v120, %v216
  %v260 = vmul.f32 %v121, %v220
  %v261 = vmul.f32 %v122, %v216
  %v262 = vmul.f32 %v123, %v220
  %v263 = vmul.f32 %v124, %v216
  %v264 = vmul.f32 %v125, %v220
  %v265 = vmul.f32 %v126, %v216
  %v266 = vmul.f32 %v127, %v220
  %v267 = vmul.f32 %v128, %v216
  %v268 = vmul.f32 %v129, %v220
  %v269 = vmul.f32 %v130, %v216
  %v270 = vmul.f32 %v131, %v220
  %v271 = vmul.f32 %v132, %v216
  %v272 = vmul.f32 %v133, %v220
  %v273 = vmul.f32 %v134, %v216
  %v274 = vmul.f32 %v135, %v220
  %v275 = vmul.f32 %v136, %v216
  %v276 = vmul.f32 %v137, %v220
  %v277 = vmul.f32 %v138, %v216
  %v278 = vmul.f32 %v139, %v220
  %v279 = vmul.f32 %v140, %v216
  %v280 = vmul.f32 %v141, %v220
  %v281 = vmul.f32 %v142, %v216
  %v282 = vmul.f32 %v143, %v220
  %v283 = vmul.f32 %v144, %v216
  %v284 = vmul.f32 %v145, %v220
  %v285 = vmul.f32 %v146, %v216
  %v286 = vmul.f32 %v147, %v220
  %v287 = vmul.f32 %v148, %v216
  %v288 = vmul.f32 %v149, %v220
  %v289 = vmul.f32 %v150, %v216
  %v290 = vmul.f32 %v151, %v220
  %v291 = vmul.f32 %v152, %v216
  %v292 = vmul.f32 %v153, %v220
  %v293 = vmul.f32 %v154, %v216
  %v294 = vmul.f32 %v155, %v220
  %v295 = vmul.f32 %v156, %v216
  %v296 = vmul.f32 %v157, %v220
  %v297 = vmul.f32 %v158, %v216
  %v298 = vmul.f32 %v159, %v220
  %v299 = vmul.f32 %v160, %v216
  %v300 = vmul.f32 %v161, %v220
  %v301 = vmul.f32 %v162, %v216
  %v302 = vmul.f32 %v163, %v220
  %v303 = vmul.f32 %v164, %v216
  %v304 = vmul.f32 %v165, %v220
  %v305 = vmul.f32 %v166, %v216
  %v306 = vmul.f32 %v167, %v220
  %v307 = vmul.f32 %v168, %v216
  %v308 = vmul.f32 %v169, %v220
  %v309 = vmul.f32 %v170, %v216
  %v310 = vmul.f32 %v171, %v220
  %v311 = vmul.f32 %v172, %v216
  %v312 = vmul.f32 %v173, %v220
  %v313 = vmul.f32 %v174, %v216
  %v314 = vmul.f32 %v175, %v220
  %v315 = vmul.f32 %v176, %v216
  %v316 = vmul.f32 %v177, %v220
  %v317 = vmul.f32 %v178, %v216
  %v318 = vmul.f32 %v179, %v220
  %v319 = vmul.f32 %v180, %v216
  %v320 = vmul.f32 %v181, %v220
  %v321 = vmul.f32 %v182, %v216
  %v322 = vmul.f32 %v183, %v220
  %v323 = vmul.f32 %v184, %v216
  %v324 = vmul.f32 %v185, %v220
  %v325 = vmul.f32 %v186, %v216
  %v326 = vmul.f32 %v187, %v220
  %v327 = vmul.f32 %v188, %v216
  %v328 = vmul.f32 %v189, %v220
  %v329 = vmul.f32 %v190, %v216
  %v330 = vmul.f32 %v191, %v220
  %v331 = vmul.f32 %v192, %v216
  %v332 = vmul.f32 %v193, %v220
  %v333 = vmul.f32 %v194, %v216
  %v334 = vmul.f32 %v195, %v220
  %v335 = vmul.f32 %v196, %v216
  %v336 = vmul.f32 %v197, %v220
  %v337 = vmul.f32 %v198, %v216
  %v338 = vmul.f32 %v199, %v220
  %v339 = vmul.f32 %v200, %v216
  %v340 = vmul.f32 %v201, %v220
  %v341 = vmul.f32 %v202, %v216
  %v342 = vmul.f32 %v203, %v220
  %v343 = vmul.f32 %v204, %v216
  %v344 = vmul.f32 %v205, %v220
  %v345 = vmul.f32 %v206, %v216
  %v346 = vmul.f32 %v207, %v220
  %v347 = vmul.f32 %v208, %v216
  %v348 = vmul.f32 %v209, %v220
  %v349 = vmul.f32 %v210, %v216
  %v350 = vmul.f32 %v211, %v220
  %v351 = vpack.c.bf16 %v225, %v223
  %v352 = vpack.c.bf16 %v226, %v224
  %v353 = vpack.c.bf16 %v229, %v227
  %v354 = vpack.c.bf16 %v230, %v228
  %v355 = vpack.c.bf16 %v233, %v231
  %v356 = vpack.c.bf16 %v234, %v232
  %v357 = vpack.c.bf16 %v237, %v235
  %v358 = vpack.c.bf16 %v238, %v236
  %v359 = vpack.c.bf16 %v241, %v239
  %v360 = vpack.c.bf16 %v242, %v240
  %v361 = vpack.c.bf16 %v245, %v243
  %v362 = vpack.c.bf16 %v246, %v244
  %v363 = vpack.c.bf16 %v249, %v247
  %v364 = vpack.c.bf16 %v250, %v248
  %v365 = vpack.c.bf16 %v253, %v251
  %v366 = vpack.c.bf16 %v254, %v252
  %v367 = vpack.c.bf16 %v257, %v255
  %v368 = vpack.c.bf16 %v258, %v256
  %v369 = vpack.c.bf16 %v261, %v259
  %v370 = vpack.c.bf16 %v262, %v260
  %v371 = vpack.c.bf16 %v265, %v263
  %v372 = vpack.c.bf16 %v266, %v264
  %v373 = vpack.c.bf16 %v269, %v267
  %v374 = vpack.c.bf16 %v270, %v268
  %v375 = vpack.c.bf16 %v273, %v271
  %v376 = vpack.c.bf16 %v274, %v272
  %v377 = vpack.c.bf16 %v277, %v275
  %v378 = vpack.c.bf16 %v278, %v276
  %v379 = vpack.c.bf16 %v281, %v279
  %v380 = vpack.c.bf16 %v282, %v280
  %v381 = vpack.c.bf16 %v285, %v283
  %v382 = vpack.c.bf16 %v286, %v284
  %v383 = vpack.c.bf16 %v289, %v287
  %v384 = vpack.c.bf16 %v290, %v288
  %v385 = vpack.c.bf16 %v293, %v291
  %v386 = vpack.c.bf16 %v294, %v292
  %v387 = vpack.c.bf16 %v297, %v295
  %v388 = vpack.c.bf16 %v298, %v296
  %v389 = vpack.c.bf16 %v301, %v299
  %v390 = vpack.c.bf16 %v302, %v300
  %v391 = vpack.c.bf16 %v305, %v303
  %v392 = vpack.c.bf16 %v306, %v304
  %v393 = vpack.c.bf16 %v309, %v307
  %v394 = vpack.c.bf16 %v310, %v308
  %v395 = vpack.c.bf16 %v313, %v311
  %v396 = vpack.c.bf16 %v314, %v312
  %v397 = vpack.c.bf16 %v317, %v315
  %v398 = vpack.c.bf16 %v318, %v316
  %v399 = vpack.c.bf16 %v321, %v319
  %v400 = vpack.c.bf16 %v322, %v320
  %v401 = vpack.c.bf16 %v325, %v323
  %v402 = vpack.c.bf16 %v326, %v324
  %v403 = vpack.c.bf16 %v329, %v327
  %v404 = vpack.c.bf16 %v330, %v328
  %v405 = vpack.c.bf16 %v333, %v331
  %v406 = vpack.c.bf16 %v334, %v332
  %v407 = vpack.c.bf16 %v337, %v335
  %v408 = vpack.c.bf16 %v338, %v336
  %v409 = vpack.c.bf16 %v341, %v339
  %v410 = vpack.c.bf16 %v342, %v340
  %v411 = vpack.c.bf16 %v345, %v343
  %v412 = vpack.c.bf16 %v346, %v344
  %v413 = vpack.c.bf16 %v349, %v347
  %v414 = vpack.c.bf16 %v350, %v348
  %v415 = vld [vmem:[%s2] sm:$0xff]
  %v416 = vld [vmem:[%s2 + $0x8] sm:$0xff]
  %v417 = vld [vmem:[%s2 + $0x10] sm:$0xff]
  %v418 = vld [vmem:[%s2 + $0x18] sm:$0xff]
  %v419 = vld [vmem:[%s3] sm:$0xff]
  %v420 = vld [vmem:[%s3 + $0x8] sm:$0xff]
  %v421 = vld [vmem:[%s3 + $0x10] sm:$0xff]
  %v422 = vld [vmem:[%s3 + $0x18] sm:$0xff]
  %424 = vset.pattern.permute.xlu0 0
  %425 = vperm.xlu0 %424, %v419
  %v426 = vpop.permute.xlu0 %425
  %429 = vset.pattern.permute.xlu0 0
  %430 = vperm.xlu0 %429, %v420
  %v431 = vpop.permute.xlu0 %430
  %434 = vset.pattern.permute.xlu0 0
  %435 = vperm.xlu0 %434, %v421
  %v436 = vpop.permute.xlu0 %435
  %439 = vset.pattern.permute.xlu0 0
  %440 = vperm.xlu0 %439, %v422
  %v441 = vpop.permute.xlu0 %440
  %v447 = vunpack.c.l.b16 %v415
  %v448 = vunpack.c.h.b16 %v415
  %v449 = vunpack.c.l.b16 %v416
  %v450 = vunpack.c.h.b16 %v416
  %v451 = vunpack.c.l.b16 %v417
  %v452 = vunpack.c.h.b16 %v417
  %v453 = vunpack.c.l.b16 %v418
  %v454 = vunpack.c.h.b16 %v418
  %v455 = vpack.c.b16 %v449, %v447
  %v456 = vpack.c.b16 %v450, %v448
  %v457 = vpack.c.b16 %v453, %v451
  %v458 = vpack.c.b16 %v454, %v452
  %vm461 = vcmask 130048
  %v463 = vsel %vm461, %v456, 0
  %v466 = vsel %vm461, %v458, 0
  %v469 = vsel %vm461, %v352, 0
  %v472 = vsel %vm461, %v354, 0
  %v475 = vsel %vm461, %v356, 0
  %v478 = vsel %vm461, %v358, 0
  %v481 = vsel %vm461, %v360, 0
  %v484 = vsel %vm461, %v362, 0
  %v487 = vsel %vm461, %v364, 0
  %v490 = vsel %vm461, %v366, 0
  %v493 = vsel %vm461, %v368, 0
  %v496 = vsel %vm461, %v370, 0
  %v499 = vsel %vm461, %v372, 0
  %v502 = vsel %vm461, %v374, 0
  %v505 = vsel %vm461, %v376, 0
  %v508 = vsel %vm461, %v378, 0
  %v511 = vsel %vm461, %v380, 0
  %v514 = vsel %vm461, %v382, 0
  %v517 = vsel %vm461, %v384, 0
  %v520 = vsel %vm461, %v386, 0
  %v523 = vsel %vm461, %v388, 0
  %v526 = vsel %vm461, %v390, 0
  %v529 = vsel %vm461, %v392, 0
  %v532 = vsel %vm461, %v394, 0
  %v535 = vsel %vm461, %v396, 0
  %v538 = vsel %vm461, %v398, 0
  %v541 = vsel %vm461, %v400, 0
  %v544 = vsel %vm461, %v402, 0
  %v547 = vsel %vm461, %v404, 0
  %v550 = vsel %vm461, %v406, 0
  %v553 = vsel %vm461, %v408, 0
  %v556 = vsel %vm461, %v410, 0
  %v559 = vsel %vm461, %v412, 0
  %v562 = vsel %vm461, %v414, 0
  %564 = vmatprep.subr.bf16.mxu0 %v469
  %565 = vmatpush1.bf16.xpose.msra.mxu0 %v351
  %566 = vmatprep.subr.bf16.mxu0 %v472
  %567 = vmatpush1.bf16.xpose.msra.mxu0 %v353
  %568 = vmatprep.subr.bf16.mxu0 %v475
  %569 = vmatpush1.bf16.xpose.msra.mxu0 %v355
  %570 = vmatprep.subr.bf16.mxu0 %v478
  %571 = vmatpush1.bf16.xpose.msra.mxu0 %v357
  %572 = vmatprep.subr.bf16.mxu0 %v481
  %573 = vmatpush1.bf16.xpose.msra.mxu0 %v359
  %574 = vmatprep.subr.bf16.mxu0 %v484
  %575 = vmatpush1.bf16.xpose.msra.mxu0 %v361
  %576 = vmatprep.subr.bf16.mxu0 %v487
  %577 = vmatpush1.bf16.xpose.msra.mxu0 %v363
  %578 = vmatprep.subr.bf16.mxu0 %v490
  %579 = vmatpush1.bf16.xpose.msra.mxu0 %v365
  %580 = vmatprep.subr.bf16.mxu0 %v493
  %581 = vmatpush1.bf16.xpose.msra.mxu0 %v367
  %582 = vmatprep.subr.bf16.mxu0 %v496
  %583 = vmatpush1.bf16.xpose.msra.mxu0 %v369
  %584 = vmatprep.subr.bf16.mxu0 %v499
  %585 = vmatpush1.bf16.xpose.msra.mxu0 %v371
  %586 = vmatprep.subr.bf16.mxu0 %v502
  %587 = vmatpush1.bf16.xpose.msra.mxu0 %v373
  %588 = vmatprep.subr.bf16.mxu0 %v505
  %589 = vmatpush1.bf16.xpose.msra.mxu0 %v375
  %590 = vmatprep.subr.bf16.mxu0 %v508
  %591 = vmatpush1.bf16.xpose.msra.mxu0 %v377
  %592 = vmatprep.subr.bf16.mxu0 %v511
  %593 = vmatpush1.bf16.xpose.msra.mxu0 %v379
  %594 = vmatprep.subr.bf16.mxu0 %v514
  %595 = vmatpush1.bf16.xpose.msra.mxu0 %v381
  %596 = vmatprep.mubr.bf16.mxu0 %v463
  %597 = vmatmul.mubr.bf16.gmra.mrb[0].mxu0 %v455
  %v598 = vpop.f32.mrb[0].mxu0
  %v599 = vadd.f32 %v426, %v598
  %v600 = vpop.f32.mrb[0].mxu0
  %v601 = vadd.f32 %v426, %v600
  %v602 = vpop.f32.mrb[0].mxu0
  %v603 = vadd.f32 %v431, %v602
  %v604 = vpop.f32.mrb[0].mxu0
  %v605 = vadd.f32 %v431, %v604
  %606 = vmatprep.mubr.bf16.mxu0 %v466
  %607 = vmatmul.mubr.bf16.gmra.mrb[0].mxu0 %v457
  %v608 = vpop.f32.mrb[0].mxu0
  %v609 = vadd.f32 %v436, %v608
  %v610 = vpop.f32.mrb[0].mxu0
  %v611 = vadd.f32 %v436, %v610
  %v612 = vpop.f32.mrb[0].mxu0
  %v613 = vadd.f32 %v441, %v612
  %v614 = vpop.f32.mrb[0].mxu0
  %v615 = vadd.f32 %v441, %v614
  %616 = vdwg.mxu0
  %617 = vmatprep.subr.bf16.mxu0 %v517
  %618 = vmatpush1.bf16.xpose.msra.mxu0 %v383
  %619 = vmatprep.subr.bf16.mxu0 %v520
  %620 = vmatpush1.bf16.xpose.msra.mxu0 %v385
  %621 = vmatprep.subr.bf16.mxu0 %v523
  %622 = vmatpush1.bf16.xpose.msra.mxu0 %v387
  %623 = vmatprep.subr.bf16.mxu0 %v526
  %624 = vmatpush1.bf16.xpose.msra.mxu0 %v389
  %625 = vmatprep.subr.bf16.mxu0 %v529
  %626 = vmatpush1.bf16.xpose.msra.mxu0 %v391
  %627 = vmatprep.subr.bf16.mxu0 %v532
  %628 = vmatpush1.bf16.xpose.msra.mxu0 %v393
  %629 = vmatprep.subr.bf16.mxu0 %v535
  %630 = vmatpush1.bf16.xpose.msra.mxu0 %v395
  %631 = vmatprep.subr.bf16.mxu0 %v538
  %632 = vmatpush1.bf16.xpose.msra.mxu0 %v397
  %633 = vmatprep.subr.bf16.mxu0 %v541
  %634 = vmatpush1.bf16.xpose.msra.mxu0 %v399
  %635 = vmatprep.subr.bf16.mxu0 %v544
  %636 = vmatpush1.bf16.xpose.msra.mxu0 %v401
  %637 = vmatprep.subr.bf16.mxu0 %v547
  %638 = vmatpush1.bf16.xpose.msra.mxu0 %v403
  %639 = vmatprep.subr.bf16.mxu0 %v550
  %640 = vmatpush1.bf16.xpose.msra.mxu0 %v405
  %641 = vmatprep.subr.bf16.mxu0 %v553
  %642 = vmatpush1.bf16.xpose.msra.mxu0 %v407
  %643 = vmatprep.subr.bf16.mxu0 %v556
  %644 = vmatpush1.bf16.xpose.msra.mxu0 %v409
  %645 = vmatprep.subr.bf16.mxu0 %v559
  %646 = vmatpush1.bf16.xpose.msra.mxu0 %v411
  %647 = vmatprep.subr.bf16.mxu0 %v562
  %648 = vmatpush1.bf16.xpose.msra.mxu0 %v413
  %649 = vmatprep.mubr.bf16.mxu0 %v463
  %650 = vmatmul.mubr.bf16.gmra.mrb[0].mxu0 %v455
  %v651 = vpop.f32.mrb[0].mxu0
  %v652 = vadd.f32 %v426, %v651
  %v653 = vpop.f32.mrb[0].mxu0
  %v654 = vadd.f32 %v426, %v653
  %v655 = vpop.f32.mrb[0].mxu0
  %v656 = vadd.f32 %v431, %v655
  %v657 = vpop.f32.mrb[0].mxu0
  %v658 = vadd.f32 %v431, %v657
  %659 = vmatprep.mubr.bf16.mxu0 %v466
  %660 = vmatmul.mubr.bf16.gmra.mrb[0].mxu0 %v457
  %v661 = vpop.f32.mrb[0].mxu0
  %v662 = vadd.f32 %v436, %v661
  %v663 = vpop.f32.mrb[0].mxu0
  %v664 = vadd.f32 %v436, %v663
  %v665 = vpop.f32.mrb[0].mxu0
  %v666 = vadd.f32 %v441, %v665
  %v667 = vpop.f32.mrb[0].mxu0
  %v668 = vadd.f32 %v441, %v667
  %669 = vdwg.mxu0
  %670 = vst [vmem:[%s4] sm:$0xff] %v599
  %671 = vst [vmem:[%s4 + $0x8] sm:$0xff] %v601
  %672 = vst [vmem:[%s4 + $0x10] sm:$0xff] %v652
  %673 = vst [vmem:[%s4 + $0x18] sm:$0xff] %v654
  %674 = vst [vmem:[%s4 + $0x20] sm:$0xff] %v603
  %675 = vst [vmem:[%s4 + $0x28] sm:$0xff] %v605
  %676 = vst [vmem:[%s4 + $0x30] sm:$0xff] %v656
  %677 = vst [vmem:[%s4 + $0x38] sm:$0xff] %v658
  %678 = vst [vmem:[%s4 + $0x40] sm:$0xff] %v609
  %679 = vst [vmem:[%s4 + $0x48] sm:$0xff] %v611
  %680 = vst [vmem:[%s4 + $0x50] sm:$0xff] %v662
  %681 = vst [vmem:[%s4 + $0x58] sm:$0xff] %v664
  %682 = vst [vmem:[%s4 + $0x60] sm:$0xff] %v613
  %683 = vst [vmem:[%s4 + $0x68] sm:$0xff] %v615
  %684 = vst [vmem:[%s4 + $0x70] sm:$0xff] %v666
  %685 = vst [vmem:[%s4 + $0x78] sm:$0xff] %v668
  %v686 = vadd.f32 %v599, %v601
  %v687 = vadd.f32 %v686, %v652
  %v688 = vadd.f32 %v687, %v654
  %689 = vadd.xlane.f32.xlu0 %v688
  %v690 = vpop.xlane.xlu0 %689
  %v691 = vadd.f32 %v603, %v605
  %v692 = vadd.f32 %v691, %v656
  %v693 = vadd.f32 %v692, %v658
  %694 = vadd.xlane.f32.xlu0 %v693
  %v695 = vpop.xlane.xlu0 %694
  %v696 = vadd.f32 %v609, %v611
  %v697 = vadd.f32 %v696, %v662
  %v698 = vadd.f32 %v697, %v664
  %699 = vadd.xlane.f32.xlu0 %v698
  %v700 = vpop.xlane.xlu0 %699
  %v701 = vadd.f32 %v613, %v615
  %v702 = vadd.f32 %v701, %v666
  %v703 = vadd.f32 %v702, %v668
  %704 = vadd.xlane.f32.xlu0 %v703
  %v705 = vpop.xlane.xlu0 %704
  %vm706 = vcmask 7168
  %707 = vst.msk [vmem:[%s5] sm:$0xff] %vm706, %v690
  %708 = vst.msk [vmem:[%s5 + $0x8] sm:$0xff] %vm706, %v695
  %709 = vst.msk [vmem:[%s5 + $0x10] sm:$0xff] %vm706, %v700
  %710 = vst.msk [vmem:[%s5 + $0x18] sm:$0xff] %vm706, %v705
  %v711 = vmul.f32 %v599, %v599
  %v712 = vmul.f32 %v601, %v601
  %v713 = vmul.f32 %v652, %v652
  %v714 = vmul.f32 %v654, %v654
  %v715 = vmul.f32 %v603, %v603
  %v716 = vmul.f32 %v605, %v605
  %v717 = vmul.f32 %v656, %v656
  %v718 = vmul.f32 %v658, %v658
  %v719 = vmul.f32 %v609, %v609
  %v720 = vmul.f32 %v611, %v611
  %v721 = vmul.f32 %v662, %v662
  %v722 = vmul.f32 %v664, %v664
  %v723 = vmul.f32 %v613, %v613
  %v724 = vmul.f32 %v615, %v615
  %v725 = vmul.f32 %v666, %v666
  %v726 = vmul.f32 %v668, %v668
  %v727 = vadd.f32 %v711, %v712
  %v728 = vadd.f32 %v727, %v713
  %v729 = vadd.f32 %v728, %v714
  %730 = vadd.xlane.f32.xlu0 %v729
  %v731 = vpop.xlane.xlu0 %730
  %v732 = vadd.f32 %v715, %v716
  %v733 = vadd.f32 %v732, %v717
  %v734 = vadd.f32 %v733, %v718
  %735 = vadd.xlane.f32.xlu0 %v734
  %v736 = vpop.xlane.xlu0 %735
  %v737 = vadd.f32 %v719, %v720
  %v738 = vadd.f32 %v737, %v721
  %v739 = vadd.f32 %v738, %v722
  %740 = vadd.xlane.f32.xlu0 %v739
  %v741 = vpop.xlane.xlu0 %740
  %v742 = vadd.f32 %v723, %v724
  %v743 = vadd.f32 %v742, %v725
  %v744 = vadd.f32 %v743, %v726
  %745 = vadd.xlane.f32.xlu0 %v744
  %v746 = vpop.xlane.xlu0 %745
  %vm747 = vcmask 15368
  %748 = vst.msk [vmem:[%s5] sm:$0xff] %vm747, %v731
  %749 = vst.msk [vmem:[%s5 + $0x8] sm:$0xff] %vm747, %v736
  %750 = vst.msk [vmem:[%s5 + $0x10] sm:$0xff] %vm747, %v741
  %751 = vst.msk [vmem:[%s5 + $0x18] sm:$0xff] %vm747, %v746
  // Predicated region
  $region18: #{frame_generator_forward.8} parent=0 // pred_check
    _
  $region19: #{frame_generator_forward.8} parent=0 // pred_check_branch
    %753 = sbr.rel (0) target = $region21
  $region20: #{frame_generator_forward.8} parent=0 // pred_region
    _
  $region21: #{frame_generator_forward.8} parent=0 // pred_fallthru
    _
  // Predicated region
  $region22: #{frame_generator_forward.8} parent=0 // pred_check
    _
  $region23: #{frame_generator_forward.8} parent=0 // pred_check_branch
    %755 = sbr.rel (0) target = $region25
  $region24: #{frame_generator_forward.8} parent=0 // pred_region
    _
  $region25: #{frame_generator_forward.8} parent=0 // pred_fallthru
    _
  // Predicated region
  $region26: #{frame_generator_forward.8} parent=0 // pred_check
    _
  $region27: #{frame_generator_forward.8} parent=0 // pred_check_branch
    %757 = sbr.rel (0) target = $region29
  $region28: #{frame_generator_forward.8} parent=0 // pred_region
    _
  $region29: #{frame_generator_forward.8} parent=0 // pred_fallthru
    _
  // Predicated region
  $region30: #{frame_generator_forward.8} parent=0 // pred_check
    _
  $region31: #{frame_generator_forward.8} parent=0 // pred_check_branch
    %759 = sbr.rel (0) target = $region33
  $region32: #{frame_generator_forward.8} parent=0 // pred_region
    _
  $region33: #{frame_generator_forward.8} parent=0 // pred_fallthru
    _

// kernel: frame_generator_forward.9
$region0: #{frame_generator_forward.9}
  #allocation0 [shape = 'u32[]', space=smem, size = 0x4, offset = 0x4, fixed_abs, tag = 'smem constant byte address 0x4 - core index']
  #allocation1 [shape = 'u32[144,128]{1,0:T(1,128)}', space=vmem, size = 0x12000, scoped, tag = 'internal scratch']
  %s0 = inlined_call_operand.vmem [shape: bf16[2048,72], index: 0, kind: input, shape index: {}]
  %s1 = inlined_call_operand.vmem [shape: f32[1,72], index: 1, kind: input, shape index: {}]
  %s2 = inlined_call_operand.vmem [shape: bf16[12,72], index: 2, kind: input, shape index: {}]
  %s3 = inlined_call_operand.vmem [shape: f32[12,1], index: 3, kind: input, shape index: {}]
  %s4 = inlined_call_operand.vmem [shape: f32[12,2048], index: 4, kind: output, shape index: {}]
  %s5 = sld [smem:[#allocation0]]
  $region26: #{frame_generator_forward.9} parent=0
    _
  %s7 = ssub.s32 1, %s5
  %s8 = scalar_select 0, %s7, %s5
  // Predicated region
  $region2: #{frame_generator_forward.9} parent=0 // pred_check
    _
  $region3: #{frame_generator_forward.9} parent=0 // pred_check_branch
    %10 = sbr.rel (0) target = $region5
  $region4: #{frame_generator_forward.9} parent=0 // pred_region
    _
  $region5: #{frame_generator_forward.9} parent=0 // pred_fallthru
    _
  // Predicated region
  $region6: #{frame_generator_forward.9} parent=0 // pred_check
    _
  $region7: #{frame_generator_forward.9} parent=0 // pred_check_branch
    %12 = sbr.rel (0) target = $region9
  $region8: #{frame_generator_forward.9} parent=0 // pred_region
    _
  $region9: #{frame_generator_forward.9} parent=0 // pred_fallthru
    _
  // Predicated region
  $region10: #{frame_generator_forward.9} parent=0 // pred_check
    _
  $region11: #{frame_generator_forward.9} parent=0 // pred_check_branch
    %14 = sbr.rel (0) target = $region13
  $region12: #{frame_generator_forward.9} parent=0 // pred_region
    _
  $region13: #{frame_generator_forward.9} parent=0 // pred_fallthru
    _
  // Predicated region
  $region14: #{frame_generator_forward.9} parent=0 // pred_check
    _
  $region15: #{frame_generator_forward.9} parent=0 // pred_check_branch
    %16 = sbr.rel (0) target = $region17
  $region16: #{frame_generator_forward.9} parent=0 // pred_region
    _
  $region17: #{frame_generator_forward.9} parent=0 // pred_fallthru
    _
  %v18 = vld [vmem:[%s0] sm:$0xf]
  %v19 = vld [vmem:[%s0 + $0x4] sm:$0xf]
  %v20 = vld [vmem:[%s0 + $0x8] sm:$0xf]
  %v21 = vld [vmem:[%s0 + $0xc] sm:$0xf]
  %v22 = vld [vmem:[%s0 + $0x10] sm:$0xf]
  %v23 = vld [vmem:[%s0 + $0x14] sm:$0xf]
  %v24 = vld [vmem:[%s0 + $0x18] sm:$0xf]
  %v25 = vld [vmem:[%s0 + $0x1c] sm:$0xf]
  %v26 = vld [vmem:[%s0 + $0x20] sm:$0xf]
  %v27 = vld [vmem:[%s0 + $0x24] sm:$0xf]
  %v28 = vld [vmem:[%s0 + $0x28] sm:$0xf]
  %v29 = vld [vmem:[%s0 + $0x2c] sm:$0xf]
  %v30 = vld [vmem:[%s0 + $0x30] sm:$0xf]
  %v31 = vld [vmem:[%s0 + $0x34] sm:$0xf]
  %v32 = vld [vmem:[%s0 + $0x38] sm:$0xf]
  %v33 = vld [vmem:[%s0 + $0x3c] sm:$0xf]
  %v34 = vld [vmem:[%s0 + $0x40] sm:$0xf]
  %v35 = vld [vmem:[%s0 + $0x44] sm:$0xf]
  %v36 = vld [vmem:[%s0 + $0x48] sm:$0xf]
  %v37 = vld [vmem:[%s0 + $0x4c] sm:$0xf]
  %v38 = vld [vmem:[%s0 + $0x50] sm:$0xf]
  %v39 = vld [vmem:[%s0 + $0x54] sm:$0xf]
  %v40 = vld [vmem:[%s0 + $0x58] sm:$0xf]
  %v41 = vld [vmem:[%s0 + $0x5c] sm:$0xf]
  %v42 = vld [vmem:[%s0 + $0x60] sm:$0xf]
  %v43 = vld [vmem:[%s0 + $0x64] sm:$0xf]
  %v44 = vld [vmem:[%s0 + $0x68] sm:$0xf]
  %v45 = vld [vmem:[%s0 + $0x6c] sm:$0xf]
  %v46 = vld [vmem:[%s0 + $0x70] sm:$0xf]
  %v47 = vld [vmem:[%s0 + $0x74] sm:$0xf]
  %v48 = vld [vmem:[%s0 + $0x78] sm:$0xf]
  %v49 = vld [vmem:[%s0 + $0x7c] sm:$0xf]
  %v50 = vld [vmem:[%s0 + $0x80] sm:$0xf]
  %v51 = vld [vmem:[%s0 + $0x84] sm:$0xf]
  %v52 = vld [vmem:[%s0 + $0x88] sm:$0xf]
  %v53 = vld [vmem:[%s0 + $0x8c] sm:$0xf]
  %v54 = vld [vmem:[%s0 + $0x90] sm:$0xf]
  %v55 = vld [vmem:[%s0 + $0x94] sm:$0xf]
  %v56 = vld [vmem:[%s0 + $0x98] sm:$0xf]
  %v57 = vld [vmem:[%s0 + $0x9c] sm:$0xf]
  %v58 = vld [vmem:[%s0 + $0xa0] sm:$0xf]
  %v59 = vld [vmem:[%s0 + $0xa4] sm:$0xf]
  %v60 = vld [vmem:[%s0 + $0xa8] sm:$0xf]
  %v61 = vld [vmem:[%s0 + $0xac] sm:$0xf]
  %v62 = vld [vmem:[%s0 + $0xb0] sm:$0xf]
  %v63 = vld [vmem:[%s0 + $0xb4] sm:$0xf]
  %v64 = vld [vmem:[%s0 + $0xb8] sm:$0xf]
  %v65 = vld [vmem:[%s0 + $0xbc] sm:$0xf]
  %v66 = vld [vmem:[%s0 + $0xc0] sm:$0xf]
  %v67 = vld [vmem:[%s0 + $0xc4] sm:$0xf]
  %v68 = vld [vmem:[%s0 + $0xc8] sm:$0xf]
  %v69 = vld [vmem:[%s0 + $0xcc] sm:$0xf]
  %v70 = vld [vmem:[%s0 + $0xd0] sm:$0xf]
  %v71 = vld [vmem:[%s0 + $0xd4] sm:$0xf]
  %v72 = vld [vmem:[%s0 + $0xd8] sm:$0xf]
  %v73 = vld [vmem:[%s0 + $0xdc] sm:$0xf]
  %v74 = vld [vmem:[%s0 + $0xe0] sm:$0xf]
  %v75 = vld [vmem:[%s0 + $0xe4] sm:$0xf]
  %v76 = vld [vmem:[%s0 + $0xe8] sm:$0xf]
  %v77 = vld [vmem:[%s0 + $0xec] sm:$0xf]
  %v78 = vld [vmem:[%s0 + $0xf0] sm:$0xf]
  %v79 = vld [vmem:[%s0 + $0xf4] sm:$0xf]
  %v80 = vld [vmem:[%s0 + $0xf8] sm:$0xf]
  %v81 = vld [vmem:[%s0 + $0xfc] sm:$0xf]
  %v82 = vld [vmem:[%s0 + $0x100] sm:$0xf]
  %v83 = vld [vmem:[%s0 + $0x104] sm:$0xf]
  %v84 = vld [vmem:[%s0 + $0x108] sm:$0xf]
  %v85 = vld [vmem:[%s0 + $0x10c] sm:$0xf]
  %v86 = vld [vmem:[%s0 + $0x110] sm:$0xf]
  %v87 = vld [vmem:[%s0 + $0x114] sm:$0xf]
  %v88 = vld [vmem:[%s0 + $0x118] sm:$0xf]
  %v89 = vld [vmem:[%s0 + $0x11c] sm:$0xf]
  %v90 = vld [vmem:[%s0 + $0x120] sm:$0xf]
  %v91 = vld [vmem:[%s0 + $0x124] sm:$0xf]
  %v92 = vld [vmem:[%s0 + $0x128] sm:$0xf]
  %v93 = vld [vmem:[%s0 + $0x12c] sm:$0xf]
  %v94 = vld [vmem:[%s0 + $0x130] sm:$0xf]
  %v95 = vld [vmem:[%s0 + $0x134] sm:$0xf]
  %v96 = vld [vmem:[%s0 + $0x138] sm:$0xf]
  %v97 = vld [vmem:[%s0 + $0x13c] sm:$0xf]
  %v98 = vld [vmem:[%s0 + $0x140] sm:$0xf]
  %v99 = vld [vmem:[%s0 + $0x144] sm:$0xf]
  %v100 = vld [vmem:[%s0 + $0x148] sm:$0xf]
  %v101 = vld [vmem:[%s0 + $0x14c] sm:$0xf]
  %v102 = vld [vmem:[%s0 + $0x150] sm:$0xf]
  %v103 = vld [vmem:[%s0 + $0x154] sm:$0xf]
  %v104 = vld [vmem:[%s0 + $0x158] sm:$0xf]
  %v105 = vld [vmem:[%s0 + $0x15c] sm:$0xf]
  %v106 = vld [vmem:[%s0 + $0x160] sm:$0xf]
  %v107 = vld [vmem:[%s0 + $0x164] sm:$0xf]
  %v108 = vld [vmem:[%s0 + $0x168] sm:$0xf]
  %v109 = vld [vmem:[%s0 + $0x16c] sm:$0xf]
  %v110 = vld [vmem:[%s0 + $0x170] sm:$0xf]
  %v111 = vld [vmem:[%s0 + $0x174] sm:$0xf]
  %v112 = vld [vmem:[%s0 + $0x178] sm:$0xf]
  %v113 = vld [vmem:[%s0 + $0x17c] sm:$0xf]
  %v114 = vld [vmem:[%s0 + $0x180] sm:$0xf]
  %v115 = vld [vmem:[%s0 + $0x184] sm:$0xf]
  %v116 = vld [vmem:[%s0 + $0x188] sm:$0xf]
  %v117 = vld [vmem:[%s0 + $0x18c] sm:$0xf]
  %v118 = vld [vmem:[%s0 + $0x190] sm:$0xf]
  %v119 = vld [vmem:[%s0 + $0x194] sm:$0xf]
  %v120 = vld [vmem:[%s0 + $0x198] sm:$0xf]
  %v121 = vld [vmem:[%s0 + $0x19c] sm:$0xf]
  %v122 = vld [vmem:[%s0 + $0x1a0] sm:$0xf]
  %v123 = vld [vmem:[%s0 + $0x1a4] sm:$0xf]
  %v124 = vld [vmem:[%s0 + $0x1a8] sm:$0xf]
  %v125 = vld [vmem:[%s0 + $0x1ac] sm:$0xf]
  %v126 = vld [vmem:[%s0 + $0x1b0] sm:$0xf]
  %v127 = vld [vmem:[%s0 + $0x1b4] sm:$0xf]
  %v128 = vld [vmem:[%s0 + $0x1b8] sm:$0xf]
  %v129 = vld [vmem:[%s0 + $0x1bc] sm:$0xf]
  %v130 = vld [vmem:[%s0 + $0x1c0] sm:$0xf]
  %v131 = vld [vmem:[%s0 + $0x1c4] sm:$0xf]
  %v132 = vld [vmem:[%s0 + $0x1c8] sm:$0xf]
  %v133 = vld [vmem:[%s0 + $0x1cc] sm:$0xf]
  %v134 = vld [vmem:[%s0 + $0x1d0] sm:$0xf]
  %v135 = vld [vmem:[%s0 + $0x1d4] sm:$0xf]
  %v136 = vld [vmem:[%s0 + $0x1d8] sm:$0xf]
  %v137 = vld [vmem:[%s0 + $0x1dc] sm:$0xf]
  %v138 = vld [vmem:[%s0 + $0x1e0] sm:$0xf]
  %v139 = vld [vmem:[%s0 + $0x1e4] sm:$0xf]
  %v140 = vld [vmem:[%s0 + $0x1e8] sm:$0xf]
  %v141 = vld [vmem:[%s0 + $0x1ec] sm:$0xf]
  %v142 = vld [vmem:[%s0 + $0x1f0] sm:$0xf]
  %v143 = vld [vmem:[%s0 + $0x1f4] sm:$0xf]
  %v144 = vld [vmem:[%s0 + $0x1f8] sm:$0xf]
  %v145 = vld [vmem:[%s0 + $0x1fc] sm:$0xf]
  %v146 = vld [vmem:[%s0 + $0x200] sm:$0xf]
  %v147 = vld [vmem:[%s0 + $0x204] sm:$0xf]
  %v148 = vld [vmem:[%s0 + $0x208] sm:$0xf]
  %v149 = vld [vmem:[%s0 + $0x20c] sm:$0xf]
  %v150 = vld [vmem:[%s0 + $0x210] sm:$0xf]
  %v151 = vld [vmem:[%s0 + $0x214] sm:$0xf]
  %v152 = vld [vmem:[%s0 + $0x218] sm:$0xf]
  %v153 = vld [vmem:[%s0 + $0x21c] sm:$0xf]
  %v154 = vld [vmem:[%s0 + $0x220] sm:$0xf]
  %v155 = vld [vmem:[%s0 + $0x224] sm:$0xf]
  %v156 = vld [vmem:[%s0 + $0x228] sm:$0xf]
  %v157 = vld [vmem:[%s0 + $0x22c] sm:$0xf]
  %v158 = vld [vmem:[%s0 + $0x230] sm:$0xf]
  %v159 = vld [vmem:[%s0 + $0x234] sm:$0xf]
  %v160 = vld [vmem:[%s0 + $0x238] sm:$0xf]
  %v161 = vld [vmem:[%s0 + $0x23c] sm:$0xf]
  %v162 = vld [vmem:[%s0 + $0x240] sm:$0xf]
  %v163 = vld [vmem:[%s0 + $0x244] sm:$0xf]
  %v164 = vld [vmem:[%s0 + $0x248] sm:$0xf]
  %v165 = vld [vmem:[%s0 + $0x24c] sm:$0xf]
  %v166 = vld [vmem:[%s0 + $0x250] sm:$0xf]
  %v167 = vld [vmem:[%s0 + $0x254] sm:$0xf]
  %v168 = vld [vmem:[%s0 + $0x258] sm:$0xf]
  %v169 = vld [vmem:[%s0 + $0x25c] sm:$0xf]
  %v170 = vld [vmem:[%s0 + $0x260] sm:$0xf]
  %v171 = vld [vmem:[%s0 + $0x264] sm:$0xf]
  %v172 = vld [vmem:[%s0 + $0x268] sm:$0xf]
  %v173 = vld [vmem:[%s0 + $0x26c] sm:$0xf]
  %v174 = vld [vmem:[%s0 + $0x270] sm:$0xf]
  %v175 = vld [vmem:[%s0 + $0x274] sm:$0xf]
  %v176 = vld [vmem:[%s0 + $0x278] sm:$0xf]
  %v177 = vld [vmem:[%s0 + $0x27c] sm:$0xf]
  %v178 = vld [vmem:[%s0 + $0x280] sm:$0xf]
  %v179 = vld [vmem:[%s0 + $0x284] sm:$0xf]
  %v180 = vld [vmem:[%s0 + $0x288] sm:$0xf]
  %v181 = vld [vmem:[%s0 + $0x28c] sm:$0xf]
  %v182 = vld [vmem:[%s0 + $0x290] sm:$0xf]
  %v183 = vld [vmem:[%s0 + $0x294] sm:$0xf]
  %v184 = vld [vmem:[%s0 + $0x298] sm:$0xf]
  %v185 = vld [vmem:[%s0 + $0x29c] sm:$0xf]
  %v186 = vld [vmem:[%s0 + $0x2a0] sm:$0xf]
  %v187 = vld [vmem:[%s0 + $0x2a4] sm:$0xf]
  %v188 = vld [vmem:[%s0 + $0x2a8] sm:$0xf]
  %v189 = vld [vmem:[%s0 + $0x2ac] sm:$0xf]
  %v190 = vld [vmem:[%s0 + $0x2b0] sm:$0xf]
  %v191 = vld [vmem:[%s0 + $0x2b4] sm:$0xf]
  %v192 = vld [vmem:[%s0 + $0x2b8] sm:$0xf]
  %v193 = vld [vmem:[%s0 + $0x2bc] sm:$0xf]
  %v194 = vld [vmem:[%s0 + $0x2c0] sm:$0xf]
  %v195 = vld [vmem:[%s0 + $0x2c4] sm:$0xf]
  %v196 = vld [vmem:[%s0 + $0x2c8] sm:$0xf]
  %v197 = vld [vmem:[%s0 + $0x2cc] sm:$0xf]
  %v198 = vld [vmem:[%s0 + $0x2d0] sm:$0xf]
  %v199 = vld [vmem:[%s0 + $0x2d4] sm:$0xf]
  %v200 = vld [vmem:[%s0 + $0x2d8] sm:$0xf]
  %v201 = vld [vmem:[%s0 + $0x2dc] sm:$0xf]
  %v202 = vld [vmem:[%s0 + $0x2e0] sm:$0xf]
  %v203 = vld [vmem:[%s0 + $0x2e4] sm:$0xf]
  %v204 = vld [vmem:[%s0 + $0x2e8] sm:$0xf]
  %v205 = vld [vmem:[%s0 + $0x2ec] sm:$0xf]
  %v206 = vld [vmem:[%s0 + $0x2f0] sm:$0xf]
  %v207 = vld [vmem:[%s0 + $0x2f4] sm:$0xf]
  %v208 = vld [vmem:[%s0 + $0x2f8] sm:$0xf]
  %v209 = vld [vmem:[%s0 + $0x2fc] sm:$0xf]
  %v210 = vld [vmem:[%s0 + $0x300] sm:$0xf]
  %v211 = vld [vmem:[%s0 + $0x304] sm:$0xf]
  %v212 = vld [vmem:[%s0 + $0x308] sm:$0xf]
  %v213 = vld [vmem:[%s0 + $0x30c] sm:$0xf]
  %v214 = vld [vmem:[%s0 + $0x310] sm:$0xf]
  %v215 = vld [vmem:[%s0 + $0x314] sm:$0xf]
  %v216 = vld [vmem:[%s0 + $0x318] sm:$0xf]
  %v217 = vld [vmem:[%s0 + $0x31c] sm:$0xf]
  %v218 = vld [vmem:[%s0 + $0x320] sm:$0xf]
  %v219 = vld [vmem:[%s0 + $0x324] sm:$0xf]
  %v220 = vld [vmem:[%s0 + $0x328] sm:$0xf]
  %v221 = vld [vmem:[%s0 + $0x32c] sm:$0xf]
  %v222 = vld [vmem:[%s0 + $0x330] sm:$0xf]
  %v223 = vld [vmem:[%s0 + $0x334] sm:$0xf]
  %v224 = vld [vmem:[%s0 + $0x338] sm:$0xf]
  %v225 = vld [vmem:[%s0 + $0x33c] sm:$0xf]
  %v226 = vld [vmem:[%s0 + $0x340] sm:$0xf]
  %v227 = vld [vmem:[%s0 + $0x344] sm:$0xf]
  %v228 = vld [vmem:[%s0 + $0x348] sm:$0xf]
  %v229 = vld [vmem:[%s0 + $0x34c] sm:$0xf]
  %v230 = vld [vmem:[%s0 + $0x350] sm:$0xf]
  %v231 = vld [vmem:[%s0 + $0x354] sm:$0xf]
  %v232 = vld [vmem:[%s0 + $0x358] sm:$0xf]
  %v233 = vld [vmem:[%s0 + $0x35c] sm:$0xf]
  %v234 = vld [vmem:[%s0 + $0x360] sm:$0xf]
  %v235 = vld [vmem:[%s0 + $0x364] sm:$0xf]
  %v236 = vld [vmem:[%s0 + $0x368] sm:$0xf]
  %v237 = vld [vmem:[%s0 + $0x36c] sm:$0xf]
  %v238 = vld [vmem:[%s0 + $0x370] sm:$0xf]
  %v239 = vld [vmem:[%s0 + $0x374] sm:$0xf]
  %v240 = vld [vmem:[%s0 + $0x378] sm:$0xf]
  %v241 = vld [vmem:[%s0 + $0x37c] sm:$0xf]
  %v242 = vld [vmem:[%s0 + $0x380] sm:$0xf]
  %v243 = vld [vmem:[%s0 + $0x384] sm:$0xf]
  %v244 = vld [vmem:[%s0 + $0x388] sm:$0xf]
  %v245 = vld [vmem:[%s0 + $0x38c] sm:$0xf]
  %v246 = vld [vmem:[%s0 + $0x390] sm:$0xf]
  %v247 = vld [vmem:[%s0 + $0x394] sm:$0xf]
  %v248 = vld [vmem:[%s0 + $0x398] sm:$0xf]
  %v249 = vld [vmem:[%s0 + $0x39c] sm:$0xf]
  %v250 = vld [vmem:[%s0 + $0x3a0] sm:$0xf]
  %v251 = vld [vmem:[%s0 + $0x3a4] sm:$0xf]
  %v252 = vld [vmem:[%s0 + $0x3a8] sm:$0xf]
  %v253 = vld [vmem:[%s0 + $0x3ac] sm:$0xf]
  %v254 = vld [vmem:[%s0 + $0x3b0] sm:$0xf]
  %v255 = vld [vmem:[%s0 + $0x3b4] sm:$0xf]
  %v256 = vld [vmem:[%s0 + $0x3b8] sm:$0xf]
  %v257 = vld [vmem:[%s0 + $0x3bc] sm:$0xf]
  %v258 = vld [vmem:[%s0 + $0x3c0] sm:$0xf]
  %v259 = vld [vmem:[%s0 + $0x3c4] sm:$0xf]
  %v260 = vld [vmem:[%s0 + $0x3c8] sm:$0xf]
  %v261 = vld [vmem:[%s0 + $0x3cc] sm:$0xf]
  %v262 = vld [vmem:[%s0 + $0x3d0] sm:$0xf]
  %v263 = vld [vmem:[%s0 + $0x3d4] sm:$0xf]
  %v264 = vld [vmem:[%s0 + $0x3d8] sm:$0xf]
  %v265 = vld [vmem:[%s0 + $0x3dc] sm:$0xf]
  %v266 = vld [vmem:[%s0 + $0x3e0] sm:$0xf]
  %v267 = vld [vmem:[%s0 + $0x3e4] sm:$0xf]
  %v268 = vld [vmem:[%s0 + $0x3e8] sm:$0xf]
  %v269 = vld [vmem:[%s0 + $0x3ec] sm:$0xf]
  %v270 = vld [vmem:[%s0 + $0x3f0] sm:$0xf]
  %v271 = vld [vmem:[%s0 + $0x3f4] sm:$0xf]
  %v272 = vld [vmem:[%s0 + $0x3f8] sm:$0xf]
  %v273 = vld [vmem:[%s0 + $0x3fc] sm:$0xf]
  %v274 = vld [vmem:[%s1] sm:$0x1]
  %v275 = vunpack.c.l.bf16 %v18
  %v276 = vunpack.c.l.bf16 %v19
  %v277 = vunpack.c.l.bf16 %v20
  %v278 = vunpack.c.l.bf16 %v21
  %v279 = vunpack.c.l.bf16 %v22
  %v280 = vunpack.c.l.bf16 %v23
  %v281 = vunpack.c.l.bf16 %v24
  %v282 = vunpack.c.l.bf16 %v25
  %v283 = vunpack.c.l.bf16 %v26
  %v284 = vunpack.c.l.bf16 %v27
  %v285 = vunpack.c.l.bf16 %v28
  %v286 = vunpack.c.l.bf16 %v29
  %v287 = vunpack.c.l.bf16 %v30
  %v288 = vunpack.c.l.bf16 %v31
  %v289 = vunpack.c.l.bf16 %v32
  %v290 = vunpack.c.l.bf16 %v33
  %v291 = vunpack.c.l.bf16 %v34
  %v292 = vunpack.c.l.bf16 %v35
  %v293 = vunpack.c.l.bf16 %v36
  %v294 = vunpack.c.l.bf16 %v37
  %v295 = vunpack.c.l.bf16 %v38
  %v296 = vunpack.c.l.bf16 %v39
  %v297 = vunpack.c.l.bf16 %v40
  %v298 = vunpack.c.l.bf16 %v41
  %v299 = vunpack.c.l.bf16 %v42
  %v300 = vunpack.c.l.bf16 %v43
  %v301 = vunpack.c.l.bf16 %v44
  %v302 = vunpack.c.l.bf16 %v45
  %v303 = vunpack.c.l.bf16 %v46
  %v304 = vunpack.c.l.bf16 %v47
  %v305 = vunpack.c.l.bf16 %v48
  %v306 = vunpack.c.l.bf16 %v49
  %v307 = vunpack.c.l.bf16 %v50
  %v308 = vunpack.c.l.bf16 %v51
  %v309 = vunpack.c.l.bf16 %v52
  %v310 = vunpack.c.l.bf16 %v53
  %v311 = vunpack.c.l.bf16 %v54
  %v312 = vunpack.c.l.bf16 %v55
  %v313 = vunpack.c.l.bf16 %v56
  %v314 = vunpack.c.l.bf16 %v57
  %v315 = vunpack.c.l.bf16 %v58
  %v316 = vunpack.c.l.bf16 %v59
  %v317 = vunpack.c.l.bf16 %v60
  %v318 = vunpack.c.l.bf16 %v61
  %v319 = vunpack.c.l.bf16 %v62
  %v320 = vunpack.c.l.bf16 %v63
  %v321 = vunpack.c.l.bf16 %v64
  %v322 = vunpack.c.l.bf16 %v65
  %v323 = vunpack.c.l.bf16 %v66
  %v324 = vunpack.c.l.bf16 %v67
  %v325 = vunpack.c.l.bf16 %v68
  %v326 = vunpack.c.l.bf16 %v69
  %v327 = vunpack.c.l.bf16 %v70
  %v328 = vunpack.c.l.bf16 %v71
  %v329 = vunpack.c.l.bf16 %v72
  %v330 = vunpack.c.l.bf16 %v73
  %v331 = vunpack.c.l.bf16 %v74
  %v332 = vunpack.c.l.bf16 %v75
  %v333 = vunpack.c.l.bf16 %v76
  %v334 = vunpack.c.l.bf16 %v77
  %v335 = vunpack.c.l.bf16 %v78
  %v336 = vunpack.c.l.bf16 %v79
  %v337 = vunpack.c.l.bf16 %v80
  %v338 = vunpack.c.l.bf16 %v81
  %v339 = vunpack.c.l.bf16 %v82
  %v340 = vunpack.c.l.bf16 %v83
  %v341 = vunpack.c.l.bf16 %v84
  %v342 = vunpack.c.l.bf16 %v85
  %v343 = vunpack.c.l.bf16 %v86
  %v344 = vunpack.c.l.bf16 %v87
  %v345 = vunpack.c.l.bf16 %v88
  %v346 = vunpack.c.l.bf16 %v89
  %v347 = vunpack.c.l.bf16 %v90
  %v348 = vunpack.c.l.bf16 %v91
  %v349 = vunpack.c.l.bf16 %v92
  %v350 = vunpack.c.l.bf16 %v93
  %v351 = vunpack.c.l.bf16 %v94
  %v352 = vunpack.c.l.bf16 %v95
  %v353 = vunpack.c.l.bf16 %v96
  %v354 = vunpack.c.l.bf16 %v97
  %v355 = vunpack.c.l.bf16 %v98
  %v356 = vunpack.c.l.bf16 %v99
  %v357 = vunpack.c.l.bf16 %v100
  %v358 = vunpack.c.l.bf16 %v101
  %v359 = vunpack.c.l.bf16 %v102
  %v360 = vunpack.c.l.bf16 %v103
  %v361 = vunpack.c.l.bf16 %v104
  %v362 = vunpack.c.l.bf16 %v105
  %v363 = vunpack.c.l.bf16 %v106
  %v364 = vunpack.c.l.bf16 %v107
  %v365 = vunpack.c.l.bf16 %v108
  %v366 = vunpack.c.l.bf16 %v109
  %v367 = vunpack.c.l.bf16 %v110
  %v368 = vunpack.c.l.bf16 %v111
  %v369 = vunpack.c.l.bf16 %v112
  %v370 = vunpack.c.l.bf16 %v113
  %v371 = vunpack.c.l.bf16 %v114
  %v372 = vunpack.c.l.bf16 %v115
  %v373 = vunpack.c.l.bf16 %v116
  %v374 = vunpack.c.l.bf16 %v117
  %v375 = vunpack.c.l.bf16 %v118
  %v376 = vunpack.c.l.bf16 %v119
  %v377 = vunpack.c.l.bf16 %v120
  %v378 = vunpack.c.l.bf16 %v121
  %v379 = vunpack.c.l.bf16 %v122
  %v380 = vunpack.c.l.bf16 %v123
  %v381 = vunpack.c.l.bf16 %v124
  %v382 = vunpack.c.l.bf16 %v125
  %v383 = vunpack.c.l.bf16 %v126
  %v384 = vunpack.c.l.bf16 %v127
  %v385 = vunpack.c.l.bf16 %v128
  %v386 = vunpack.c.l.bf16 %v129
  %v387 = vunpack.c.l.bf16 %v130
  %v388 = vunpack.c.l.bf16 %v131
  %v389 = vunpack.c.l.bf16 %v132
  %v390 = vunpack.c.l.bf16 %v133
  %v391 = vunpack.c.l.bf16 %v134
  %v392 = vunpack.c.l.bf16 %v135
  %v393 = vunpack.c.l.bf16 %v136
  %v394 = vunpack.c.l.bf16 %v137
  %v395 = vunpack.c.l.bf16 %v138
  %v396 = vunpack.c.l.bf16 %v139
  %v397 = vunpack.c.l.bf16 %v140
  %v398 = vunpack.c.l.bf16 %v141
  %v399 = vunpack.c.l.bf16 %v142
  %v400 = vunpack.c.l.bf16 %v143
  %v401 = vunpack.c.l.bf16 %v144
  %v402 = vunpack.c.l.bf16 %v145
  %v403 = vunpack.c.l.bf16 %v146
  %v404 = vunpack.c.l.bf16 %v147
  %v405 = vunpack.c.l.bf16 %v148
  %v406 = vunpack.c.l.bf16 %v149
  %v407 = vunpack.c.l.bf16 %v150
  %v408 = vunpack.c.l.bf16 %v151
  %v409 = vunpack.c.l.bf16 %v152
  %v410 = vunpack.c.l.bf16 %v153
  %v411 = vunpack.c.l.bf16 %v154
  %v412 = vunpack.c.l.bf16 %v155
  %v413 = vunpack.c.l.bf16 %v156
  %v414 = vunpack.c.l.bf16 %v157
  %v415 = vunpack.c.l.bf16 %v158
  %v416 = vunpack.c.l.bf16 %v159
  %v417 = vunpack.c.l.bf16 %v160
  %v418 = vunpack.c.l.bf16 %v161
  %v419 = vunpack.c.l.bf16 %v162
  %v420 = vunpack.c.l.bf16 %v163
  %v421 = vunpack.c.l.bf16 %v164
  %v422 = vunpack.c.l.bf16 %v165
  %v423 = vunpack.c.l.bf16 %v166
  %v424 = vunpack.c.l.bf16 %v167
  %v425 = vunpack.c.l.bf16 %v168
  %v426 = vunpack.c.l.bf16 %v169
  %v427 = vunpack.c.l.bf16 %v170
  %v428 = vunpack.c.l.bf16 %v171
  %v429 = vunpack.c.l.bf16 %v172
  %v430 = vunpack.c.l.bf16 %v173
  %v431 = vunpack.c.l.bf16 %v174
  %v432 = vunpack.c.l.bf16 %v175
  %v433 = vunpack.c.l.bf16 %v176
  %v434 = vunpack.c.l.bf16 %v177
  %v435 = vunpack.c.l.bf16 %v178
  %v436 = vunpack.c.l.bf16 %v179
  %v437 = vunpack.c.l.bf16 %v180
  %v438 = vunpack.c.l.bf16 %v181
  %v439 = vunpack.c.l.bf16 %v182
  %v440 = vunpack.c.l.bf16 %v183
  %v441 = vunpack.c.l.bf16 %v184
  %v442 = vunpack.c.l.bf16 %v185
  %v443 = vunpack.c.l.bf16 %v186
  %v444 = vunpack.c.l.bf16 %v187
  %v445 = vunpack.c.l.bf16 %v188
  %v446 = vunpack.c.l.bf16 %v189
  %v447 = vunpack.c.l.bf16 %v190
  %v448 = vunpack.c.l.bf16 %v191
  %v449 = vunpack.c.l.bf16 %v192
  %v450 = vunpack.c.l.bf16 %v193
  %v451 = vunpack.c.l.bf16 %v194
  %v452 = vunpack.c.l.bf16 %v195
  %v453 = vunpack.c.l.bf16 %v196
  %v454 = vunpack.c.l.bf16 %v197
  %v455 = vunpack.c.l.bf16 %v198
  %v456 = vunpack.c.l.bf16 %v199
  %v457 = vunpack.c.l.bf16 %v200
  %v458 = vunpack.c.l.bf16 %v201
  %v459 = vunpack.c.l.bf16 %v202
  %v460 = vunpack.c.l.bf16 %v203
  %v461 = vunpack.c.l.bf16 %v204
  %v462 = vunpack.c.l.bf16 %v205
  %v463 = vunpack.c.l.bf16 %v206
  %v464 = vunpack.c.l.bf16 %v207
  %v465 = vunpack.c.l.bf16 %v208
  %v466 = vunpack.c.l.bf16 %v209
  %v467 = vunpack.c.l.bf16 %v210
  %v468 = vunpack.c.l.bf16 %v211
  %v469 = vunpack.c.l.bf16 %v212
  %v470 = vunpack.c.l.bf16 %v213
  %v471 = vunpack.c.l.bf16 %v214
  %v472 = vunpack.c.l.bf16 %v215
  %v473 = vunpack.c.l.bf16 %v216
  %v474 = vunpack.c.l.bf16 %v217
  %v475 = vunpack.c.l.bf16 %v218
  %v476 = vunpack.c.l.bf16 %v219
  %v477 = vunpack.c.l.bf16 %v220
  %v478 = vunpack.c.l.bf16 %v221
  %v479 = vunpack.c.l.bf16 %v222
  %v480 = vunpack.c.l.bf16 %v223
  %v481 = vunpack.c.l.bf16 %v224
  %v482 = vunpack.c.l.bf16 %v225
  %v483 = vunpack.c.l.bf16 %v226
  %v484 = vunpack.c.l.bf16 %v227
  %v485 = vunpack.c.l.bf16 %v228
  %v486 = vunpack.c.l.bf16 %v229
  %v487 = vunpack.c.l.bf16 %v230
  %v488 = vunpack.c.l.bf16 %v231
  %v489 = vunpack.c.l.bf16 %v232
  %v490 = vunpack.c.l.bf16 %v233
  %v491 = vunpack.c.l.bf16 %v234
  %v492 = vunpack.c.l.bf16 %v235
  %v493 = vunpack.c.l.bf16 %v236
  %v494 = vunpack.c.l.bf16 %v237
  %v495 = vunpack.c.l.bf16 %v238
  %v496 = vunpack.c.l.bf16 %v239
  %v497 = vunpack.c.l.bf16 %v240
  %v498 = vunpack.c.l.bf16 %v241
  %v499 = vunpack.c.l.bf16 %v242
  %v500 = vunpack.c.l.bf16 %v243
  %v501 = vunpack.c.l.bf16 %v244
  %v502 = vunpack.c.l.bf16 %v245
  %v503 = vunpack.c.l.bf16 %v246
  %v504 = vunpack.c.l.bf16 %v247
  %v505 = vunpack.c.l.bf16 %v248
  %v506 = vunpack.c.l.bf16 %v249
  %v507 = vunpack.c.l.bf16 %v250
  %v508 = vunpack.c.l.bf16 %v251
  %v509 = vunpack.c.l.bf16 %v252
  %v510 = vunpack.c.l.bf16 %v253
  %v511 = vunpack.c.l.bf16 %v254
  %v512 = vunpack.c.l.bf16 %v255
  %v513 = vunpack.c.l.bf16 %v256
  %v514 = vunpack.c.l.bf16 %v257
  %v515 = vunpack.c.l.bf16 %v258
  %v516 = vunpack.c.l.bf16 %v259
  %v517 = vunpack.c.l.bf16 %v260
  %v518 = vunpack.c.l.bf16 %v261
  %v519 = vunpack.c.l.bf16 %v262
  %v520 = vunpack.c.l.bf16 %v263
  %v521 = vunpack.c.l.bf16 %v264
  %v522 = vunpack.c.l.bf16 %v265
  %v523 = vunpack.c.l.bf16 %v266
  %v524 = vunpack.c.l.bf16 %v267
  %v525 = vunpack.c.l.bf16 %v268
  %v526 = vunpack.c.l.bf16 %v269
  %v527 = vunpack.c.l.bf16 %v270
  %v528 = vunpack.c.l.bf16 %v271
  %v529 = vunpack.c.l.bf16 %v272
  %v530 = vunpack.c.l.bf16 %v273
  %v532 = vlaneseq
  %v533 = vshrl.u32 %v532, 7
  %v534 = vsub.s32 0, %v533
  %v535 = vrot.slane %v274, %v534
  %v537 = vmul.f32 %v275, %v535
  %v538 = vmul.f32 %v276, %v535
  %v539 = vmul.f32 %v277, %v535
  %v540 = vmul.f32 %v278, %v535
  %v541 = vmul.f32 %v279, %v535
  %v542 = vmul.f32 %v280, %v535
  %v543 = vmul.f32 %v281, %v535
  %v544 = vmul.f32 %v282, %v535
  %v545 = vmul.f32 %v283, %v535
  %v546 = vmul.f32 %v284, %v535
  %v547 = vmul.f32 %v285, %v535
  %v548 = vmul.f32 %v286, %v535
  %v549 = vmul.f32 %v287, %v535
  %v550 = vmul.f32 %v288, %v535
  %v551 = vmul.f32 %v289, %v535
  %v552 = vmul.f32 %v290, %v535
  %v553 = vmul.f32 %v291, %v535
  %v554 = vmul.f32 %v292, %v535
  %v555 = vmul.f32 %v293, %v535
  %v556 = vmul.f32 %v294, %v535
  %v557 = vmul.f32 %v295, %v535
  %v558 = vmul.f32 %v296, %v535
  %v559 = vmul.f32 %v297, %v535
  %v560 = vmul.f32 %v298, %v535
  %v561 = vmul.f32 %v299, %v535
  %v562 = vmul.f32 %v300, %v535
  %v563 = vmul.f32 %v301, %v535
  %v564 = vmul.f32 %v302, %v535
  %v565 = vmul.f32 %v303, %v535
  %v566 = vmul.f32 %v304, %v535
  %v567 = vmul.f32 %v305, %v535
  %v568 = vmul.f32 %v306, %v535
  %v569 = vmul.f32 %v307, %v535
  %v570 = vmul.f32 %v308, %v535
  %v571 = vmul.f32 %v309, %v535
  %v572 = vmul.f32 %v310, %v535
  %v573 = vmul.f32 %v311, %v535
  %v574 = vmul.f32 %v312, %v535
  %v575 = vmul.f32 %v313, %v535
  %v576 = vmul.f32 %v314, %v535
  %v577 = vmul.f32 %v315, %v535
  %v578 = vmul.f32 %v316, %v535
  %v579 = vmul.f32 %v317, %v535
  %v580 = vmul.f32 %v318, %v535
  %v581 = vmul.f32 %v319, %v535
  %v582 = vmul.f32 %v320, %v535
  %v583 = vmul.f32 %v321, %v535
  %v584 = vmul.f32 %v322, %v535
  %v585 = vmul.f32 %v323, %v535
  %v586 = vmul.f32 %v324, %v535
  %v587 = vmul.f32 %v325, %v535
  %v588 = vmul.f32 %v326, %v535
  %v589 = vmul.f32 %v327, %v535
  %v590 = vmul.f32 %v328, %v535
  %v591 = vmul.f32 %v329, %v535
  %v592 = vmul.f32 %v330, %v535
  %v593 = vmul.f32 %v331, %v535
  %v594 = vmul.f32 %v332, %v535
  %v595 = vmul.f32 %v333, %v535
  %v596 = vmul.f32 %v334, %v535
  %v597 = vmul.f32 %v335, %v535
  %v598 = vmul.f32 %v336, %v535
  %v599 = vmul.f32 %v337, %v535
  %v600 = vmul.f32 %v338, %v535
  %v601 = vmul.f32 %v339, %v535
  %v602 = vmul.f32 %v340, %v535
  %v603 = vmul.f32 %v341, %v535
  %v604 = vmul.f32 %v342, %v535
  %v605 = vmul.f32 %v343, %v535
  %v606 = vmul.f32 %v344, %v535
  %v607 = vmul.f32 %v345, %v535
  %v608 = vmul.f32 %v346, %v535
  %v609 = vmul.f32 %v347, %v535
  %v610 = vmul.f32 %v348, %v535
  %v611 = vmul.f32 %v349, %v535
  %v612 = vmul.f32 %v350, %v535
  %v613 = vmul.f32 %v351, %v535
  %v614 = vmul.f32 %v352, %v535
  %v615 = vmul.f32 %v353, %v535
  %v616 = vmul.f32 %v354, %v535
  %v617 = vmul.f32 %v355, %v535
  %v618 = vmul.f32 %v356, %v535
  %v619 = vmul.f32 %v357, %v535
  %v620 = vmul.f32 %v358, %v535
  %v621 = vmul.f32 %v359, %v535
  %v622 = vmul.f32 %v360, %v535
  %v623 = vmul.f32 %v361, %v535
  %v624 = vmul.f32 %v362, %v535
  %v625 = vmul.f32 %v363, %v535
  %v626 = vmul.f32 %v364, %v535
  %v627 = vmul.f32 %v365, %v535
  %v628 = vmul.f32 %v366, %v535
  %v629 = vmul.f32 %v367, %v535
  %v630 = vmul.f32 %v368, %v535
  %v631 = vmul.f32 %v369, %v535
  %v632 = vmul.f32 %v370, %v535
  %v633 = vmul.f32 %v371, %v535
  %v634 = vmul.f32 %v372, %v535
  %v635 = vmul.f32 %v373, %v535
  %v636 = vmul.f32 %v374, %v535
  %v637 = vmul.f32 %v375, %v535
  %v638 = vmul.f32 %v376, %v535
  %v639 = vmul.f32 %v377, %v535
  %v640 = vmul.f32 %v378, %v535
  %v641 = vmul.f32 %v379, %v535
  %v642 = vmul.f32 %v380, %v535
  %v643 = vmul.f32 %v381, %v535
  %v644 = vmul.f32 %v382, %v535
  %v645 = vmul.f32 %v383, %v535
  %v646 = vmul.f32 %v384, %v535
  %v647 = vmul.f32 %v385, %v535
  %v648 = vmul.f32 %v386, %v535
  %v649 = vmul.f32 %v387, %v535
  %v650 = vmul.f32 %v388, %v535
  %v651 = vmul.f32 %v389, %v535
  %v652 = vmul.f32 %v390, %v535
  %v653 = vmul.f32 %v391, %v535
  %v654 = vmul.f32 %v392, %v535
  %v655 = vmul.f32 %v393, %v535
  %v656 = vmul.f32 %v394, %v535
  %v657 = vmul.f32 %v395, %v535
  %v658 = vmul.f32 %v396, %v535
  %v659 = vmul.f32 %v397, %v535
  %v660 = vmul.f32 %v398, %v535
  %v661 = vmul.f32 %v399, %v535
  %v662 = vmul.f32 %v400, %v535
  %v663 = vmul.f32 %v401, %v535
  %v664 = vmul.f32 %v402, %v535
  %v665 = vmul.f32 %v403, %v535
  %v666 = vmul.f32 %v404, %v535
  %v667 = vmul.f32 %v405, %v535
  %v668 = vmul.f32 %v406, %v535
  %v669 = vmul.f32 %v407, %v535
  %v670 = vmul.f32 %v408, %v535
  %v671 = vmul.f32 %v409, %v535
  %v672 = vmul.f32 %v410, %v535
  %v673 = vmul.f32 %v411, %v535
  %v674 = vmul.f32 %v412, %v535
  %v675 = vmul.f32 %v413, %v535
  %v676 = vmul.f32 %v414, %v535
  %v677 = vmul.f32 %v415, %v535
  %v678 = vmul.f32 %v416, %v535
  %v679 = vmul.f32 %v417, %v535
  %v680 = vmul.f32 %v418, %v535
  %v681 = vmul.f32 %v419, %v535
  %v682 = vmul.f32 %v420, %v535
  %v683 = vmul.f32 %v421, %v535
  %v684 = vmul.f32 %v422, %v535
  %v685 = vmul.f32 %v423, %v535
  %v686 = vmul.f32 %v424, %v535
  %v687 = vmul.f32 %v425, %v535
  %v688 = vmul.f32 %v426, %v535
  %v689 = vmul.f32 %v427, %v535
  %v690 = vmul.f32 %v428, %v535
  %v691 = vmul.f32 %v429, %v535
  %v692 = vmul.f32 %v430, %v535
  %v693 = vmul.f32 %v431, %v535
  %v694 = vmul.f32 %v432, %v535
  %v695 = vmul.f32 %v433, %v535
  %v696 = vmul.f32 %v434, %v535
  %v697 = vmul.f32 %v435, %v535
  %v698 = vmul.f32 %v436, %v535
  %v699 = vmul.f32 %v437, %v535
  %v700 = vmul.f32 %v438, %v535
  %v701 = vmul.f32 %v439, %v535
  %v702 = vmul.f32 %v440, %v535
  %v703 = vmul.f32 %v441, %v535
  %v704 = vmul.f32 %v442, %v535
  %v705 = vmul.f32 %v443, %v535
  %v706 = vmul.f32 %v444, %v535
  %v707 = vmul.f32 %v445, %v535
  %v708 = vmul.f32 %v446, %v535
  %v709 = vmul.f32 %v447, %v535
  %v710 = vmul.f32 %v448, %v535
  %v711 = vmul.f32 %v449, %v535
  %v712 = vmul.f32 %v450, %v535
  %v713 = vmul.f32 %v451, %v535
  %v714 = vmul.f32 %v452, %v535
  %v715 = vmul.f32 %v453, %v535
  %v716 = vmul.f32 %v454, %v535
  %v717 = vmul.f32 %v455, %v535
  %v718 = vmul.f32 %v456, %v535
  %v719 = vmul.f32 %v457, %v535
  %v720 = vmul.f32 %v458, %v535
  %v721 = vmul.f32 %v459, %v535
  %v722 = vmul.f32 %v460, %v535
  %v723 = vmul.f32 %v461, %v535
  %v724 = vmul.f32 %v462, %v535
  %v725 = vmul.f32 %v463, %v535
  %v726 = vmul.f32 %v464, %v535
  %v727 = vmul.f32 %v465, %v535
  %v728 = vmul.f32 %v466, %v535
  %v729 = vmul.f32 %v467, %v535
  %v730 = vmul.f32 %v468, %v535
  %v731 = vmul.f32 %v469, %v535
  %v732 = vmul.f32 %v470, %v535
  %v733 = vmul.f32 %v471, %v535
  %v734 = vmul.f32 %v472, %v535
  %v735 = vmul.f32 %v473, %v535
  %v736 = vmul.f32 %v474, %v535
  %v737 = vmul.f32 %v475, %v535
  %v738 = vmul.f32 %v476, %v535
  %v739 = vmul.f32 %v477, %v535
  %v740 = vmul.f32 %v478, %v535
  %v741 = vmul.f32 %v479, %v535
  %v742 = vmul.f32 %v480, %v535
  %v743 = vmul.f32 %v481, %v535
  %v744 = vmul.f32 %v482, %v535
  %v745 = vmul.f32 %v483, %v535
  %v746 = vmul.f32 %v484, %v535
  %v747 = vmul.f32 %v485, %v535
  %v748 = vmul.f32 %v486, %v535
  %v749 = vmul.f32 %v487, %v535
  %v750 = vmul.f32 %v488, %v535
  %v751 = vmul.f32 %v489, %v535
  %v752 = vmul.f32 %v490, %v535
  %v753 = vmul.f32 %v491, %v535
  %v754 = vmul.f32 %v492, %v535
  %v755 = vmul.f32 %v493, %v535
  %v756 = vmul.f32 %v494, %v535
  %v757 = vmul.f32 %v495, %v535
  %v758 = vmul.f32 %v496, %v535
  %v759 = vmul.f32 %v497, %v535
  %v760 = vmul.f32 %v498, %v535
  %v761 = vmul.f32 %v499, %v535
  %v762 = vmul.f32 %v500, %v535
  %v763 = vmul.f32 %v501, %v535
  %v764 = vmul.f32 %v502, %v535
  %v765 = vmul.f32 %v503, %v535
  %v766 = vmul.f32 %v504, %v535
  %v767 = vmul.f32 %v505, %v535
  %v768 = vmul.f32 %v506, %v535
  %v769 = vmul.f32 %v507, %v535
  %v770 = vmul.f32 %v508, %v535
  %v771 = vmul.f32 %v509, %v535
  %v772 = vmul.f32 %v510, %v535
  %v773 = vmul.f32 %v511, %v535
  %v774 = vmul.f32 %v512, %v535
  %v775 = vmul.f32 %v513, %v535
  %v776 = vmul.f32 %v514, %v535
  %v777 = vmul.f32 %v515, %v535
  %v778 = vmul.f32 %v516, %v535
  %v779 = vmul.f32 %v517, %v535
  %v780 = vmul.f32 %v518, %v535
  %v781 = vmul.f32 %v519, %v535
  %v782 = vmul.f32 %v520, %v535
  %v783 = vmul.f32 %v521, %v535
  %v784 = vmul.f32 %v522, %v535
  %v785 = vmul.f32 %v523, %v535
  %v786 = vmul.f32 %v524, %v535
  %v787 = vmul.f32 %v525, %v535
  %v788 = vmul.f32 %v526, %v535
  %v789 = vmul.f32 %v527, %v535
  %v790 = vmul.f32 %v528, %v535
  %v791 = vmul.f32 %v529, %v535
  %v792 = vmul.f32 %v530, %v535
  %v793 = vpack.c.bf16 %v538, %v537
  %v794 = vpack.c.bf16 %v540, %v539
  %v795 = vpack.c.bf16 %v542, %v541
  %v796 = vpack.c.bf16 %v544, %v543
  %v797 = vpack.c.bf16 %v546, %v545
  %v798 = vpack.c.bf16 %v548, %v547
  %v799 = vpack.c.bf16 %v550, %v549
  %v800 = vpack.c.bf16 %v552, %v551
  %v801 = vpack.c.bf16 %v554, %v553
  %v802 = vpack.c.bf16 %v556, %v555
  %v803 = vpack.c.bf16 %v558, %v557
  %v804 = vpack.c.bf16 %v560, %v559
  %v805 = vpack.c.bf16 %v562, %v561
  %v806 = vpack.c.bf16 %v564, %v563
  %v807 = vpack.c.bf16 %v566, %v565
  %v808 = vpack.c.bf16 %v568, %v567
  %v809 = vpack.c.bf16 %v570, %v569
  %v810 = vpack.c.bf16 %v572, %v571
  %v811 = vpack.c.bf16 %v574, %v573
  %v812 = vpack.c.bf16 %v576, %v575
  %v813 = vpack.c.bf16 %v578, %v577
  %v814 = vpack.c.bf16 %v580, %v579
  %v815 = vpack.c.bf16 %v582, %v581
  %v816 = vpack.c.bf16 %v584, %v583
  %v817 = vpack.c.bf16 %v586, %v585
  %v818 = vpack.c.bf16 %v588, %v587
  %v819 = vpack.c.bf16 %v590, %v589
  %v820 = vpack.c.bf16 %v592, %v591
  %v821 = vpack.c.bf16 %v594, %v593
  %v822 = vpack.c.bf16 %v596, %v595
  %v823 = vpack.c.bf16 %v598, %v597
  %v824 = vpack.c.bf16 %v600, %v599
  %v825 = vpack.c.bf16 %v602, %v601
  %v826 = vpack.c.bf16 %v604, %v603
  %v827 = vpack.c.bf16 %v606, %v605
  %v828 = vpack.c.bf16 %v608, %v607
  %v829 = vpack.c.bf16 %v610, %v609
  %v830 = vpack.c.bf16 %v612, %v611
  %v831 = vpack.c.bf16 %v614, %v613
  %v832 = vpack.c.bf16 %v616, %v615
  %v833 = vpack.c.bf16 %v618, %v617
  %v834 = vpack.c.bf16 %v620, %v619
  %v835 = vpack.c.bf16 %v622, %v621
  %v836 = vpack.c.bf16 %v624, %v623
  %v837 = vpack.c.bf16 %v626, %v625
  %v838 = vpack.c.bf16 %v628, %v627
  %v839 = vpack.c.bf16 %v630, %v629
  %v840 = vpack.c.bf16 %v632, %v631
  %v841 = vpack.c.bf16 %v634, %v633
  %v842 = vpack.c.bf16 %v636, %v635
  %v843 = vpack.c.bf16 %v638, %v637
  %v844 = vpack.c.bf16 %v640, %v639
  %v845 = vpack.c.bf16 %v642, %v641
  %v846 = vpack.c.bf16 %v644, %v643
  %v847 = vpack.c.bf16 %v646, %v645
  %v848 = vpack.c.bf16 %v648, %v647
  %v849 = vpack.c.bf16 %v650, %v649
  %v850 = vpack.c.bf16 %v652, %v651
  %v851 = vpack.c.bf16 %v654, %v653
  %v852 = vpack.c.bf16 %v656, %v655
  %v853 = vpack.c.bf16 %v658, %v657
  %v854 = vpack.c.bf16 %v660, %v659
  %v855 = vpack.c.bf16 %v662, %v661
  %v856 = vpack.c.bf16 %v664, %v663
  %v857 = vpack.c.bf16 %v666, %v665
  %v858 = vpack.c.bf16 %v668, %v667
  %v859 = vpack.c.bf16 %v670, %v669
  %v860 = vpack.c.bf16 %v672, %v671
  %v861 = vpack.c.bf16 %v674, %v673
  %v862 = vpack.c.bf16 %v676, %v675
  %v863 = vpack.c.bf16 %v678, %v677
  %v864 = vpack.c.bf16 %v680, %v679
  %v865 = vpack.c.bf16 %v682, %v681
  %v866 = vpack.c.bf16 %v684, %v683
  %v867 = vpack.c.bf16 %v686, %v685
  %v868 = vpack.c.bf16 %v688, %v687
  %v869 = vpack.c.bf16 %v690, %v689
  %v870 = vpack.c.bf16 %v692, %v691
  %v871 = vpack.c.bf16 %v694, %v693
  %v872 = vpack.c.bf16 %v696, %v695
  %v873 = vpack.c.bf16 %v698, %v697
  %v874 = vpack.c.bf16 %v700, %v699
  %v875 = vpack.c.bf16 %v702, %v701
  %v876 = vpack.c.bf16 %v704, %v703
  %v877 = vpack.c.bf16 %v706, %v705
  %v878 = vpack.c.bf16 %v708, %v707
  %v879 = vpack.c.bf16 %v710, %v709
  %v880 = vpack.c.bf16 %v712, %v711
  %v881 = vpack.c.bf16 %v714, %v713
  %v882 = vpack.c.bf16 %v716, %v715
  %v883 = vpack.c.bf16 %v718, %v717
  %v884 = vpack.c.bf16 %v720, %v719
  %v885 = vpack.c.bf16 %v722, %v721
  %v886 = vpack.c.bf16 %v724, %v723
  %v887 = vpack.c.bf16 %v726, %v725
  %v888 = vpack.c.bf16 %v728, %v727
  %v889 = vpack.c.bf16 %v730, %v729
  %v890 = vpack.c.bf16 %v732, %v731
  %v891 = vpack.c.bf16 %v734, %v733
  %v892 = vpack.c.bf16 %v736, %v735
  %v893 = vpack.c.bf16 %v738, %v737
  %v894 = vpack.c.bf16 %v740, %v739
  %v895 = vpack.c.bf16 %v742, %v741
  %v896 = vpack.c.bf16 %v744, %v743
  %v897 = vpack.c.bf16 %v746, %v745
  %v898 = vpack.c.bf16 %v748, %v747
  %v899 = vpack.c.bf16 %v750, %v749
  %v900 = vpack.c.bf16 %v752, %v751
  %v901 = vpack.c.bf16 %v754, %v753
  %v902 = vpack.c.bf16 %v756, %v755
  %v903 = vpack.c.bf16 %v758, %v757
  %v904 = vpack.c.bf16 %v760, %v759
  %v905 = vpack.c.bf16 %v762, %v761
  %v906 = vpack.c.bf16 %v764, %v763
  %v907 = vpack.c.bf16 %v766, %v765
  %v908 = vpack.c.bf16 %v768, %v767
  %v909 = vpack.c.bf16 %v770, %v769
  %v910 = vpack.c.bf16 %v772, %v771
  %v911 = vpack.c.bf16 %v774, %v773
  %v912 = vpack.c.bf16 %v776, %v775
  %v913 = vpack.c.bf16 %v778, %v777
  %v914 = vpack.c.bf16 %v780, %v779
  %v915 = vpack.c.bf16 %v782, %v781
  %v916 = vpack.c.bf16 %v784, %v783
  %v917 = vpack.c.bf16 %v786, %v785
  %v918 = vpack.c.bf16 %v788, %v787
  %v919 = vpack.c.bf16 %v790, %v789
  %v920 = vpack.c.bf16 %v792, %v791
  %v921 = vld [vmem:[%s2] sm:$0xf]
  %v922 = vld [vmem:[%s2 + $0x4] sm:$0x3]
  %v923 = vld [vmem:[%s3] sm:$0xff]
  %v924 = vld [vmem:[%s3 + $0x8] sm:$0xf]
  %926 = vset.pattern.permute.xlu0 0
  %927 = vperm.xlu0 %926, %v923
  %v928 = vpop.permute.xlu0 %927
  %931 = vset.pattern.permute.xlu0 0
  %932 = vperm.xlu0 %931, %v924
  %v933 = vpop.permute.xlu0 %932
  %v937 = vunpack.c.l.b16 %v921
  %v938 = vunpack.c.l.b16 %v922
  %v939 = vpack.c.b16 %v938, %v937
  %vm940 = vcmask 588800
  %v942 = vsel %vm940, %v939, 0
  %v945 = vsel %vm940, %v793, 0
  %v948 = vsel %vm940, %v794, 0
  %v951 = vsel %vm940, %v795, 0
  %v954 = vsel %vm940, %v796, 0
  %v957 = vsel %vm940, %v797, 0
  %v960 = vsel %vm940, %v798, 0
  %v963 = vsel %vm940, %v799, 0
  %v966 = vsel %vm940, %v800, 0
  %v969 = vsel %vm940, %v801, 0
  %v972 = vsel %vm940, %v802, 0
  %v975 = vsel %vm940, %v803, 0
  %v978 = vsel %vm940, %v804, 0
  %v981 = vsel %vm940, %v805, 0
  %v984 = vsel %vm940, %v806, 0
  %v987 = vsel %vm940, %v807, 0
  %v990 = vsel %vm940, %v808, 0
  %v993 = vsel %vm940, %v809, 0
  %v996 = vsel %vm940, %v810, 0
  %v999 = vsel %vm940, %v811, 0
  %v1002 = vsel %vm940, %v812, 0
  %v1005 = vsel %vm940, %v813, 0
  %v1008 = vsel %vm940, %v814, 0
  %v1011 = vsel %vm940, %v815, 0
  %v1014 = vsel %vm940, %v816, 0
  %v1017 = vsel %vm940, %v817, 0
  %v1020 = vsel %vm940, %v818, 0
  %v1023 = vsel %vm940, %v819, 0
  %v1026 = vsel %vm940, %v820, 0
  %v1029 = vsel %vm940, %v821, 0
  %v1032 = vsel %vm940, %v822, 0
  %v1035 = vsel %vm940, %v823, 0
  %v1038 = vsel %vm940, %v824, 0
  %v1041 = vsel %vm940, %v825, 0
  %v1044 = vsel %vm940, %v826, 0
  %v1047 = vsel %vm940, %v827, 0
  %v1050 = vsel %vm940, %v828, 0
  %v1053 = vsel %vm940, %v829, 0
  %v1056 = vsel %vm940, %v830, 0
  %v1059 = vsel %vm940, %v831, 0
  %v1062 = vsel %vm940, %v832, 0
  %v1065 = vsel %vm940, %v833, 0
  %v1068 = vsel %vm940, %v834, 0
  %v1071 = vsel %vm940, %v835, 0
  %v1074 = vsel %vm940, %v836, 0
  %v1077 = vsel %vm940, %v837, 0
  %v1080 = vsel %vm940, %v838, 0
  %v1083 = vsel %vm940, %v839, 0
  %v1086 = vsel %vm940, %v840, 0
  %v1089 = vsel %vm940, %v841, 0
  %v1092 = vsel %vm940, %v842, 0
  %v1095 = vsel %vm940, %v843, 0
  %v1098 = vsel %vm940, %v844, 0
  %v1101 = vsel %vm940, %v845, 0
  %v1104 = vsel %vm940, %v846, 0
  %v1107 = vsel %vm940, %v847, 0
  %v1110 = vsel %vm940, %v848, 0
  %v1113 = vsel %vm940, %v849, 0
  %v1116 = vsel %vm940, %v850, 0
  %v1119 = vsel %vm940, %v851, 0
  %v1122 = vsel %vm940, %v852, 0
  %v1125 = vsel %vm940, %v853, 0
  %v1128 = vsel %vm940, %v854, 0
  %v1131 = vsel %vm940, %v855, 0
  %v1134 = vsel %vm940, %v856, 0
  %v1137 = vsel %vm940, %v857, 0
  %v1140 = vsel %vm940, %v858, 0
  %v1143 = vsel %vm940, %v859, 0
  %v1146 = vsel %vm940, %v860, 0
  %v1149 = vsel %vm940, %v861, 0
  %v1152 = vsel %vm940, %v862, 0
  %v1155 = vsel %vm940, %v863, 0
  %v1158 = vsel %vm940, %v864, 0
  %v1161 = vsel %vm940, %v865, 0
  %v1164 = vsel %vm940, %v866, 0
  %v1167 = vsel %vm940, %v867, 0
  %v1170 = vsel %vm940, %v868, 0
  %v1173 = vsel %vm940, %v869, 0
  %v1176 = vsel %vm940, %v870, 0
  %v1179 = vsel %vm940, %v871, 0
  %v1182 = vsel %vm940, %v872, 0
  %v1185 = vsel %vm940, %v873, 0
  %v1188 = vsel %vm940, %v874, 0
  %v1191 = vsel %vm940, %v875, 0
  %v1194 = vsel %vm940, %v876, 0
  %v1197 = vsel %vm940, %v877, 0
  %v1200 = vsel %vm940, %v878, 0
  %v1203 = vsel %vm940, %v879, 0
  %v1206 = vsel %vm940, %v880, 0
  %v1209 = vsel %vm940, %v881, 0
  %v1212 = vsel %vm940, %v882, 0
  %v1215 = vsel %vm940, %v883, 0
  %v1218 = vsel %vm940, %v884, 0
  %v1221 = vsel %vm940, %v885, 0
  %v1224 = vsel %vm940, %v886, 0
  %v1227 = vsel %vm940, %v887, 0
  %v1230 = vsel %vm940, %v888, 0
  %v1233 = vsel %vm940, %v889, 0
  %v1236 = vsel %vm940, %v890, 0
  %v1239 = vsel %vm940, %v891, 0
  %v1242 = vsel %vm940, %v892, 0
  %v1245 = vsel %vm940, %v893, 0
  %v1248 = vsel %vm940, %v894, 0
  %v1251 = vsel %vm940, %v895, 0
  %v1254 = vsel %vm940, %v896, 0
  %v1257 = vsel %vm940, %v897, 0
  %v1260 = vsel %vm940, %v898, 0
  %v1263 = vsel %vm940, %v899, 0
  %v1266 = vsel %vm940, %v900, 0
  %v1269 = vsel %vm940, %v901, 0
  %v1272 = vsel %vm940, %v902, 0
  %v1275 = vsel %vm940, %v903, 0
  %v1278 = vsel %vm940, %v904, 0
  %v1281 = vsel %vm940, %v905, 0
  %v1284 = vsel %vm940, %v906, 0
  %v1287 = vsel %vm940, %v907, 0
  %v1290 = vsel %vm940, %v908, 0
  %v1293 = vsel %vm940, %v909, 0
  %v1296 = vsel %vm940, %v910, 0
  %v1299 = vsel %vm940, %v911, 0
  %v1302 = vsel %vm940, %v912, 0
  %v1305 = vsel %vm940, %v913, 0
  %v1308 = vsel %vm940, %v914, 0
  %v1311 = vsel %vm940, %v915, 0
  %v1314 = vsel %vm940, %v916, 0
  %v1317 = vsel %vm940, %v917, 0
  %v1320 = vsel %vm940, %v918, 0
  %v1323 = vsel %vm940, %v919, 0
  %v1326 = vsel %vm940, %v920, 0
  %1328 = vmatprep.subr.bf16.mxu0 0
  %1329 = vmatpush1.bf16.xpose.msra.mxu0 %v945
  %1330 = vmatprep.subr.bf16.mxu0 0
  %1331 = vmatpush1.bf16.xpose.msra.mxu0 %v948
  %1332 = vmatprep.subr.bf16.mxu0 0
  %1333 = vmatpush1.bf16.xpose.msra.mxu0 %v951
  %1334 = vmatprep.subr.bf16.mxu0 0
  %1335 = vmatpush1.bf16.xpose.msra.mxu0 %v954
  %1336 = vmatprep.subr.bf16.mxu0 0
  %1337 = vmatpush1.bf16.xpose.msra.mxu0 %v957
  %1338 = vmatprep.subr.bf16.mxu0 0
  %1339 = vmatpush1.bf16.xpose.msra.mxu0 %v960
  %1340 = vmatprep.subr.bf16.mxu0 0
  %1341 = vmatpush1.bf16.xpose.msra.mxu0 %v963
  %1342 = vmatprep.subr.bf16.mxu0 0
  %1343 = vmatpush1.bf16.xpose.msra.mxu0 %v966
  %1344 = vmatprep.subr.bf16.mxu0 0
  %1345 = vmatpush1.bf16.xpose.msra.mxu0 %v969
  %1346 = vmatprep.subr.bf16.mxu0 0
  %1347 = vmatpush1.bf16.xpose.msra.mxu0 %v972
  %1348 = vmatprep.subr.bf16.mxu0 0
  %1349 = vmatpush1.bf16.xpose.msra.mxu0 %v975
  %1350 = vmatprep.subr.bf16.mxu0 0
  %1351 = vmatpush1.bf16.xpose.msra.mxu0 %v978
  %1352 = vmatprep.subr.bf16.mxu0 0
  %1353 = vmatpush1.bf16.xpose.msra.mxu0 %v981
  %1354 = vmatprep.subr.bf16.mxu0 0
  %1355 = vmatpush1.bf16.xpose.msra.mxu0 %v984
  %1356 = vmatprep.subr.bf16.mxu0 0
  %1357 = vmatpush1.bf16.xpose.msra.mxu0 %v987
  %1358 = vmatprep.subr.bf16.mxu0 0
  %1359 = vmatpush1.bf16.xpose.msra.mxu0 %v990
  %1360 = vmatprep.mubr.bf16.mxu0 0
  %1361 = vmatmul.mubr.bf16.gmra.mrb[0].mxu0 %v942
  %v1362 = vpop.f32.mrb[0].mxu0
  %v1363 = vadd.f32 %v928, %v1362
  %v1364 = vpop.f32.mrb[0].mxu0
  %v1365 = vadd.f32 %v928, %v1364
  %v1366 = vpop.f32.mrb[0].mxu0
  %v1367 = vadd.f32 %v933, %v1366
  %v1368 = vpop.f32.mrb[0].mxu0
  %v1369 = vadd.f32 %v933, %v1368
  %1370 = vdwg.mxu0
  %1371 = vmatprep.subr.bf16.mxu0 0
  %1372 = vmatpush1.bf16.xpose.msra.mxu0 %v993
  %1373 = vmatprep.subr.bf16.mxu0 0
  %1374 = vmatpush1.bf16.xpose.msra.mxu0 %v996
  %1375 = vmatprep.subr.bf16.mxu0 0
  %1376 = vmatpush1.bf16.xpose.msra.mxu0 %v999
  %1377 = vmatprep.subr.bf16.mxu0 0
  %1378 = vmatpush1.bf16.xpose.msra.mxu0 %v1002
  %1379 = vmatprep.subr.bf16.mxu0 0
  %1380 = vmatpush1.bf16.xpose.msra.mxu0 %v1005
  %1381 = vmatprep.subr.bf16.mxu0 0
  %1382 = vmatpush1.bf16.xpose.msra.mxu0 %v1008
  %1383 = vmatprep.subr.bf16.mxu0 0
  %1384 = vmatpush1.bf16.xpose.msra.mxu0 %v1011
  %1385 = vmatprep.subr.bf16.mxu0 0
  %1386 = vmatpush1.bf16.xpose.msra.mxu0 %v1014
  %1387 = vmatprep.subr.bf16.mxu0 0
  %1388 = vmatpush1.bf16.xpose.msra.mxu0 %v1017
  %1389 = vmatprep.subr.bf16.mxu0 0
  %1390 = vmatpush1.bf16.xpose.msra.mxu0 %v1020
  %1391 = vmatprep.subr.bf16.mxu0 0
  %1392 = vmatpush1.bf16.xpose.msra.mxu0 %v1023
  %1393 = vmatprep.subr.bf16.mxu0 0
  %1394 = vmatpush1.bf16.xpose.msra.mxu0 %v1026
  %1395 = vmatprep.subr.bf16.mxu0 0
  %1396 = vmatpush1.bf16.xpose.msra.mxu0 %v1029
  %1397 = vmatprep.subr.bf16.mxu0 0
  %1398 = vmatpush1.bf16.xpose.msra.mxu0 %v1032
  %1399 = vmatprep.subr.bf16.mxu0 0
  %1400 = vmatpush1.bf16.xpose.msra.mxu0 %v1035
  %1401 = vmatprep.subr.bf16.mxu0 0
  %1402 = vmatpush1.bf16.xpose.msra.mxu0 %v1038
  %1403 = vmatprep.mubr.bf16.mxu0 0
  %1404 = vmatmul.mubr.bf16.gmra.mrb[0].mxu0 %v942
  %v1405 = vpop.f32.mrb[0].mxu0
  %v1406 = vadd.f32 %v928, %v1405
  %v1407 = vpop.f32.mrb[0].mxu0
  %v1408 = vadd.f32 %v928, %v1407
  %v1409 = vpop.f32.mrb[0].mxu0
  %v1410 = vadd.f32 %v933, %v1409
  %v1411 = vpop.f32.mrb[0].mxu0
  %v1412 = vadd.f32 %v933, %v1411
  %1413 = vdwg.mxu0
  %1414 = vmatprep.subr.bf16.mxu0 0
  %1415 = vmatpush1.bf16.xpose.msra.mxu0 %v1041
  %1416 = vmatprep.subr.bf16.mxu0 0
  %1417 = vmatpush1.bf16.xpose.msra.mxu0 %v1044
  %1418 = vmatprep.subr.bf16.mxu0 0
  %1419 = vmatpush1.bf16.xpose.msra.mxu0 %v1047
  %1420 = vmatprep.subr.bf16.mxu0 0
  %1421 = vmatpush1.bf16.xpose.msra.mxu0 %v1050
  %1422 = vmatprep.subr.bf16.mxu0 0
  %1423 = vmatpush1.bf16.xpose.msra.mxu0 %v1053
  %1424 = vmatprep.subr.bf16.mxu0 0
  %1425 = vmatpush1.bf16.xpose.msra.mxu0 %v1056
  %1426 = vmatprep.subr.bf16.mxu0 0
  %1427 = vmatpush1.bf16.xpose.msra.mxu0 %v1059
  %1428 = vmatprep.subr.bf16.mxu0 0
  %1429 = vmatpush1.bf16.xpose.msra.mxu0 %v1062
  %1430 = vmatprep.subr.bf16.mxu0 0
  %1431 = vmatpush1.bf16.xpose.msra.mxu0 %v1065
  %1432 = vmatprep.subr.bf16.mxu0 0
  %1433 = vmatpush1.bf16.xpose.msra.mxu0 %v1068
  %1434 = vmatprep.subr.bf16.mxu0 0
  %1435 = vmatpush1.bf16.xpose.msra.mxu0 %v1071
  %1436 = vmatprep.subr.bf16.mxu0 0
  %1437 = vmatpush1.bf16.xpose.msra.mxu0 %v1074
  %1438 = vmatprep.subr.bf16.mxu0 0
  %1439 = vmatpush1.bf16.xpose.msra.mxu0 %v1077
  %1440 = vmatprep.subr.bf16.mxu0 0
  %1441 = vmatpush1.bf16.xpose.msra.mxu0 %v1080
  %1442 = vmatprep.subr.bf16.mxu0 0
  %1443 = vmatpush1.bf16.xpose.msra.mxu0 %v1083
  %1444 = vmatprep.subr.bf16.mxu0 0
  %1445 = vmatpush1.bf16.xpose.msra.mxu0 %v1086
  %1446 = vmatprep.mubr.bf16.mxu0 0
  %1447 = vmatmul.mubr.bf16.gmra.mrb[0].mxu0 %v942
  %v1448 = vpop.f32.mrb[0].mxu0
  %v1449 = vadd.f32 %v928, %v1448
  %v1450 = vpop.f32.mrb[0].mxu0
  %v1451 = vadd.f32 %v928, %v1450
  %v1452 = vpop.f32.mrb[0].mxu0
  %v1453 = vadd.f32 %v933, %v1452
  %v1454 = vpop.f32.mrb[0].mxu0
  %v1455 = vadd.f32 %v933, %v1454
  %1456 = vdwg.mxu0
  %1457 = vmatprep.subr.bf16.mxu0 0
  %1458 = vmatpush1.bf16.xpose.msra.mxu0 %v1089
  %1459 = vmatprep.subr.bf16.mxu0 0
  %1460 = vmatpush1.bf16.xpose.msra.mxu0 %v1092
  %1461 = vmatprep.subr.bf16.mxu0 0
  %1462 = vmatpush1.bf16.xpose.msra.mxu0 %v1095
  %1463 = vmatprep.subr.bf16.mxu0 0
  %1464 = vmatpush1.bf16.xpose.msra.mxu0 %v1098
  %1465 = vmatprep.subr.bf16.mxu0 0
  %1466 = vmatpush1.bf16.xpose.msra.mxu0 %v1101
  %1467 = vmatprep.subr.bf16.mxu0 0
  %1468 = vmatpush1.bf16.xpose.msra.mxu0 %v1104
  %1469 = vmatprep.subr.bf16.mxu0 0
  %1470 = vmatpush1.bf16.xpose.msra.mxu0 %v1107
  %1471 = vmatprep.subr.bf16.mxu0 0
  %1472 = vmatpush1.bf16.xpose.msra.mxu0 %v1110
  %1473 = vmatprep.subr.bf16.mxu0 0
  %1474 = vmatpush1.bf16.xpose.msra.mxu0 %v1113
  %1475 = vmatprep.subr.bf16.mxu0 0
  %1476 = vmatpush1.bf16.xpose.msra.mxu0 %v1116
  %1477 = vmatprep.subr.bf16.mxu0 0
  %1478 = vmatpush1.bf16.xpose.msra.mxu0 %v1119
  %1479 = vmatprep.subr.bf16.mxu0 0
  %1480 = vmatpush1.bf16.xpose.msra.mxu0 %v1122
  %1481 = vmatprep.subr.bf16.mxu0 0
  %1482 = vmatpush1.bf16.xpose.msra.mxu0 %v1125
  %1483 = vmatprep.subr.bf16.mxu0 0
  %1484 = vmatpush1.bf16.xpose.msra.mxu0 %v1128
  %1485 = vmatprep.subr.bf16.mxu0 0
  %1486 = vmatpush1.bf16.xpose.msra.mxu0 %v1131
  %1487 = vmatprep.subr.bf16.mxu0 0
  %1488 = vmatpush1.bf16.xpose.msra.mxu0 %v1134
  %1489 = vmatprep.mubr.bf16.mxu0 0
  %1490 = vmatmul.mubr.bf16.gmra.mrb[0].mxu0 %v942
  %v1491 = vpop.f32.mrb[0].mxu0
  %v1492 = vadd.f32 %v928, %v1491
  %v1493 = vpop.f32.mrb[0].mxu0
  %v1494 = vadd.f32 %v928, %v1493
  %v1495 = vpop.f32.mrb[0].mxu0
  %v1496 = vadd.f32 %v933, %v1495
  %v1497 = vpop.f32.mrb[0].mxu0
  %v1498 = vadd.f32 %v933, %v1497
  %1499 = vdwg.mxu0
  %1500 = vmatprep.subr.bf16.mxu0 0
  %1501 = vmatpush1.bf16.xpose.msra.mxu0 %v1137
  %1502 = vmatprep.subr.bf16.mxu0 0
  %1503 = vmatpush1.bf16.xpose.msra.mxu0 %v1140
  %1504 = vmatprep.subr.bf16.mxu0 0
  %1505 = vmatpush1.bf16.xpose.msra.mxu0 %v1143
  %1506 = vmatprep.subr.bf16.mxu0 0
  %1507 = vmatpush1.bf16.xpose.msra.mxu0 %v1146
  %1508 = vmatprep.subr.bf16.mxu0 0
  %1509 = vmatpush1.bf16.xpose.msra.mxu0 %v1149
  %1510 = vmatprep.subr.bf16.mxu0 0
  %1511 = vmatpush1.bf16.xpose.msra.mxu0 %v1152
  %1512 = vmatprep.subr.bf16.mxu0 0
  %1513 = vmatpush1.bf16.xpose.msra.mxu0 %v1155
  %1514 = vmatprep.subr.bf16.mxu0 0
  %1515 = vmatpush1.bf16.xpose.msra.mxu0 %v1158
  %1516 = vmatprep.subr.bf16.mxu0 0
  %1517 = vmatpush1.bf16.xpose.msra.mxu0 %v1161
  %1518 = vmatprep.subr.bf16.mxu0 0
  %1519 = vmatpush1.bf16.xpose.msra.mxu0 %v1164
  %1520 = vmatprep.subr.bf16.mxu0 0
  %1521 = vmatpush1.bf16.xpose.msra.mxu0 %v1167
  %1522 = vmatprep.subr.bf16.mxu0 0
  %1523 = vmatpush1.bf16.xpose.msra.mxu0 %v1170
  %1524 = vmatprep.subr.bf16.mxu0 0
  %1525 = vmatpush1.bf16.xpose.msra.mxu0 %v1173
  %1526 = vmatprep.subr.bf16.mxu0 0
  %1527 = vmatpush1.bf16.xpose.msra.mxu0 %v1176
  %1528 = vmatprep.subr.bf16.mxu0 0
  %1529 = vmatpush1.bf16.xpose.msra.mxu0 %v1179
  %1530 = vmatprep.subr.bf16.mxu0 0
  %1531 = vmatpush1.bf16.xpose.msra.mxu0 %v1182
  %1532 = vmatprep.mubr.bf16.mxu0 0
  %1533 = vmatmul.mubr.bf16.gmra.mrb[0].mxu0 %v942
  %v1534 = vpop.f32.mrb[0].mxu0
  %v1535 = vadd.f32 %v928, %v1534
  %v1536 = vpop.f32.mrb[0].mxu0
  %v1537 = vadd.f32 %v928, %v1536
  %v1538 = vpop.f32.mrb[0].mxu0
  %v1539 = vadd.f32 %v933, %v1538
  %v1540 = vpop.f32.mrb[0].mxu0
  %v1541 = vadd.f32 %v933, %v1540
  %1542 = vdwg.mxu0
  %1543 = vmatprep.subr.bf16.mxu0 0
  %1544 = vmatpush1.bf16.xpose.msra.mxu0 %v1185
  %1545 = vmatprep.subr.bf16.mxu0 0
  %1546 = vmatpush1.bf16.xpose.msra.mxu0 %v1188
  %1547 = vmatprep.subr.bf16.mxu0 0
  %1548 = vmatpush1.bf16.xpose.msra.mxu0 %v1191
  %1549 = vmatprep.subr.bf16.mxu0 0
  %1550 = vmatpush1.bf16.xpose.msra.mxu0 %v1194
  %1551 = vmatprep.subr.bf16.mxu0 0
  %1552 = vmatpush1.bf16.xpose.msra.mxu0 %v1197
  %1553 = vmatprep.subr.bf16.mxu0 0
  %1554 = vmatpush1.bf16.xpose.msra.mxu0 %v1200
  %1555 = vmatprep.subr.bf16.mxu0 0
  %1556 = vmatpush1.bf16.xpose.msra.mxu0 %v1203
  %1557 = vmatprep.subr.bf16.mxu0 0
  %1558 = vmatpush1.bf16.xpose.msra.mxu0 %v1206
  %1559 = vmatprep.subr.bf16.mxu0 0
  %1560 = vmatpush1.bf16.xpose.msra.mxu0 %v1209
  %1561 = vmatprep.subr.bf16.mxu0 0
  %1562 = vmatpush1.bf16.xpose.msra.mxu0 %v1212
  %1563 = vmatprep.subr.bf16.mxu0 0
  %1564 = vmatpush1.bf16.xpose.msra.mxu0 %v1215
  %1565 = vmatprep.subr.bf16.mxu0 0
  %1566 = vmatpush1.bf16.xpose.msra.mxu0 %v1218
  %1567 = vmatprep.subr.bf16.mxu0 0
  %1568 = vmatpush1.bf16.xpose.msra.mxu0 %v1221
  %1569 = vmatprep.subr.bf16.mxu0 0
  %1570 = vmatpush1.bf16.xpose.msra.mxu0 %v1224
  %1571 = vmatprep.subr.bf16.mxu0 0
  %1572 = vmatpush1.bf16.xpose.msra.mxu0 %v1227
  %1573 = vmatprep.subr.bf16.mxu0 0
  %1574 = vmatpush1.bf16.xpose.msra.mxu0 %v1230
  %1575 = vmatprep.mubr.bf16.mxu0 0
  %1576 = vmatmul.mubr.bf16.gmra.mrb[0].mxu0 %v942
  %v1577 = vpop.f32.mrb[0].mxu0
  %v1578 = vadd.f32 %v928, %v1577
  %v1579 = vpop.f32.mrb[0].mxu0
  %v1580 = vadd.f32 %v928, %v1579
  %v1581 = vpop.f32.mrb[0].mxu0
  %v1582 = vadd.f32 %v933, %v1581
  %v1583 = vpop.f32.mrb[0].mxu0
  %v1584 = vadd.f32 %v933, %v1583
  %1585 = vdwg.mxu0
  %1586 = vmatprep.subr.bf16.mxu0 0
  %1587 = vmatpush1.bf16.xpose.msra.mxu0 %v1233
  %1588 = vmatprep.subr.bf16.mxu0 0
  %1589 = vmatpush1.bf16.xpose.msra.mxu0 %v1236
  %1590 = vmatprep.subr.bf16.mxu0 0
  %1591 = vmatpush1.bf16.xpose.msra.mxu0 %v1239
  %1592 = vmatprep.subr.bf16.mxu0 0
  %1593 = vmatpush1.bf16.xpose.msra.mxu0 %v1242
  %1594 = vmatprep.subr.bf16.mxu0 0
  %1595 = vmatpush1.bf16.xpose.msra.mxu0 %v1245
  %1596 = vmatprep.subr.bf16.mxu0 0
  %1597 = vmatpush1.bf16.xpose.msra.mxu0 %v1248
  %1598 = vmatprep.subr.bf16.mxu0 0
  %1599 = vmatpush1.bf16.xpose.msra.mxu0 %v1251
  %1600 = vmatprep.subr.bf16.mxu0 0
  %1601 = vmatpush1.bf16.xpose.msra.mxu0 %v1254
  %1602 = vmatprep.subr.bf16.mxu0 0
  %1603 = vmatpush1.bf16.xpose.msra.mxu0 %v1257
  %1604 = vmatprep.subr.bf16.mxu0 0
  %1605 = vmatpush1.bf16.xpose.msra.mxu0 %v1260
  %1606 = vmatprep.subr.bf16.mxu0 0
  %1607 = vmatpush1.bf16.xpose.msra.mxu0 %v1263
  %1608 = vmatprep.subr.bf16.mxu0 0
  %1609 = vmatpush1.bf16.xpose.msra.mxu0 %v1266
  %1610 = vmatprep.subr.bf16.mxu0 0
  %1611 = vmatpush1.bf16.xpose.msra.mxu0 %v1269
  %1612 = vmatprep.subr.bf16.mxu0 0
  %1613 = vmatpush1.bf16.xpose.msra.mxu0 %v1272
  %1614 = vmatprep.subr.bf16.mxu0 0
  %1615 = vmatpush1.bf16.xpose.msra.mxu0 %v1275
  %1616 = vmatprep.subr.bf16.mxu0 0
  %1617 = vmatpush1.bf16.xpose.msra.mxu0 %v1278
  %1618 = vmatprep.mubr.bf16.mxu0 0
  %1619 = vmatmul.mubr.bf16.gmra.mrb[0].mxu0 %v942
  %v1620 = vpop.f32.mrb[0].mxu0
  %v1621 = vadd.f32 %v928, %v1620
  %v1622 = vpop.f32.mrb[0].mxu0
  %v1623 = vadd.f32 %v928, %v1622
  %v1624 = vpop.f32.mrb[0].mxu0
  %v1625 = vadd.f32 %v933, %v1624
  %v1626 = vpop.f32.mrb[0].mxu0
  %v1627 = vadd.f32 %v933, %v1626
  %1628 = vdwg.mxu0
  %1629 = vmatprep.subr.bf16.mxu0 0
  %1630 = vmatpush1.bf16.xpose.msra.mxu0 %v1281
  %1631 = vmatprep.subr.bf16.mxu0 0
  %1632 = vmatpush1.bf16.xpose.msra.mxu0 %v1284
  %1633 = vmatprep.subr.bf16.mxu0 0
  %1634 = vmatpush1.bf16.xpose.msra.mxu0 %v1287
  %1635 = vmatprep.subr.bf16.mxu0 0
  %1636 = vmatpush1.bf16.xpose.msra.mxu0 %v1290
  %1637 = vmatprep.subr.bf16.mxu0 0
  %1638 = vmatpush1.bf16.xpose.msra.mxu0 %v1293
  %1639 = vmatprep.subr.bf16.mxu0 0
  %1640 = vmatpush1.bf16.xpose.msra.mxu0 %v1296
  %1641 = vmatprep.subr.bf16.mxu0 0
  %1642 = vmatpush1.bf16.xpose.msra.mxu0 %v1299
  %1643 = vmatprep.subr.bf16.mxu0 0
  %1644 = vmatpush1.bf16.xpose.msra.mxu0 %v1302
  %1645 = vmatprep.subr.bf16.mxu0 0
  %1646 = vmatpush1.bf16.xpose.msra.mxu0 %v1305
  %1647 = vmatprep.subr.bf16.mxu0 0
  %1648 = vmatpush1.bf16.xpose.msra.mxu0 %v1308
  %1649 = vmatprep.subr.bf16.mxu0 0
  %1650 = vmatpush1.bf16.xpose.msra.mxu0 %v1311
  %1651 = vmatprep.subr.bf16.mxu0 0
  %1652 = vmatpush1.bf16.xpose.msra.mxu0 %v1314
  %1653 = vmatprep.subr.bf16.mxu0 0
  %1654 = vmatpush1.bf16.xpose.msra.mxu0 %v1317
  %1655 = vmatprep.subr.bf16.mxu0 0
  %1656 = vmatpush1.bf16.xpose.msra.mxu0 %v1320
  %1657 = vmatprep.subr.bf16.mxu0 0
  %1658 = vmatpush1.bf16.xpose.msra.mxu0 %v1323
  %1659 = vmatprep.subr.bf16.mxu0 0
  %1660 = vmatpush1.bf16.xpose.msra.mxu0 %v1326
  %1661 = vmatprep.mubr.bf16.mxu0 0
  %1662 = vmatmul.mubr.bf16.gmra.mrb[0].mxu0 %v942
  %v1663 = vpop.f32.mrb[0].mxu0
  %v1664 = vadd.f32 %v928, %v1663
  %v1665 = vpop.f32.mrb[0].mxu0
  %v1666 = vadd.f32 %v928, %v1665
  %v1667 = vpop.f32.mrb[0].mxu0
  %v1668 = vadd.f32 %v933, %v1667
  %v1669 = vpop.f32.mrb[0].mxu0
  %v1670 = vadd.f32 %v933, %v1669
  %1671 = vdwg.mxu0
  %1672 = vst [vmem:[%s4] sm:$0xff] %v1363
  %1673 = vst [vmem:[%s4 + $0x8] sm:$0xff] %v1365
  %1674 = vst [vmem:[%s4 + $0x10] sm:$0xff] %v1406
  %1675 = vst [vmem:[%s4 + $0x18] sm:$0xff] %v1408
  %1676 = vst [vmem:[%s4 + $0x20] sm:$0xff] %v1449
  %1677 = vst [vmem:[%s4 + $0x28] sm:$0xff] %v1451
  %1678 = vst [vmem:[%s4 + $0x30] sm:$0xff] %v1492
  %1679 = vst [vmem:[%s4 + $0x38] sm:$0xff] %v1494
  %1680 = vst [vmem:[%s4 + $0x40] sm:$0xff] %v1535
  %1681 = vst [vmem:[%s4 + $0x48] sm:$0xff] %v1537
  %1682 = vst [vmem:[%s4 + $0x50] sm:$0xff] %v1578
  %1683 = vst [vmem:[%s4 + $0x58] sm:$0xff] %v1580
  %1684 = vst [vmem:[%s4 + $0x60] sm:$0xff] %v1621
  %1685 = vst [vmem:[%s4 + $0x68] sm:$0xff] %v1623
  %1686 = vst [vmem:[%s4 + $0x70] sm:$0xff] %v1664
  %1687 = vst [vmem:[%s4 + $0x78] sm:$0xff] %v1666
  %1688 = vst [vmem:[%s4 + $0x80] sm:$0xf] %v1367
  %1689 = vst [vmem:[%s4 + $0x88] sm:$0xf] %v1369
  %1690 = vst [vmem:[%s4 + $0x90] sm:$0xf] %v1410
  %1691 = vst [vmem:[%s4 + $0x98] sm:$0xf] %v1412
  %1692 = vst [vmem:[%s4 + $0xa0] sm:$0xf] %v1453
  %1693 = vst [vmem:[%s4 + $0xa8] sm:$0xf] %v1455
  %1694 = vst [vmem:[%s4 + $0xb0] sm:$0xf] %v1496
  %1695 = vst [vmem:[%s4 + $0xb8] sm:$0xf] %v1498
  %1696 = vst [vmem:[%s4 + $0xc0] sm:$0xf] %v1539
  %1697 = vst [vmem:[%s4 + $0xc8] sm:$0xf] %v1541
  %1698 = vst [vmem:[%s4 + $0xd0] sm:$0xf] %v1582
  %1699 = vst [vmem:[%s4 + $0xd8] sm:$0xf] %v1584
  %1700 = vst [vmem:[%s4 + $0xe0] sm:$0xf] %v1625
  %1701 = vst [vmem:[%s4 + $0xe8] sm:$0xf] %v1627
  %1702 = vst [vmem:[%s4 + $0xf0] sm:$0xf] %v1668
  %1703 = vst [vmem:[%s4 + $0xf8] sm:$0xf] %v1670
  // Predicated region
  $region18: #{frame_generator_forward.9} parent=0 // pred_check
    _
  $region19: #{frame_generator_forward.9} parent=0 // pred_check_branch
    %1705 = sbr.rel (0) target = $region21
  $region20: #{frame_generator_forward.9} parent=0 // pred_region
    _
  $region21: #{frame_generator_forward.9} parent=0 // pred_fallthru
    _
  // Predicated region
  $region22: #{frame_generator_forward.9} parent=0 // pred_check
    _
  $region23: #{frame_generator_forward.9} parent=0 // pred_check_branch
    %1707 = sbr.rel (0) target = $region25
  $region24: #{frame_generator_forward.9} parent=0 // pred_region
    _
  $region25: #{frame_generator_forward.9} parent=0 // pred_fallthru
    _

</llo_original>
